<compile_context>
chip_gen: v7x
topology: tpu7x:2x2x1
jax: 0.10.0
libtpu: 0.0.40
codegen_flags: <defaults>
</compile_context>

<pallas_src>
import functools

import jax
import jax.numpy as jnp
from jax.experimental import pallas as pl
from jax.experimental.pallas import tpu as pltpu


# ------------------------------ fused kernel ------------------------------

def _ln(x, g, b, eps):
    """LayerNorm over the last axis, f32 statistics."""
    mu = jnp.mean(x, axis=-1, keepdims=True)
    var = jnp.mean(jnp.square(x - mu), axis=-1, keepdims=True)
    return (x - mu) * jax.lax.rsqrt(var + eps) * g + b


def _encoder_kernel(patches_ref, pw_ref, pb_ref,
                    ln1_g_ref, ln1_b_ref, wqkv_ref, bqkv_ref, wo_ref, bo_ref,
                    ln2_g_ref, ln2_b_ref, w1_ref, b1_ref, w2_ref, b2_ref,
                    lnf_g_ref, lnf_b_ref,
                    out_ref, *, depth, num_heads, eps):
    # one grid step == one batch element; everything below stays in VMEM/vregs
    x = patches_ref[0]                                               # (N, Pd) f32

    # patch_embed: Conv2d(k=P, s=P) == linear over flattened patches
    x = jnp.dot(x.astype(jnp.bfloat16), pw_ref[...],
                preferred_element_type=jnp.float32) + pb_ref[...]    # (N, D) f32
    # pos_drop: Dropout -> identity in eval mode
    # TODO(synk): norm_pre is nn.Identity for standard timm ViTs; omitted.

    N, D = x.shape
    dh = D // num_heads
    scale = 1.0 / (dh ** 0.5)

    for l in range(depth):                      # timm Block (pre-norm), unrolled
        # ---------------- self-attention ----------------
        h = _ln(x, ln1_g_ref[l], ln1_b_ref[l], eps)
        qkv = jnp.dot(h.astype(jnp.bfloat16), wqkv_ref[l],
                      preferred_element_type=jnp.float32) + bqkv_ref[l]   # (N, 3D)

        o_heads = []
        for hh in range(num_heads):             # static unroll, no launch overhead
            qh = qkv[:, hh * dh:(hh + 1) * dh]                  # (N, dh)
            kh = qkv[:, D + hh * dh:D + (hh + 1) * dh]          # (N, dh)
            vh = qkv[:, 2 * D + hh * dh:2 * D + (hh + 1) * dh]  # (N, dh)
            # scores without k.T: contract the dh axis directly
            s = jax.lax.dot_general(qh, kh, (((1,), (1,)), ((), ())),
                                    preferred_element_type=jnp.float32) * scale
            s = s - jnp.max(s, axis=-1, keepdims=True)
            p = jnp.exp(s)
            p = p * pl.reciprocal(jnp.sum(p, axis=-1, keepdims=True), approx=True)
            o_heads.append(jnp.dot(p, vh, preferred_element_type=jnp.float32))
        o = jnp.concatenate(o_heads, axis=-1)                   # (N, D)

        x = x + jnp.dot(o.astype(jnp.bfloat16), wo_ref[l],
                        preferred_element_type=jnp.float32) + bo_ref[l]

        # -------------------- MLP -----------------------
        h = _ln(x, ln2_g_ref[l], ln2_b_ref[l], eps)
        h = jnp.dot(h.astype(jnp.bfloat16), w1_ref[l],
                    preferred_element_type=jnp.float32) + b1_ref[l]
        h = jax.nn.gelu(h, approximate=True)    # TODO(synk): timm nn.GELU uses exact erf
        h = jnp.dot(h.astype(jnp.bfloat16), w2_ref[l],
                    preferred_element_type=jnp.float32) + b2_ref[l]
        x = x + h

    # final norm; fc_norm is nn.Identity for standard timm ViTs
    out_ref[0] = _ln(x, lnf_g_ref[...], lnf_b_ref[...], eps)


# ------------------------------- wrapper -----------------------------------

def vit_encoder(img, params, *, num_heads, depth, patch_size, eps=1e-6):
    """Encoder.forward(img): img (B, C, H, W) NCHW -> tokens (B, N, D) f32."""
    B, C, Himg, Wimg = img.shape
    P = patch_size
    Hp, Wp = Himg // P, Wimg // P
    N = Hp * Wp
    Pd = C * P * P
    D = params["patch_w"].shape[1]

    # Patch extraction is a pure layout transform (timm's Conv2d stride=P view);
    # done once in XLA glue, everything else runs inside one fused kernel.
    patches = img.reshape(B, C, Hp, P, Wp, P).transpose(0, 2, 4, 1, 3, 5)
    patches = patches.reshape(B, N, Pd).astype(jnp.float32)

    def full(shape):
        return pl.BlockSpec(shape, lambda b, _s=shape: (0,) * len(_s))

    kernel = functools.partial(_encoder_kernel, depth=depth,
                               num_heads=num_heads, eps=eps)

    return pl.pallas_call(
        kernel,
        grid=(B,),
        out_shape=jax.ShapeDtypeStruct((B, N, D), jnp.float32),
        in_specs=[
            pl.BlockSpec((1, N, Pd), lambda b: (b, 0, 0)),
            full(params["patch_w"].shape), full(params["patch_b"].shape),
            full(params["ln1_g"].shape), full(params["ln1_b"].shape),
            full(params["wqkv"].shape), full(params["bqkv"].shape),
            full(params["wo"].shape), full(params["bo"].shape),
            full(params["ln2_g"].shape), full(params["ln2_b"].shape),
            full(params["w1"].shape), full(params["b1"].shape),
            full(params["w2"].shape), full(params["b2"].shape),
            full(params["lnf_g"].shape), full(params["lnf_b"].shape),
        ],
        out_specs=pl.BlockSpec((1, N, D), lambda b: (b, 0, 0)),
        compiler_params=pltpu.CompilerParams(dimension_semantics=("parallel",)),
    )(patches, params["patch_w"], params["patch_b"],
      params["ln1_g"], params["ln1_b"], params["wqkv"], params["bqkv"],
      params["wo"], params["bo"], params["ln2_g"], params["ln2_b"],
      params["w1"], params["b1"], params["w2"], params["b2"],
      params["lnf_g"], params["lnf_b"])


# ---------------------------- parameter init --------------------------------

def init_params(key, *, channels, patch_size, d_model, depth, mlp_ratio=4):
    # TODO(synk): the real Encoder loads timm pretrained weights; synthetic init here.
    Pd = channels * patch_size * patch_size
    Dff = mlp_ratio * d_model
    keys = iter(jax.random.split(key, 16))

    def w(shape, scale=0.02):
        return (scale * jax.random.normal(next(keys), shape)).astype(jnp.bfloat16)

    def zeros(shape):
        return jnp.zeros(shape, jnp.float32)

    def ones(shape):
        return jnp.ones(shape, jnp.float32)

    return {
        "patch_w": w((Pd, d_model)),
        "patch_b": zeros((1, d_model)),
        "ln1_g": ones((depth, 1, d_model)), "ln1_b": zeros((depth, 1, d_model)),
        "wqkv": w((depth, d_model, 3 * d_model)),
        "bqkv": zeros((depth, 1, 3 * d_model)),
        "wo": w((depth, d_model, d_model)), "bo": zeros((depth, 1, d_model)),
        "ln2_g": ones((depth, 1, d_model)), "ln2_b": zeros((depth, 1, d_model)),
        "w1": w((depth, d_model, Dff)), "b1": zeros((depth, 1, Dff)),
        "w2": w((depth, Dff, d_model)), "b2": zeros((depth, 1, d_model)),
        "lnf_g": ones((1, d_model)), "lnf_b": zeros((1, d_model)),
    }


# ----------------------------------- main -----------------------------------

if __name__ == "__main__":
    BATCH = 2
    CHANNELS = 3
    IMG = 16
    PATCH = 4
    D_MODEL = 32
    HEADS = 4
    DEPTH = 2

    key = jax.random.PRNGKey(0)
    k_param, k_img = jax.random.split(key, 2)

    params = init_params(k_param, channels=CHANNELS, patch_size=PATCH,
                         d_model=D_MODEL, depth=DEPTH)

    img = jax.random.normal(k_img, (BATCH, CHANNELS, IMG, IMG), jnp.float32)  # NCHW

    out = vit_encoder(img, params, num_heads=HEADS, depth=DEPTH, patch_size=PATCH)
    out = jax.block_until_ready(out)

    N_PATCHES = (IMG // PATCH) ** 2
    assert out.shape == (BATCH, N_PATCHES, D_MODEL), out.shape
    assert out.dtype == jnp.float32
    assert bool(jnp.all(jnp.isfinite(out)))
    print("KERNEL_OK")
</pallas_src>

<mosaic_0001>
module attributes {stable_mosaic.version = 11 : i64} {
  func.func @_encoder_kernel(%arg0: i32, %arg1: memref<1x16x48xf32, #tpu.memory_space<vmem>>, %arg2: memref<48x32xbf16, #tpu.memory_space<vmem>>, %arg3: memref<1x32xf32, #tpu.memory_space<vmem>>, %arg4: memref<2x1x32xf32, #tpu.memory_space<vmem>>, %arg5: memref<2x1x32xf32, #tpu.memory_space<vmem>>, %arg6: memref<2x32x96xbf16, #tpu.memory_space<vmem>>, %arg7: memref<2x1x96xf32, #tpu.memory_space<vmem>>, %arg8: memref<2x32x32xbf16, #tpu.memory_space<vmem>>, %arg9: memref<2x1x32xf32, #tpu.memory_space<vmem>>, %arg10: memref<2x1x32xf32, #tpu.memory_space<vmem>>, %arg11: memref<2x1x32xf32, #tpu.memory_space<vmem>>, %arg12: memref<2x32x128xbf16, #tpu.memory_space<vmem>>, %arg13: memref<2x1x128xf32, #tpu.memory_space<vmem>>, %arg14: memref<2x128x32xbf16, #tpu.memory_space<vmem>>, %arg15: memref<2x1x32xf32, #tpu.memory_space<vmem>>, %arg16: memref<1x32xf32, #tpu.memory_space<vmem>>, %arg17: memref<1x32xf32, #tpu.memory_space<vmem>>, %arg18: memref<1x16x32xf32, #tpu.memory_space<vmem>>) attributes {dimension_semantics = [#tpu.dimension_semantics<parallel>], iteration_bounds = array<i64: 2>, scalar_prefetch = 0 : i64, scratch_operands = 0 : i64, tpu.core_type = #tpu.core_type<tc>, window_params = [{transform_indices = @transform_0, window_bounds = array<i64: 1, 16, 48>}, {pipeline_mode = #tpu.pipeline_mode<synchronous>, transform_indices = @transform_1, window_bounds = array<i64: 48, 32>}, {pipeline_mode = #tpu.pipeline_mode<synchronous>, transform_indices = @transform_2, window_bounds = array<i64: 1, 32>}, {pipeline_mode = #tpu.pipeline_mode<synchronous>, transform_indices = @transform_3, window_bounds = array<i64: 2, 1, 32>}, {pipeline_mode = #tpu.pipeline_mode<synchronous>, transform_indices = @transform_4, window_bounds = array<i64: 2, 1, 32>}, {pipeline_mode = #tpu.pipeline_mode<synchronous>, transform_indices = @transform_5, window_bounds = array<i64: 2, 32, 96>}, {pipeline_mode = #tpu.pipeline_mode<synchronous>, transform_indices = @transform_6, window_bounds = array<i64: 2, 1, 96>}, {pipeline_mode = #tpu.pipeline_mode<synchronous>, transform_indices = @transform_7, window_bounds = array<i64: 2, 32, 32>}, {pipeline_mode = #tpu.pipeline_mode<synchronous>, transform_indices = @transform_8, window_bounds = array<i64: 2, 1, 32>}, {pipeline_mode = #tpu.pipeline_mode<synchronous>, transform_indices = @transform_9, window_bounds = array<i64: 2, 1, 32>}, {pipeline_mode = #tpu.pipeline_mode<synchronous>, transform_indices = @transform_10, window_bounds = array<i64: 2, 1, 32>}, {pipeline_mode = #tpu.pipeline_mode<synchronous>, transform_indices = @transform_11, window_bounds = array<i64: 2, 32, 128>}, {pipeline_mode = #tpu.pipeline_mode<synchronous>, transform_indices = @transform_12, window_bounds = array<i64: 2, 1, 128>}, {pipeline_mode = #tpu.pipeline_mode<synchronous>, transform_indices = @transform_13, window_bounds = array<i64: 2, 128, 32>}, {pipeline_mode = #tpu.pipeline_mode<synchronous>, transform_indices = @transform_14, window_bounds = array<i64: 2, 1, 32>}, {pipeline_mode = #tpu.pipeline_mode<synchronous>, transform_indices = @transform_15, window_bounds = array<i64: 1, 32>}, {pipeline_mode = #tpu.pipeline_mode<synchronous>, transform_indices = @transform_16, window_bounds = array<i64: 1, 32>}, {transform_indices = @transform_17, window_bounds = array<i64: 1, 16, 32>}]} {
    %c0 = arith.constant 0 : index
    %c0_0 = arith.constant 0 : index
    %c0_1 = arith.constant 0 : index
    %0 = vector.load %arg1[%c0, %c0_0, %c0_1] : memref<1x16x48xf32, #tpu.memory_space<vmem>>, vector<1x16x48xf32>
    %1 = vector.shape_cast %0 : vector<1x16x48xf32> to vector<16x48xf32>
    %2 = arith.truncf %1 : vector<16x48xf32> to vector<16x48xbf16>
    %c0_2 = arith.constant 0 : index
    %c0_3 = arith.constant 0 : index
    %3 = vector.load %arg2[%c0_2, %c0_3] : memref<48x32xbf16, #tpu.memory_space<vmem>>, vector<48x32xbf16>
    %cst = arith.constant dense<0.000000e+00> : vector<16x32xf32>
    %4 = tpu.matmul %2, %3, %cst {dimension_numbers = #tpu.dot_dimension_numbers<[1], [0], [0], [1], [0, 0, 1, 1], [], []>} : vector<16x48xbf16>, vector<48x32xbf16>, vector<16x32xf32> -> vector<16x32xf32>
    %c0_4 = arith.constant 0 : index
    %c0_5 = arith.constant 0 : index
    %5 = vector.load %arg3[%c0_4, %c0_5] : memref<1x32xf32, #tpu.memory_space<vmem>>, vector<1x32xf32>
    %6 = vector.broadcast %5 : vector<1x32xf32> to vector<16x32xf32>
    %7 = arith.addf %4, %6 : vector<16x32xf32>
    %c0_6 = arith.constant 0 : index
    %c0_7 = arith.constant 0 : index
    %c0_8 = arith.constant 0 : index
    %8 = vector.load %arg4[%c0_6, %c0_7, %c0_8] : memref<2x1x32xf32, #tpu.memory_space<vmem>>, vector<1x1x32xf32>
    %9 = vector.shape_cast %8 : vector<1x1x32xf32> to vector<1x32xf32>
    %c0_9 = arith.constant 0 : index
    %c0_10 = arith.constant 0 : index
    %c0_11 = arith.constant 0 : index
    %10 = vector.load %arg5[%c0_9, %c0_10, %c0_11] : memref<2x1x32xf32, #tpu.memory_space<vmem>>, vector<1x1x32xf32>
    %11 = vector.shape_cast %10 : vector<1x1x32xf32> to vector<1x32xf32>
    %cst_12 = arith.constant dense<0.000000e+00> : vector<16xf32>
    %12 = vector.multi_reduction <add>, %7, %cst_12 [1] : vector<16x32xf32> to vector<16xf32>
    %13 = vector.shape_cast %12 : vector<16xf32> to vector<16x1xf32>
    %cst_13 = arith.constant 3.200000e+01 : f32
    %14 = vector.broadcast %cst_13 : f32 to vector<16x1xf32>
    %15 = arith.divf %13, %14 : vector<16x1xf32>
    %16 = vector.broadcast %15 : vector<16x1xf32> to vector<16x32xf32>
    %17 = arith.subf %7, %16 : vector<16x32xf32>
    %18 = arith.mulf %17, %17 : vector<16x32xf32>
    %cst_14 = arith.constant dense<0.000000e+00> : vector<16xf32>
    %19 = vector.multi_reduction <add>, %18, %cst_14 [1] : vector<16x32xf32> to vector<16xf32>
    %20 = vector.shape_cast %19 : vector<16xf32> to vector<16x1xf32>
    %cst_15 = arith.constant 3.200000e+01 : f32
    %21 = vector.broadcast %cst_15 : f32 to vector<16x1xf32>
    %22 = arith.divf %20, %21 : vector<16x1xf32>
    %23 = vector.broadcast %15 : vector<16x1xf32> to vector<16x32xf32>
    %24 = arith.subf %7, %23 : vector<16x32xf32>
    %cst_16 = arith.constant 9.99999997E-7 : f32
    %25 = vector.broadcast %cst_16 : f32 to vector<16x1xf32>
    %26 = arith.addf %22, %25 : vector<16x1xf32>
    %27 = math.rsqrt %26 : vector<16x1xf32>
    %28 = vector.broadcast %27 : vector<16x1xf32> to vector<16x32xf32>
    %29 = arith.mulf %24, %28 : vector<16x32xf32>
    %30 = vector.broadcast %9 : vector<1x32xf32> to vector<16x32xf32>
    %31 = arith.mulf %29, %30 : vector<16x32xf32>
    %32 = vector.broadcast %11 : vector<1x32xf32> to vector<16x32xf32>
    %33 = arith.addf %31, %32 : vector<16x32xf32>
    %34 = arith.truncf %33 : vector<16x32xf32> to vector<16x32xbf16>
    %c0_17 = arith.constant 0 : index
    %c0_18 = arith.constant 0 : index
    %c0_19 = arith.constant 0 : index
    %35 = vector.load %arg6[%c0_17, %c0_18, %c0_19] : memref<2x32x96xbf16, #tpu.memory_space<vmem>>, vector<1x32x96xbf16>
    %36 = vector.shape_cast %35 : vector<1x32x96xbf16> to vector<32x96xbf16>
    %cst_20 = arith.constant dense<0.000000e+00> : vector<16x96xf32>
    %37 = tpu.matmul %34, %36, %cst_20 {dimension_numbers = #tpu.dot_dimension_numbers<[1], [0], [0], [1], [0, 0, 1, 1], [], []>} : vector<16x32xbf16>, vector<32x96xbf16>, vector<16x96xf32> -> vector<16x96xf32>
    %c0_21 = arith.constant 0 : index
    %c0_22 = arith.constant 0 : index
    %c0_23 = arith.constant 0 : index
    %38 = vector.load %arg7[%c0_21, %c0_22, %c0_23] : memref<2x1x96xf32, #tpu.memory_space<vmem>>, vector<1x1x96xf32>
    %39 = vector.shape_cast %38 : vector<1x1x96xf32> to vector<1x96xf32>
    %40 = vector.broadcast %39 : vector<1x96xf32> to vector<16x96xf32>
    %41 = arith.addf %37, %40 : vector<16x96xf32>
    %42 = vector.extract_strided_slice %41 {offsets = [0, 0], sizes = [16, 8], strides = [1, 1]} : vector<16x96xf32> to vector<16x8xf32>
    %43 = vector.extract_strided_slice %41 {offsets = [0, 32], sizes = [16, 8], strides = [1, 1]} : vector<16x96xf32> to vector<16x8xf32>
    %44 = vector.extract_strided_slice %41 {offsets = [0, 64], sizes = [16, 8], strides = [1, 1]} : vector<16x96xf32> to vector<16x8xf32>
    %cst_24 = arith.constant dense<0.000000e+00> : vector<16x16xf32>
    %45 = tpu.matmul %42, %43, %cst_24 {dimension_numbers = #tpu.dot_dimension_numbers<[1], [1], [0], [0], [0, 0, 1, 0], [], []>} : vector<16x8xf32>, vector<16x8xf32>, vector<16x16xf32> -> vector<16x16xf32>
    %cst_25 = arith.constant 0.353553385 : f32
    %46 = vector.broadcast %cst_25 : f32 to vector<16x16xf32>
    %47 = arith.mulf %45, %46 : vector<16x16xf32>
    %cst_26 = arith.constant dense<0xFF800000> : vector<16xf32>
    %48 = vector.multi_reduction <maximumf>, %47, %cst_26 [1] : vector<16x16xf32> to vector<16xf32>
    %49 = vector.shape_cast %48 : vector<16xf32> to vector<16x1xf32>
    %50 = vector.broadcast %49 : vector<16x1xf32> to vector<16x16xf32>
    %51 = arith.subf %47, %50 : vector<16x16xf32>
    %52 = math.exp %51 : vector<16x16xf32>
    %cst_27 = arith.constant dense<0.000000e+00> : vector<16xf32>
    %53 = vector.multi_reduction <add>, %52, %cst_27 [1] : vector<16x16xf32> to vector<16xf32>
    %54 = vector.shape_cast %53 : vector<16xf32> to vector<16x1xf32>
    %55 = tpu.reciprocal %54 {approx = true} : vector<16x1xf32> -> vector<16x1xf32>
    %56 = vector.broadcast %55 : vector<16x1xf32> to vector<16x16xf32>
    %57 = arith.mulf %52, %56 : vector<16x16xf32>
    %cst_28 = arith.constant dense<0.000000e+00> : vector<16x8xf32>
    %58 = tpu.matmul %57, %44, %cst_28 {dimension_numbers = #tpu.dot_dimension_numbers<[1], [0], [0], [1], [0, 0, 1, 1], [], []>} : vector<16x16xf32>, vector<16x8xf32>, vector<16x8xf32> -> vector<16x8xf32>
    %59 = vector.extract_strided_slice %41 {offsets = [0, 8], sizes = [16, 8], strides = [1, 1]} : vector<16x96xf32> to vector<16x8xf32>
    %60 = vector.extract_strided_slice %41 {offsets = [0, 40], sizes = [16, 8], strides = [1, 1]} : vector<16x96xf32> to vector<16x8xf32>
    %61 = vector.extract_strided_slice %41 {offsets = [0, 72], sizes = [16, 8], strides = [1, 1]} : vector<16x96xf32> to vector<16x8xf32>
    %cst_29 = arith.constant dense<0.000000e+00> : vector<16x16xf32>
    %62 = tpu.matmul %59, %60, %cst_29 {dimension_numbers = #tpu.dot_dimension_numbers<[1], [1], [0], [0], [0, 0, 1, 0], [], []>} : vector<16x8xf32>, vector<16x8xf32>, vector<16x16xf32> -> vector<16x16xf32>
    %cst_30 = arith.constant 0.353553385 : f32
    %63 = vector.broadcast %cst_30 : f32 to vector<16x16xf32>
    %64 = arith.mulf %62, %63 : vector<16x16xf32>
    %cst_31 = arith.constant dense<0xFF800000> : vector<16xf32>
    %65 = vector.multi_reduction <maximumf>, %64, %cst_31 [1] : vector<16x16xf32> to vector<16xf32>
    %66 = vector.shape_cast %65 : vector<16xf32> to vector<16x1xf32>
    %67 = vector.broadcast %66 : vector<16x1xf32> to vector<16x16xf32>
    %68 = arith.subf %64, %67 : vector<16x16xf32>
    %69 = math.exp %68 : vector<16x16xf32>
    %cst_32 = arith.constant dense<0.000000e+00> : vector<16xf32>
    %70 = vector.multi_reduction <add>, %69, %cst_32 [1] : vector<16x16xf32> to vector<16xf32>
    %71 = vector.shape_cast %70 : vector<16xf32> to vector<16x1xf32>
    %72 = tpu.reciprocal %71 {approx = true} : vector<16x1xf32> -> vector<16x1xf32>
    %73 = vector.broadcast %72 : vector<16x1xf32> to vector<16x16xf32>
    %74 = arith.mulf %69, %73 : vector<16x16xf32>
    %cst_33 = arith.constant dense<0.000000e+00> : vector<16x8xf32>
    %75 = tpu.matmul %74, %61, %cst_33 {dimension_numbers = #tpu.dot_dimension_numbers<[1], [0], [0], [1], [0, 0, 1, 1], [], []>} : vector<16x16xf32>, vector<16x8xf32>, vector<16x8xf32> -> vector<16x8xf32>
    %76 = vector.extract_strided_slice %41 {offsets = [0, 16], sizes = [16, 8], strides = [1, 1]} : vector<16x96xf32> to vector<16x8xf32>
    %77 = vector.extract_strided_slice %41 {offsets = [0, 48], sizes = [16, 8], strides = [1, 1]} : vector<16x96xf32> to vector<16x8xf32>
    %78 = vector.extract_strided_slice %41 {offsets = [0, 80], sizes = [16, 8], strides = [1, 1]} : vector<16x96xf32> to vector<16x8xf32>
    %cst_34 = arith.constant dense<0.000000e+00> : vector<16x16xf32>
    %79 = tpu.matmul %76, %77, %cst_34 {dimension_numbers = #tpu.dot_dimension_numbers<[1], [1], [0], [0], [0, 0, 1, 0], [], []>} : vector<16x8xf32>, vector<16x8xf32>, vector<16x16xf32> -> vector<16x16xf32>
    %cst_35 = arith.constant 0.353553385 : f32
    %80 = vector.broadcast %cst_35 : f32 to vector<16x16xf32>
    %81 = arith.mulf %79, %80 : vector<16x16xf32>
    %cst_36 = arith.constant dense<0xFF800000> : vector<16xf32>
    %82 = vector.multi_reduction <maximumf>, %81, %cst_36 [1] : vector<16x16xf32> to vector<16xf32>
    %83 = vector.shape_cast %82 : vector<16xf32> to vector<16x1xf32>
    %84 = vector.broadcast %83 : vector<16x1xf32> to vector<16x16xf32>
    %85 = arith.subf %81, %84 : vector<16x16xf32>
    %86 = math.exp %85 : vector<16x16xf32>
    %cst_37 = arith.constant dense<0.000000e+00> : vector<16xf32>
    %87 = vector.multi_reduction <add>, %86, %cst_37 [1] : vector<16x16xf32> to vector<16xf32>
    %88 = vector.shape_cast %87 : vector<16xf32> to vector<16x1xf32>
    %89 = tpu.reciprocal %88 {approx = true} : vector<16x1xf32> -> vector<16x1xf32>
    %90 = vector.broadcast %89 : vector<16x1xf32> to vector<16x16xf32>
    %91 = arith.mulf %86, %90 : vector<16x16xf32>
    %cst_38 = arith.constant dense<0.000000e+00> : vector<16x8xf32>
    %92 = tpu.matmul %91, %78, %cst_38 {dimension_numbers = #tpu.dot_dimension_numbers<[1], [0], [0], [1], [0, 0, 1, 1], [], []>} : vector<16x16xf32>, vector<16x8xf32>, vector<16x8xf32> -> vector<16x8xf32>
    %93 = vector.extract_strided_slice %41 {offsets = [0, 24], sizes = [16, 8], strides = [1, 1]} : vector<16x96xf32> to vector<16x8xf32>
    %94 = vector.extract_strided_slice %41 {offsets = [0, 56], sizes = [16, 8], strides = [1, 1]} : vector<16x96xf32> to vector<16x8xf32>
    %95 = vector.extract_strided_slice %41 {offsets = [0, 88], sizes = [16, 8], strides = [1, 1]} : vector<16x96xf32> to vector<16x8xf32>
    %cst_39 = arith.constant dense<0.000000e+00> : vector<16x16xf32>
    %96 = tpu.matmul %93, %94, %cst_39 {dimension_numbers = #tpu.dot_dimension_numbers<[1], [1], [0], [0], [0, 0, 1, 0], [], []>} : vector<16x8xf32>, vector<16x8xf32>, vector<16x16xf32> -> vector<16x16xf32>
    %cst_40 = arith.constant 0.353553385 : f32
    %97 = vector.broadcast %cst_40 : f32 to vector<16x16xf32>
    %98 = arith.mulf %96, %97 : vector<16x16xf32>
    %cst_41 = arith.constant dense<0xFF800000> : vector<16xf32>
    %99 = vector.multi_reduction <maximumf>, %98, %cst_41 [1] : vector<16x16xf32> to vector<16xf32>
    %100 = vector.shape_cast %99 : vector<16xf32> to vector<16x1xf32>
    %101 = vector.broadcast %100 : vector<16x1xf32> to vector<16x16xf32>
    %102 = arith.subf %98, %101 : vector<16x16xf32>
    %103 = math.exp %102 : vector<16x16xf32>
    %cst_42 = arith.constant dense<0.000000e+00> : vector<16xf32>
    %104 = vector.multi_reduction <add>, %103, %cst_42 [1] : vector<16x16xf32> to vector<16xf32>
    %105 = vector.shape_cast %104 : vector<16xf32> to vector<16x1xf32>
    %106 = tpu.reciprocal %105 {approx = true} : vector<16x1xf32> -> vector<16x1xf32>
    %107 = vector.broadcast %106 : vector<16x1xf32> to vector<16x16xf32>
    %108 = arith.mulf %103, %107 : vector<16x16xf32>
    %cst_43 = arith.constant dense<0.000000e+00> : vector<16x8xf32>
    %109 = tpu.matmul %108, %95, %cst_43 {dimension_numbers = #tpu.dot_dimension_numbers<[1], [0], [0], [1], [0, 0, 1, 1], [], []>} : vector<16x16xf32>, vector<16x8xf32>, vector<16x8xf32> -> vector<16x8xf32>
    %110 = tpu.concatenate %58, %75, %92, %109 in 1 : vector<16x8xf32>, vector<16x8xf32>, vector<16x8xf32>, vector<16x8xf32> -> vector<16x32xf32>
    %111 = arith.truncf %110 : vector<16x32xf32> to vector<16x32xbf16>
    %c0_44 = arith.constant 0 : index
    %c0_45 = arith.constant 0 : index
    %c0_46 = arith.constant 0 : index
    %112 = vector.load %arg8[%c0_44, %c0_45, %c0_46] : memref<2x32x32xbf16, #tpu.memory_space<vmem>>, vector<1x32x32xbf16>
    %113 = vector.shape_cast %112 : vector<1x32x32xbf16> to vector<32x32xbf16>
    %cst_47 = arith.constant dense<0.000000e+00> : vector<16x32xf32>
    %114 = tpu.matmul %111, %113, %cst_47 {dimension_numbers = #tpu.dot_dimension_numbers<[1], [0], [0], [1], [0, 0, 1, 1], [], []>} : vector<16x32xbf16>, vector<32x32xbf16>, vector<16x32xf32> -> vector<16x32xf32>
    %115 = arith.addf %7, %114 : vector<16x32xf32>
    %c0_48 = arith.constant 0 : index
    %c0_49 = arith.constant 0 : index
    %c0_50 = arith.constant 0 : index
    %116 = vector.load %arg9[%c0_48, %c0_49, %c0_50] : memref<2x1x32xf32, #tpu.memory_space<vmem>>, vector<1x1x32xf32>
    %117 = vector.shape_cast %116 : vector<1x1x32xf32> to vector<1x32xf32>
    %118 = vector.broadcast %117 : vector<1x32xf32> to vector<16x32xf32>
    %119 = arith.addf %115, %118 : vector<16x32xf32>
    %c0_51 = arith.constant 0 : index
    %c0_52 = arith.constant 0 : index
    %c0_53 = arith.constant 0 : index
    %120 = vector.load %arg10[%c0_51, %c0_52, %c0_53] : memref<2x1x32xf32, #tpu.memory_space<vmem>>, vector<1x1x32xf32>
    %121 = vector.shape_cast %120 : vector<1x1x32xf32> to vector<1x32xf32>
    %c0_54 = arith.constant 0 : index
    %c0_55 = arith.constant 0 : index
    %c0_56 = arith.constant 0 : index
    %122 = vector.load %arg11[%c0_54, %c0_55, %c0_56] : memref<2x1x32xf32, #tpu.memory_space<vmem>>, vector<1x1x32xf32>
    %123 = vector.shape_cast %122 : vector<1x1x32xf32> to vector<1x32xf32>
    %cst_57 = arith.constant dense<0.000000e+00> : vector<16xf32>
    %124 = vector.multi_reduction <add>, %119, %cst_57 [1] : vector<16x32xf32> to vector<16xf32>
    %125 = vector.shape_cast %124 : vector<16xf32> to vector<16x1xf32>
    %cst_58 = arith.constant 3.200000e+01 : f32
    %126 = vector.broadcast %cst_58 : f32 to vector<16x1xf32>
    %127 = arith.divf %125, %126 : vector<16x1xf32>
    %128 = vector.broadcast %127 : vector<16x1xf32> to vector<16x32xf32>
    %129 = arith.subf %119, %128 : vector<16x32xf32>
    %130 = arith.mulf %129, %129 : vector<16x32xf32>
    %cst_59 = arith.constant dense<0.000000e+00> : vector<16xf32>
    %131 = vector.multi_reduction <add>, %130, %cst_59 [1] : vector<16x32xf32> to vector<16xf32>
    %132 = vector.shape_cast %131 : vector<16xf32> to vector<16x1xf32>
    %cst_60 = arith.constant 3.200000e+01 : f32
    %133 = vector.broadcast %cst_60 : f32 to vector<16x1xf32>
    %134 = arith.divf %132, %133 : vector<16x1xf32>
    %135 = vector.broadcast %127 : vector<16x1xf32> to vector<16x32xf32>
    %136 = arith.subf %119, %135 : vector<16x32xf32>
    %cst_61 = arith.constant 9.99999997E-7 : f32
    %137 = vector.broadcast %cst_61 : f32 to vector<16x1xf32>
    %138 = arith.addf %134, %137 : vector<16x1xf32>
    %139 = math.rsqrt %138 : vector<16x1xf32>
    %140 = vector.broadcast %139 : vector<16x1xf32> to vector<16x32xf32>
    %141 = arith.mulf %136, %140 : vector<16x32xf32>
    %142 = vector.broadcast %121 : vector<1x32xf32> to vector<16x32xf32>
    %143 = arith.mulf %141, %142 : vector<16x32xf32>
    %144 = vector.broadcast %123 : vector<1x32xf32> to vector<16x32xf32>
    %145 = arith.addf %143, %144 : vector<16x32xf32>
    %146 = arith.truncf %145 : vector<16x32xf32> to vector<16x32xbf16>
    %c0_62 = arith.constant 0 : index
    %c0_63 = arith.constant 0 : index
    %c0_64 = arith.constant 0 : index
    %147 = vector.load %arg12[%c0_62, %c0_63, %c0_64] : memref<2x32x128xbf16, #tpu.memory_space<vmem>>, vector<1x32x128xbf16>
    %148 = vector.shape_cast %147 : vector<1x32x128xbf16> to vector<32x128xbf16>
    %cst_65 = arith.constant dense<0.000000e+00> : vector<16x128xf32>
    %149 = tpu.matmul %146, %148, %cst_65 {dimension_numbers = #tpu.dot_dimension_numbers<[1], [0], [0], [1], [0, 0, 1, 1], [], []>} : vector<16x32xbf16>, vector<32x128xbf16>, vector<16x128xf32> -> vector<16x128xf32>
    %c0_66 = arith.constant 0 : index
    %c0_67 = arith.constant 0 : index
    %c0_68 = arith.constant 0 : index
    %150 = vector.load %arg13[%c0_66, %c0_67, %c0_68] : memref<2x1x128xf32, #tpu.memory_space<vmem>>, vector<1x1x128xf32>
    %151 = vector.shape_cast %150 : vector<1x1x128xf32> to vector<1x128xf32>
    %152 = vector.broadcast %151 : vector<1x128xf32> to vector<16x128xf32>
    %153 = arith.addf %149, %152 : vector<16x128xf32>
    %154 = arith.mulf %153, %153 : vector<16x128xf32>
    %155 = arith.mulf %153, %154 : vector<16x128xf32>
    %cst_69 = arith.constant 4.471500e-02 : f32
    %156 = vector.broadcast %cst_69 : f32 to vector<16x128xf32>
    %157 = arith.mulf %156, %155 : vector<16x128xf32>
    %158 = arith.addf %153, %157 : vector<16x128xf32>
    %cst_70 = arith.constant 0.797884583 : f32
    %159 = vector.broadcast %cst_70 : f32 to vector<16x128xf32>
    %160 = arith.mulf %159, %158 : vector<16x128xf32>
    %161 = math.tanh %160 : vector<16x128xf32>
    %cst_71 = arith.constant 1.000000e+00 : f32
    %162 = vector.broadcast %cst_71 : f32 to vector<16x128xf32>
    %163 = arith.addf %162, %161 : vector<16x128xf32>
    %cst_72 = arith.constant 5.000000e-01 : f32
    %164 = vector.broadcast %cst_72 : f32 to vector<16x128xf32>
    %165 = arith.mulf %164, %163 : vector<16x128xf32>
    %166 = arith.mulf %153, %165 : vector<16x128xf32>
    %167 = arith.truncf %166 : vector<16x128xf32> to vector<16x128xbf16>
    %c0_73 = arith.constant 0 : index
    %c0_74 = arith.constant 0 : index
    %c0_75 = arith.constant 0 : index
    %168 = vector.load %arg14[%c0_73, %c0_74, %c0_75] : memref<2x128x32xbf16, #tpu.memory_space<vmem>>, vector<1x128x32xbf16>
    %169 = vector.shape_cast %168 : vector<1x128x32xbf16> to vector<128x32xbf16>
    %cst_76 = arith.constant dense<0.000000e+00> : vector<16x32xf32>
    %170 = tpu.matmul %167, %169, %cst_76 {dimension_numbers = #tpu.dot_dimension_numbers<[1], [0], [0], [1], [0, 0, 1, 1], [], []>} : vector<16x128xbf16>, vector<128x32xbf16>, vector<16x32xf32> -> vector<16x32xf32>
    %c0_77 = arith.constant 0 : index
    %c0_78 = arith.constant 0 : index
    %c0_79 = arith.constant 0 : index
    %171 = vector.load %arg15[%c0_77, %c0_78, %c0_79] : memref<2x1x32xf32, #tpu.memory_space<vmem>>, vector<1x1x32xf32>
    %172 = vector.shape_cast %171 : vector<1x1x32xf32> to vector<1x32xf32>
    %173 = vector.broadcast %172 : vector<1x32xf32> to vector<16x32xf32>
    %174 = arith.addf %170, %173 : vector<16x32xf32>
    %175 = arith.addf %119, %174 : vector<16x32xf32>
    %c1 = arith.constant 1 : index
    %c0_80 = arith.constant 0 : index
    %c0_81 = arith.constant 0 : index
    %176 = vector.load %arg4[%c1, %c0_80, %c0_81] : memref<2x1x32xf32, #tpu.memory_space<vmem>>, vector<1x1x32xf32>
    %177 = vector.shape_cast %176 : vector<1x1x32xf32> to vector<1x32xf32>
    %c1_82 = arith.constant 1 : index
    %c0_83 = arith.constant 0 : index
    %c0_84 = arith.constant 0 : index
    %178 = vector.load %arg5[%c1_82, %c0_83, %c0_84] : memref<2x1x32xf32, #tpu.memory_space<vmem>>, vector<1x1x32xf32>
    %179 = vector.shape_cast %178 : vector<1x1x32xf32> to vector<1x32xf32>
    %cst_85 = arith.constant dense<0.000000e+00> : vector<16xf32>
    %180 = vector.multi_reduction <add>, %175, %cst_85 [1] : vector<16x32xf32> to vector<16xf32>
    %181 = vector.shape_cast %180 : vector<16xf32> to vector<16x1xf32>
    %cst_86 = arith.constant 3.200000e+01 : f32
    %182 = vector.broadcast %cst_86 : f32 to vector<16x1xf32>
    %183 = arith.divf %181, %182 : vector<16x1xf32>
    %184 = vector.broadcast %183 : vector<16x1xf32> to vector<16x32xf32>
    %185 = arith.subf %175, %184 : vector<16x32xf32>
    %186 = arith.mulf %185, %185 : vector<16x32xf32>
    %cst_87 = arith.constant dense<0.000000e+00> : vector<16xf32>
    %187 = vector.multi_reduction <add>, %186, %cst_87 [1] : vector<16x32xf32> to vector<16xf32>
    %188 = vector.shape_cast %187 : vector<16xf32> to vector<16x1xf32>
    %cst_88 = arith.constant 3.200000e+01 : f32
    %189 = vector.broadcast %cst_88 : f32 to vector<16x1xf32>
    %190 = arith.divf %188, %189 : vector<16x1xf32>
    %191 = vector.broadcast %183 : vector<16x1xf32> to vector<16x32xf32>
    %192 = arith.subf %175, %191 : vector<16x32xf32>
    %cst_89 = arith.constant 9.99999997E-7 : f32
    %193 = vector.broadcast %cst_89 : f32 to vector<16x1xf32>
    %194 = arith.addf %190, %193 : vector<16x1xf32>
    %195 = math.rsqrt %194 : vector<16x1xf32>
    %196 = vector.broadcast %195 : vector<16x1xf32> to vector<16x32xf32>
    %197 = arith.mulf %192, %196 : vector<16x32xf32>
    %198 = vector.broadcast %177 : vector<1x32xf32> to vector<16x32xf32>
    %199 = arith.mulf %197, %198 : vector<16x32xf32>
    %200 = vector.broadcast %179 : vector<1x32xf32> to vector<16x32xf32>
    %201 = arith.addf %199, %200 : vector<16x32xf32>
    %202 = arith.truncf %201 : vector<16x32xf32> to vector<16x32xbf16>
    %c1_90 = arith.constant 1 : index
    %c0_91 = arith.constant 0 : index
    %c0_92 = arith.constant 0 : index
    %203 = vector.load %arg6[%c1_90, %c0_91, %c0_92] : memref<2x32x96xbf16, #tpu.memory_space<vmem>>, vector<1x32x96xbf16>
    %204 = vector.shape_cast %203 : vector<1x32x96xbf16> to vector<32x96xbf16>
    %cst_93 = arith.constant dense<0.000000e+00> : vector<16x96xf32>
    %205 = tpu.matmul %202, %204, %cst_93 {dimension_numbers = #tpu.dot_dimension_numbers<[1], [0], [0], [1], [0, 0, 1, 1], [], []>} : vector<16x32xbf16>, vector<32x96xbf16>, vector<16x96xf32> -> vector<16x96xf32>
    %c1_94 = arith.constant 1 : index
    %c0_95 = arith.constant 0 : index
    %c0_96 = arith.constant 0 : index
    %206 = vector.load %arg7[%c1_94, %c0_95, %c0_96] : memref<2x1x96xf32, #tpu.memory_space<vmem>>, vector<1x1x96xf32>
    %207 = vector.shape_cast %206 : vector<1x1x96xf32> to vector<1x96xf32>
    %208 = vector.broadcast %207 : vector<1x96xf32> to vector<16x96xf32>
    %209 = arith.addf %205, %208 : vector<16x96xf32>
    %210 = vector.extract_strided_slice %209 {offsets = [0, 0], sizes = [16, 8], strides = [1, 1]} : vector<16x96xf32> to vector<16x8xf32>
    %211 = vector.extract_strided_slice %209 {offsets = [0, 32], sizes = [16, 8], strides = [1, 1]} : vector<16x96xf32> to vector<16x8xf32>
    %212 = vector.extract_strided_slice %209 {offsets = [0, 64], sizes = [16, 8], strides = [1, 1]} : vector<16x96xf32> to vector<16x8xf32>
    %cst_97 = arith.constant dense<0.000000e+00> : vector<16x16xf32>
    %213 = tpu.matmul %210, %211, %cst_97 {dimension_numbers = #tpu.dot_dimension_numbers<[1], [1], [0], [0], [0, 0, 1, 0], [], []>} : vector<16x8xf32>, vector<16x8xf32>, vector<16x16xf32> -> vector<16x16xf32>
    %cst_98 = arith.constant 0.353553385 : f32
    %214 = vector.broadcast %cst_98 : f32 to vector<16x16xf32>
    %215 = arith.mulf %213, %214 : vector<16x16xf32>
    %cst_99 = arith.constant dense<0xFF800000> : vector<16xf32>
    %216 = vector.multi_reduction <maximumf>, %215, %cst_99 [1] : vector<16x16xf32> to vector<16xf32>
    %217 = vector.shape_cast %216 : vector<16xf32> to vector<16x1xf32>
    %218 = vector.broadcast %217 : vector<16x1xf32> to vector<16x16xf32>
    %219 = arith.subf %215, %218 : vector<16x16xf32>
    %220 = math.exp %219 : vector<16x16xf32>
    %cst_100 = arith.constant dense<0.000000e+00> : vector<16xf32>
    %221 = vector.multi_reduction <add>, %220, %cst_100 [1] : vector<16x16xf32> to vector<16xf32>
    %222 = vector.shape_cast %221 : vector<16xf32> to vector<16x1xf32>
    %223 = tpu.reciprocal %222 {approx = true} : vector<16x1xf32> -> vector<16x1xf32>
    %224 = vector.broadcast %223 : vector<16x1xf32> to vector<16x16xf32>
    %225 = arith.mulf %220, %224 : vector<16x16xf32>
    %cst_101 = arith.constant dense<0.000000e+00> : vector<16x8xf32>
    %226 = tpu.matmul %225, %212, %cst_101 {dimension_numbers = #tpu.dot_dimension_numbers<[1], [0], [0], [1], [0, 0, 1, 1], [], []>} : vector<16x16xf32>, vector<16x8xf32>, vector<16x8xf32> -> vector<16x8xf32>
    %227 = vector.extract_strided_slice %209 {offsets = [0, 8], sizes = [16, 8], strides = [1, 1]} : vector<16x96xf32> to vector<16x8xf32>
    %228 = vector.extract_strided_slice %209 {offsets = [0, 40], sizes = [16, 8], strides = [1, 1]} : vector<16x96xf32> to vector<16x8xf32>
    %229 = vector.extract_strided_slice %209 {offsets = [0, 72], sizes = [16, 8], strides = [1, 1]} : vector<16x96xf32> to vector<16x8xf32>
    %cst_102 = arith.constant dense<0.000000e+00> : vector<16x16xf32>
    %230 = tpu.matmul %227, %228, %cst_102 {dimension_numbers = #tpu.dot_dimension_numbers<[1], [1], [0], [0], [0, 0, 1, 0], [], []>} : vector<16x8xf32>, vector<16x8xf32>, vector<16x16xf32> -> vector<16x16xf32>
    %cst_103 = arith.constant 0.353553385 : f32
    %231 = vector.broadcast %cst_103 : f32 to vector<16x16xf32>
    %232 = arith.mulf %230, %231 : vector<16x16xf32>
    %cst_104 = arith.constant dense<0xFF800000> : vector<16xf32>
    %233 = vector.multi_reduction <maximumf>, %232, %cst_104 [1] : vector<16x16xf32> to vector<16xf32>
    %234 = vector.shape_cast %233 : vector<16xf32> to vector<16x1xf32>
    %235 = vector.broadcast %234 : vector<16x1xf32> to vector<16x16xf32>
    %236 = arith.subf %232, %235 : vector<16x16xf32>
    %237 = math.exp %236 : vector<16x16xf32>
    %cst_105 = arith.constant dense<0.000000e+00> : vector<16xf32>
    %238 = vector.multi_reduction <add>, %237, %cst_105 [1] : vector<16x16xf32> to vector<16xf32>
    %239 = vector.shape_cast %238 : vector<16xf32> to vector<16x1xf32>
    %240 = tpu.reciprocal %239 {approx = true} : vector<16x1xf32> -> vector<16x1xf32>
    %241 = vector.broadcast %240 : vector<16x1xf32> to vector<16x16xf32>
    %242 = arith.mulf %237, %241 : vector<16x16xf32>
    %cst_106 = arith.constant dense<0.000000e+00> : vector<16x8xf32>
    %243 = tpu.matmul %242, %229, %cst_106 {dimension_numbers = #tpu.dot_dimension_numbers<[1], [0], [0], [1], [0, 0, 1, 1], [], []>} : vector<16x16xf32>, vector<16x8xf32>, vector<16x8xf32> -> vector<16x8xf32>
    %244 = vector.extract_strided_slice %209 {offsets = [0, 16], sizes = [16, 8], strides = [1, 1]} : vector<16x96xf32> to vector<16x8xf32>
    %245 = vector.extract_strided_slice %209 {offsets = [0, 48], sizes = [16, 8], strides = [1, 1]} : vector<16x96xf32> to vector<16x8xf32>
    %246 = vector.extract_strided_slice %209 {offsets = [0, 80], sizes = [16, 8], strides = [1, 1]} : vector<16x96xf32> to vector<16x8xf32>
    %cst_107 = arith.constant dense<0.000000e+00> : vector<16x16xf32>
    %247 = tpu.matmul %244, %245, %cst_107 {dimension_numbers = #tpu.dot_dimension_numbers<[1], [1], [0], [0], [0, 0, 1, 0], [], []>} : vector<16x8xf32>, vector<16x8xf32>, vector<16x16xf32> -> vector<16x16xf32>
    %cst_108 = arith.constant 0.353553385 : f32
    %248 = vector.broadcast %cst_108 : f32 to vector<16x16xf32>
    %249 = arith.mulf %247, %248 : vector<16x16xf32>
    %cst_109 = arith.constant dense<0xFF800000> : vector<16xf32>
    %250 = vector.multi_reduction <maximumf>, %249, %cst_109 [1] : vector<16x16xf32> to vector<16xf32>
    %251 = vector.shape_cast %250 : vector<16xf32> to vector<16x1xf32>
    %252 = vector.broadcast %251 : vector<16x1xf32> to vector<16x16xf32>
    %253 = arith.subf %249, %252 : vector<16x16xf32>
    %254 = math.exp %253 : vector<16x16xf32>
    %cst_110 = arith.constant dense<0.000000e+00> : vector<16xf32>
    %255 = vector.multi_reduction <add>, %254, %cst_110 [1] : vector<16x16xf32> to vector<16xf32>
    %256 = vector.shape_cast %255 : vector<16xf32> to vector<16x1xf32>
    %257 = tpu.reciprocal %256 {approx = true} : vector<16x1xf32> -> vector<16x1xf32>
    %258 = vector.broadcast %257 : vector<16x1xf32> to vector<16x16xf32>
    %259 = arith.mulf %254, %258 : vector<16x16xf32>
    %cst_111 = arith.constant dense<0.000000e+00> : vector<16x8xf32>
    %260 = tpu.matmul %259, %246, %cst_111 {dimension_numbers = #tpu.dot_dimension_numbers<[1], [0], [0], [1], [0, 0, 1, 1], [], []>} : vector<16x16xf32>, vector<16x8xf32>, vector<16x8xf32> -> vector<16x8xf32>
    %261 = vector.extract_strided_slice %209 {offsets = [0, 24], sizes = [16, 8], strides = [1, 1]} : vector<16x96xf32> to vector<16x8xf32>
    %262 = vector.extract_strided_slice %209 {offsets = [0, 56], sizes = [16, 8], strides = [1, 1]} : vector<16x96xf32> to vector<16x8xf32>
    %263 = vector.extract_strided_slice %209 {offsets = [0, 88], sizes = [16, 8], strides = [1, 1]} : vector<16x96xf32> to vector<16x8xf32>
    %cst_112 = arith.constant dense<0.000000e+00> : vector<16x16xf32>
    %264 = tpu.matmul %261, %262, %cst_112 {dimension_numbers = #tpu.dot_dimension_numbers<[1], [1], [0], [0], [0, 0, 1, 0], [], []>} : vector<16x8xf32>, vector<16x8xf32>, vector<16x16xf32> -> vector<16x16xf32>
    %cst_113 = arith.constant 0.353553385 : f32
    %265 = vector.broadcast %cst_113 : f32 to vector<16x16xf32>
    %266 = arith.mulf %264, %265 : vector<16x16xf32>
    %cst_114 = arith.constant dense<0xFF800000> : vector<16xf32>
    %267 = vector.multi_reduction <maximumf>, %266, %cst_114 [1] : vector<16x16xf32> to vector<16xf32>
    %268 = vector.shape_cast %267 : vector<16xf32> to vector<16x1xf32>
    %269 = vector.broadcast %268 : vector<16x1xf32> to vector<16x16xf32>
    %270 = arith.subf %266, %269 : vector<16x16xf32>
    %271 = math.exp %270 : vector<16x16xf32>
    %cst_115 = arith.constant dense<0.000000e+00> : vector<16xf32>
    %272 = vector.multi_reduction <add>, %271, %cst_115 [1] : vector<16x16xf32> to vector<16xf32>
    %273 = vector.shape_cast %272 : vector<16xf32> to vector<16x1xf32>
    %274 = tpu.reciprocal %273 {approx = true} : vector<16x1xf32> -> vector<16x1xf32>
    %275 = vector.broadcast %274 : vector<16x1xf32> to vector<16x16xf32>
    %276 = arith.mulf %271, %275 : vector<16x16xf32>
    %cst_116 = arith.constant dense<0.000000e+00> : vector<16x8xf32>
    %277 = tpu.matmul %276, %263, %cst_116 {dimension_numbers = #tpu.dot_dimension_numbers<[1], [0], [0], [1], [0, 0, 1, 1], [], []>} : vector<16x16xf32>, vector<16x8xf32>, vector<16x8xf32> -> vector<16x8xf32>
    %278 = tpu.concatenate %226, %243, %260, %277 in 1 : vector<16x8xf32>, vector<16x8xf32>, vector<16x8xf32>, vector<16x8xf32> -> vector<16x32xf32>
    %279 = arith.truncf %278 : vector<16x32xf32> to vector<16x32xbf16>
    %c1_117 = arith.constant 1 : index
    %c0_118 = arith.constant 0 : index
    %c0_119 = arith.constant 0 : index
    %280 = vector.load %arg8[%c1_117, %c0_118, %c0_119] : memref<2x32x32xbf16, #tpu.memory_space<vmem>>, vector<1x32x32xbf16>
    %281 = vector.shape_cast %280 : vector<1x32x32xbf16> to vector<32x32xbf16>
    %cst_120 = arith.constant dense<0.000000e+00> : vector<16x32xf32>
    %282 = tpu.matmul %279, %281, %cst_120 {dimension_numbers = #tpu.dot_dimension_numbers<[1], [0], [0], [1], [0, 0, 1, 1], [], []>} : vector<16x32xbf16>, vector<32x32xbf16>, vector<16x32xf32> -> vector<16x32xf32>
    %283 = arith.addf %175, %282 : vector<16x32xf32>
    %c1_121 = arith.constant 1 : index
    %c0_122 = arith.constant 0 : index
    %c0_123 = arith.constant 0 : index
    %284 = vector.load %arg9[%c1_121, %c0_122, %c0_123] : memref<2x1x32xf32, #tpu.memory_space<vmem>>, vector<1x1x32xf32>
    %285 = vector.shape_cast %284 : vector<1x1x32xf32> to vector<1x32xf32>
    %286 = vector.broadcast %285 : vector<1x32xf32> to vector<16x32xf32>
    %287 = arith.addf %283, %286 : vector<16x32xf32>
    %c1_124 = arith.constant 1 : index
    %c0_125 = arith.constant 0 : index
    %c0_126 = arith.constant 0 : index
    %288 = vector.load %arg10[%c1_124, %c0_125, %c0_126] : memref<2x1x32xf32, #tpu.memory_space<vmem>>, vector<1x1x32xf32>
    %289 = vector.shape_cast %288 : vector<1x1x32xf32> to vector<1x32xf32>
    %c1_127 = arith.constant 1 : index
    %c0_128 = arith.constant 0 : index
    %c0_129 = arith.constant 0 : index
    %290 = vector.load %arg11[%c1_127, %c0_128, %c0_129] : memref<2x1x32xf32, #tpu.memory_space<vmem>>, vector<1x1x32xf32>
    %291 = vector.shape_cast %290 : vector<1x1x32xf32> to vector<1x32xf32>
    %cst_130 = arith.constant dense<0.000000e+00> : vector<16xf32>
    %292 = vector.multi_reduction <add>, %287, %cst_130 [1] : vector<16x32xf32> to vector<16xf32>
    %293 = vector.shape_cast %292 : vector<16xf32> to vector<16x1xf32>
    %cst_131 = arith.constant 3.200000e+01 : f32
    %294 = vector.broadcast %cst_131 : f32 to vector<16x1xf32>
    %295 = arith.divf %293, %294 : vector<16x1xf32>
    %296 = vector.broadcast %295 : vector<16x1xf32> to vector<16x32xf32>
    %297 = arith.subf %287, %296 : vector<16x32xf32>
    %298 = arith.mulf %297, %297 : vector<16x32xf32>
    %cst_132 = arith.constant dense<0.000000e+00> : vector<16xf32>
    %299 = vector.multi_reduction <add>, %298, %cst_132 [1] : vector<16x32xf32> to vector<16xf32>
    %300 = vector.shape_cast %299 : vector<16xf32> to vector<16x1xf32>
    %cst_133 = arith.constant 3.200000e+01 : f32
    %301 = vector.broadcast %cst_133 : f32 to vector<16x1xf32>
    %302 = arith.divf %300, %301 : vector<16x1xf32>
    %303 = vector.broadcast %295 : vector<16x1xf32> to vector<16x32xf32>
    %304 = arith.subf %287, %303 : vector<16x32xf32>
    %cst_134 = arith.constant 9.99999997E-7 : f32
    %305 = vector.broadcast %cst_134 : f32 to vector<16x1xf32>
    %306 = arith.addf %302, %305 : vector<16x1xf32>
    %307 = math.rsqrt %306 : vector<16x1xf32>
    %308 = vector.broadcast %307 : vector<16x1xf32> to vector<16x32xf32>
    %309 = arith.mulf %304, %308 : vector<16x32xf32>
    %310 = vector.broadcast %289 : vector<1x32xf32> to vector<16x32xf32>
    %311 = arith.mulf %309, %310 : vector<16x32xf32>
    %312 = vector.broadcast %291 : vector<1x32xf32> to vector<16x32xf32>
    %313 = arith.addf %311, %312 : vector<16x32xf32>
    %314 = arith.truncf %313 : vector<16x32xf32> to vector<16x32xbf16>
    %c1_135 = arith.constant 1 : index
    %c0_136 = arith.constant 0 : index
    %c0_137 = arith.constant 0 : index
    %315 = vector.load %arg12[%c1_135, %c0_136, %c0_137] : memref<2x32x128xbf16, #tpu.memory_space<vmem>>, vector<1x32x128xbf16>
    %316 = vector.shape_cast %315 : vector<1x32x128xbf16> to vector<32x128xbf16>
    %cst_138 = arith.constant dense<0.000000e+00> : vector<16x128xf32>
    %317 = tpu.matmul %314, %316, %cst_138 {dimension_numbers = #tpu.dot_dimension_numbers<[1], [0], [0], [1], [0, 0, 1, 1], [], []>} : vector<16x32xbf16>, vector<32x128xbf16>, vector<16x128xf32> -> vector<16x128xf32>
    %c1_139 = arith.constant 1 : index
    %c0_140 = arith.constant 0 : index
    %c0_141 = arith.constant 0 : index
    %318 = vector.load %arg13[%c1_139, %c0_140, %c0_141] : memref<2x1x128xf32, #tpu.memory_space<vmem>>, vector<1x1x128xf32>
    %319 = vector.shape_cast %318 : vector<1x1x128xf32> to vector<1x128xf32>
    %320 = vector.broadcast %319 : vector<1x128xf32> to vector<16x128xf32>
    %321 = arith.addf %317, %320 : vector<16x128xf32>
    %322 = arith.mulf %321, %321 : vector<16x128xf32>
    %323 = arith.mulf %321, %322 : vector<16x128xf32>
    %cst_142 = arith.constant 4.471500e-02 : f32
    %324 = vector.broadcast %cst_142 : f32 to vector<16x128xf32>
    %325 = arith.mulf %324, %323 : vector<16x128xf32>
    %326 = arith.addf %321, %325 : vector<16x128xf32>
    %cst_143 = arith.constant 0.797884583 : f32
    %327 = vector.broadcast %cst_143 : f32 to vector<16x128xf32>
    %328 = arith.mulf %327, %326 : vector<16x128xf32>
    %329 = math.tanh %328 : vector<16x128xf32>
    %cst_144 = arith.constant 1.000000e+00 : f32
    %330 = vector.broadcast %cst_144 : f32 to vector<16x128xf32>
    %331 = arith.addf %330, %329 : vector<16x128xf32>
    %cst_145 = arith.constant 5.000000e-01 : f32
    %332 = vector.broadcast %cst_145 : f32 to vector<16x128xf32>
    %333 = arith.mulf %332, %331 : vector<16x128xf32>
    %334 = arith.mulf %321, %333 : vector<16x128xf32>
    %335 = arith.truncf %334 : vector<16x128xf32> to vector<16x128xbf16>
    %c1_146 = arith.constant 1 : index
    %c0_147 = arith.constant 0 : index
    %c0_148 = arith.constant 0 : index
    %336 = vector.load %arg14[%c1_146, %c0_147, %c0_148] : memref<2x128x32xbf16, #tpu.memory_space<vmem>>, vector<1x128x32xbf16>
    %337 = vector.shape_cast %336 : vector<1x128x32xbf16> to vector<128x32xbf16>
    %cst_149 = arith.constant dense<0.000000e+00> : vector<16x32xf32>
    %338 = tpu.matmul %335, %337, %cst_149 {dimension_numbers = #tpu.dot_dimension_numbers<[1], [0], [0], [1], [0, 0, 1, 1], [], []>} : vector<16x128xbf16>, vector<128x32xbf16>, vector<16x32xf32> -> vector<16x32xf32>
    %c1_150 = arith.constant 1 : index
    %c0_151 = arith.constant 0 : index
    %c0_152 = arith.constant 0 : index
    %339 = vector.load %arg15[%c1_150, %c0_151, %c0_152] : memref<2x1x32xf32, #tpu.memory_space<vmem>>, vector<1x1x32xf32>
    %340 = vector.shape_cast %339 : vector<1x1x32xf32> to vector<1x32xf32>
    %341 = vector.broadcast %340 : vector<1x32xf32> to vector<16x32xf32>
    %342 = arith.addf %338, %341 : vector<16x32xf32>
    %343 = arith.addf %287, %342 : vector<16x32xf32>
    %c0_153 = arith.constant 0 : index
    %c0_154 = arith.constant 0 : index
    %344 = vector.load %arg16[%c0_153, %c0_154] : memref<1x32xf32, #tpu.memory_space<vmem>>, vector<1x32xf32>
    %c0_155 = arith.constant 0 : index
    %c0_156 = arith.constant 0 : index
    %345 = vector.load %arg17[%c0_155, %c0_156] : memref<1x32xf32, #tpu.memory_space<vmem>>, vector<1x32xf32>
    %cst_157 = arith.constant dense<0.000000e+00> : vector<16xf32>
    %346 = vector.multi_reduction <add>, %343, %cst_157 [1] : vector<16x32xf32> to vector<16xf32>
    %347 = vector.shape_cast %346 : vector<16xf32> to vector<16x1xf32>
    %cst_158 = arith.constant 3.200000e+01 : f32
    %348 = vector.broadcast %cst_158 : f32 to vector<16x1xf32>
    %349 = arith.divf %347, %348 : vector<16x1xf32>
    %350 = vector.broadcast %349 : vector<16x1xf32> to vector<16x32xf32>
    %351 = arith.subf %343, %350 : vector<16x32xf32>
    %352 = arith.mulf %351, %351 : vector<16x32xf32>
    %cst_159 = arith.constant dense<0.000000e+00> : vector<16xf32>
    %353 = vector.multi_reduction <add>, %352, %cst_159 [1] : vector<16x32xf32> to vector<16xf32>
    %354 = vector.shape_cast %353 : vector<16xf32> to vector<16x1xf32>
    %cst_160 = arith.constant 3.200000e+01 : f32
    %355 = vector.broadcast %cst_160 : f32 to vector<16x1xf32>
    %356 = arith.divf %354, %355 : vector<16x1xf32>
    %357 = vector.broadcast %349 : vector<16x1xf32> to vector<16x32xf32>
    %358 = arith.subf %343, %357 : vector<16x32xf32>
    %cst_161 = arith.constant 9.99999997E-7 : f32
    %359 = vector.broadcast %cst_161 : f32 to vector<16x1xf32>
    %360 = arith.addf %356, %359 : vector<16x1xf32>
    %361 = math.rsqrt %360 : vector<16x1xf32>
    %362 = vector.broadcast %361 : vector<16x1xf32> to vector<16x32xf32>
    %363 = arith.mulf %358, %362 : vector<16x32xf32>
    %364 = vector.broadcast %344 : vector<1x32xf32> to vector<16x32xf32>
    %365 = arith.mulf %363, %364 : vector<16x32xf32>
    %366 = vector.broadcast %345 : vector<1x32xf32> to vector<16x32xf32>
    %367 = arith.addf %365, %366 : vector<16x32xf32>
    %c0_162 = arith.constant 0 : index
    %c0_163 = arith.constant 0 : index
    %c0_164 = arith.constant 0 : index
    %368 = vector.load %arg18[%c0_162, %c0_163, %c0_164] : memref<1x16x32xf32, #tpu.memory_space<vmem>>, vector<1x16x32xf32>
    %369 = vector.shape_cast %368 : vector<1x16x32xf32> to vector<16x32xf32>
    %370 = vector.shape_cast %367 : vector<16x32xf32> to vector<1x16x32xf32>
    tpu.vector_store %arg18[%c0_162, %c0_163, %c0_164], %370 {strides = array<i32>} : memref<1x16x32xf32, #tpu.memory_space<vmem>>, vector<1x16x32xf32>,
    return
  }
  func.func @transform_0(%arg0: i32) -> (i32, i32, i32) {
    %c0_i32 = arith.constant 0 : i32
    %c0_i32_0 = arith.constant 0 : i32
    %c0_i32_1 = arith.constant 0 : i32
    return %arg0, %c0_i32, %c0_i32_0 : i32, i32, i32
  }
  func.func @transform_1(%arg0: i32) -> (i32, i32) {
    %c0_i32 = arith.constant 0 : i32
    %c0_i32_0 = arith.constant 0 : i32
    %c0_i32_1 = arith.constant 0 : i32
    return %c0_i32, %c0_i32_0 : i32, i32
  }
  func.func @transform_2(%arg0: i32) -> (i32, i32) {
    %c0_i32 = arith.constant 0 : i32
    %c0_i32_0 = arith.constant 0 : i32
    %c0_i32_1 = arith.constant 0 : i32
    return %c0_i32, %c0_i32_0 : i32, i32
  }
  func.func @transform_3(%arg0: i32) -> (i32, i32, i32) {
    %c0_i32 = arith.constant 0 : i32
    %c0_i32_0 = arith.constant 0 : i32
    %c0_i32_1 = arith.constant 0 : i32
    %c0_i32_2 = arith.constant 0 : i32
    return %c0_i32, %c0_i32_0, %c0_i32_1 : i32, i32, i32
  }
  func.func @transform_4(%arg0: i32) -> (i32, i32, i32) {
    %c0_i32 = arith.constant 0 : i32
    %c0_i32_0 = arith.constant 0 : i32
    %c0_i32_1 = arith.constant 0 : i32
    %c0_i32_2 = arith.constant 0 : i32
    return %c0_i32, %c0_i32_0, %c0_i32_1 : i32, i32, i32
  }
  func.func @transform_5(%arg0: i32) -> (i32, i32, i32) {
    %c0_i32 = arith.constant 0 : i32
    %c0_i32_0 = arith.constant 0 : i32
    %c0_i32_1 = arith.constant 0 : i32
    %c0_i32_2 = arith.constant 0 : i32
    return %c0_i32, %c0_i32_0, %c0_i32_1 : i32, i32, i32
  }
  func.func @transform_6(%arg0: i32) -> (i32, i32, i32) {
    %c0_i32 = arith.constant 0 : i32
    %c0_i32_0 = arith.constant 0 : i32
    %c0_i32_1 = arith.constant 0 : i32
    %c0_i32_2 = arith.constant 0 : i32
    return %c0_i32, %c0_i32_0, %c0_i32_1 : i32, i32, i32
  }
  func.func @transform_7(%arg0: i32) -> (i32, i32, i32) {
    %c0_i32 = arith.constant 0 : i32
    %c0_i32_0 = arith.constant 0 : i32
    %c0_i32_1 = arith.constant 0 : i32
    %c0_i32_2 = arith.constant 0 : i32
    return %c0_i32, %c0_i32_0, %c0_i32_1 : i32, i32, i32
  }
  func.func @transform_8(%arg0: i32) -> (i32, i32, i32) {
    %c0_i32 = arith.constant 0 : i32
    %c0_i32_0 = arith.constant 0 : i32
    %c0_i32_1 = arith.constant 0 : i32
    %c0_i32_2 = arith.constant 0 : i32
    return %c0_i32, %c0_i32_0, %c0_i32_1 : i32, i32, i32
  }
  func.func @transform_9(%arg0: i32) -> (i32, i32, i32) {
    %c0_i32 = arith.constant 0 : i32
    %c0_i32_0 = arith.constant 0 : i32
    %c0_i32_1 = arith.constant 0 : i32
    %c0_i32_2 = arith.constant 0 : i32
    return %c0_i32, %c0_i32_0, %c0_i32_1 : i32, i32, i32
  }
  func.func @transform_10(%arg0: i32) -> (i32, i32, i32) {
    %c0_i32 = arith.constant 0 : i32
    %c0_i32_0 = arith.constant 0 : i32
    %c0_i32_1 = arith.constant 0 : i32
    %c0_i32_2 = arith.constant 0 : i32
    return %c0_i32, %c0_i32_0, %c0_i32_1 : i32, i32, i32
  }
  func.func @transform_11(%arg0: i32) -> (i32, i32, i32) {
    %c0_i32 = arith.constant 0 : i32
    %c0_i32_0 = arith.constant 0 : i32
    %c0_i32_1 = arith.constant 0 : i32
    %c0_i32_2 = arith.constant 0 : i32
    return %c0_i32, %c0_i32_0, %c0_i32_1 : i32, i32, i32
  }
  func.func @transform_12(%arg0: i32) -> (i32, i32, i32) {
    %c0_i32 = arith.constant 0 : i32
    %c0_i32_0 = arith.constant 0 : i32
    %c0_i32_1 = arith.constant 0 : i32
    %c0_i32_2 = arith.constant 0 : i32
    return %c0_i32, %c0_i32_0, %c0_i32_1 : i32, i32, i32
  }
  func.func @transform_13(%arg0: i32) -> (i32, i32, i32) {
    %c0_i32 = arith.constant 0 : i32
    %c0_i32_0 = arith.constant 0 : i32
    %c0_i32_1 = arith.constant 0 : i32
    %c0_i32_2 = arith.constant 0 : i32
    return %c0_i32, %c0_i32_0, %c0_i32_1 : i32, i32, i32
  }
  func.func @transform_14(%arg0: i32) -> (i32, i32, i32) {
    %c0_i32 = arith.constant 0 : i32
    %c0_i32_0 = arith.constant 0 : i32
    %c0_i32_1 = arith.constant 0 : i32
    %c0_i32_2 = arith.constant 0 : i32
    return %c0_i32, %c0_i32_0, %c0_i32_1 : i32, i32, i32
  }
  func.func @transform_15(%arg0: i32) -> (i32, i32) {
    %c0_i32 = arith.constant 0 : i32
    %c0_i32_0 = arith.constant 0 : i32
    %c0_i32_1 = arith.constant 0 : i32
    return %c0_i32, %c0_i32_0 : i32, i32
  }
  func.func @transform_16(%arg0: i32) -> (i32, i32) {
    %c0_i32 = arith.constant 0 : i32
    %c0_i32_0 = arith.constant 0 : i32
    %c0_i32_1 = arith.constant 0 : i32
    return %c0_i32, %c0_i32_0 : i32, i32
  }
  func.func @transform_17(%arg0: i32) -> (i32, i32, i32) {
    %c0_i32 = arith.constant 0 : i32
    %c0_i32_0 = arith.constant 0 : i32
    %c0_i32_1 = arith.constant 0 : i32
    return %arg0, %c0_i32, %c0_i32_0 : i32, i32, i32
  }
}

</mosaic_0001>

<llo_original>
// kernel: tpu_custom_call.1
$region0: #{tpu_custom_call.1}
  #allocation0 [shape = 'u32[]', space=smem, size = 0x4, offset = 0x4, fixed_abs, tag = 'smem constant byte address 0x4 - core index']
  #allocation1 [shape = 'u32[144,128]{1,0:T(1,128)}', space=vmem, size = 0x12000, scoped, tag = 'internal scratch']
  %s0 = inlined_call_operand.vmem [shape: f32[2,16,48], index: 0, kind: input, shape index: {}]
  %s1 = inlined_call_operand.vmem [shape: bf16[48,32], index: 1, kind: input, shape index: {}]
  %s2 = inlined_call_operand.vmem [shape: f32[1,32], index: 2, kind: input, shape index: {}]
  %s3 = inlined_call_operand.vmem [shape: f32[2,1,32], index: 3, kind: input, shape index: {}]
  %s4 = inlined_call_operand.vmem [shape: f32[2,1,32], index: 4, kind: input, shape index: {}]
  %s5 = inlined_call_operand.vmem [shape: bf16[2,32,96], index: 5, kind: input, shape index: {}]
  %s6 = inlined_call_operand.vmem [shape: f32[2,1,96], index: 6, kind: input, shape index: {}]
  %s7 = inlined_call_operand.vmem [shape: bf16[2,32,32], index: 7, kind: input, shape index: {}]
  %s8 = inlined_call_operand.vmem [shape: f32[2,1,32], index: 8, kind: input, shape index: {}]
  %s9 = inlined_call_operand.vmem [shape: f32[2,1,32], index: 9, kind: input, shape index: {}]
  %s10 = inlined_call_operand.vmem [shape: f32[2,1,32], index: 10, kind: input, shape index: {}]
  %s11 = inlined_call_operand.vmem [shape: bf16[2,32,128], index: 11, kind: input, shape index: {}]
  %s12 = inlined_call_operand.vmem [shape: f32[2,1,128], index: 12, kind: input, shape index: {}]
  %s13 = inlined_call_operand.vmem [shape: bf16[2,128,32], index: 13, kind: input, shape index: {}]
  %s14 = inlined_call_operand.vmem [shape: f32[2,1,32], index: 14, kind: input, shape index: {}]
  %s15 = inlined_call_operand.vmem [shape: f32[1,32], index: 15, kind: input, shape index: {}]
  %s16 = inlined_call_operand.vmem [shape: f32[1,32], index: 16, kind: input, shape index: {}]
  %s17 = inlined_call_operand.hbm [shape: f32[2,16,32], index: 17, kind: output, shape index: {}]
  %s18 = sld [smem:[#allocation0]]
  $region101: #{tpu_custom_call.1} parent=0
    _
  %s20 = ssub.s32 1, %s18
  %s21 = scalar_select 0, %s20, %s18
  $region1: #{tpu_custom_call.1} parent=0
    #allocation2 [shape = 'u8[16384]{0}', space=vmem, size = 0x4000, scoped, tag = 'output window, operand 0']
    #allocation3 [shape = 's32[2]{0}', space=sflag, size = 0x8, scoped, tag = 'scoped memory for tpu_custom_call.1']
    %22 = vsyncpa [#allocation3], 0
    %s23 = scalar_lea.sflag [#allocation3], 1
    %24 = vsyncpa %s23, 0
    loop: start=0, step=1, limit=4
    $region2: #{tpu_custom_call.1} parent=1 // loop_pre_header
      _
    $region3: #{tpu_custom_call.1} parent=1 // loop_header
      %s26 = sphi 0, %s30
      %p27 = scmp.ge.s32.totalorder %s26, 4
      %s36 = sphi 0, %s38
      %s39 = sphi 0, %s36
      %s40 = sphi 0, %s39
      %s56 = sphi 0, %s40
      %s60 = sphi 0, %s60
      %s62 = sphi 0, %s60
      %s63 = sphi 0, %s62
      %s77 = sphi 0, %s63
      %s81 = sphi 0, %s81
      %s83 = sphi 0, %s81
      %s84 = sphi 0, %s83
      %s98 = sphi 0, %s84
      %s102 = sphi 0, %s102
      %s104 = sphi 0, %s102
      %s105 = sphi 0, %s104
      %s119 = sphi 0, %s105
      %s123 = sphi 0, %s123
      %s125 = sphi 0, %s123
      %s126 = sphi 0, %s125
      %s140 = sphi 0, %s126
      %s144 = sphi 0, %s144
      %s146 = sphi 0, %s144
      %s147 = sphi 0, %s146
      %s161 = sphi 0, %s147
      %s165 = sphi 0, %s165
      %s167 = sphi 0, %s165
      %s168 = sphi 0, %s167
      %s182 = sphi 0, %s168
      %s186 = sphi 0, %s186
      %s188 = sphi 0, %s186
      %s189 = sphi 0, %s188
      %s203 = sphi 0, %s189
      %s207 = sphi 0, %s207
      %s209 = sphi 0, %s207
      %s210 = sphi 0, %s209
      %s224 = sphi 0, %s210
      %s228 = sphi 0, %s228
      %s230 = sphi 0, %s228
      %s231 = sphi 0, %s230
      %s245 = sphi 0, %s231
      %s249 = sphi 0, %s249
      %s251 = sphi 0, %s249
      %s252 = sphi 0, %s251
      %s266 = sphi 0, %s252
      %s270 = sphi 0, %s270
      %s272 = sphi 0, %s270
      %s273 = sphi 0, %s272
      %s287 = sphi 0, %s273
      %s291 = sphi 0, %s291
      %s293 = sphi 0, %s291
      %s294 = sphi 0, %s293
      %s308 = sphi 0, %s294
      %s312 = sphi 0, %s312
      %s314 = sphi 0, %s312
      %s315 = sphi 0, %s314
      %s329 = sphi 0, %s315
      %s333 = sphi 0, %s333
      %s335 = sphi 0, %s333
      %s336 = sphi 0, %s335
      %s350 = sphi 0, %s336
      %s354 = sphi 0, %s354
      %s356 = sphi 0, %s354
      %s357 = sphi 0, %s356
      %s371 = sphi 0, %s357
      %s375 = sphi 0, %s375
      %s377 = sphi 0, %s375
      %s378 = sphi 0, %s377
      %s392 = sphi 0, %s378
      %s398 = sphi 0, %s400
      %s401 = sphi 0, %s398
      %s402 = sphi 0, %s401
      %s418 = sphi 0, %s402
    $region4: #{tpu_custom_call.1} parent=1 // loop_header_branch
      %29 = sbr.rel (%p27) target = $region8
    $region5: #{tpu_custom_call.1} parent=1 // loop_body
      %s31 = ssub.s32 %s26, 1
      %s32 = ssub.s32 %s26, 2
      %s33 = sadd.s32 %s26, 1
      %s34 = ssub.s32 %s26, %s33
      %p35 = scmp.eq.s32.totalorder %s34, 0
      %s37 = sadd.s32 %s36, 1
      %s38 = scalar_select %p35, %s36, %s37
      %p41 = pneg %p35
      %p42 = scmp.eq.s32.totalorder %s26, 1
      %p43 = por %p41, %p42
      %p44 = scmp.ne.s32.totalorder %s36, %s39
      %p45 = scmp.eq.s32.totalorder %s26, 0
      %p46 = por %p44, %p45
      %p47 = scmp.ne.s32.totalorder %s36, %s39
      %p48 = scmp.eq.s32.totalorder %s31, 1
      %p49 = por %p47, %p48
      %p50 = scmp.ne.s32.totalorder %s39, %s40
      %p51 = scmp.eq.s32.totalorder %s31, 0
      %p52 = por %p50, %p51
      %p53 = scmp.ne.s32.totalorder %s39, %s40
      %p54 = scmp.eq.s32.totalorder %s32, 1
      %p55 = por %p53, %p54
      %p57 = scmp.ne.s32.totalorder %s40, %s56
      %p58 = scmp.eq.s32.totalorder %s32, 0
      %p59 = por %p57, %p58
      %s61 = sadd.s32 %s60, 1
      %p64 = scmp.eq.s32.totalorder %s26, 1
      %p65 = scmp.ne.s32.totalorder %s60, %s62
      %p66 = scmp.eq.s32.totalorder %s26, 0
      %p67 = por %p65, %p66
      %p68 = scmp.ne.s32.totalorder %s60, %s62
      %p69 = scmp.eq.s32.totalorder %s31, 1
      %p70 = por %p68, %p69
      %p71 = scmp.ne.s32.totalorder %s62, %s63
      %p72 = scmp.eq.s32.totalorder %s31, 0
      %p73 = por %p71, %p72
      %p74 = scmp.ne.s32.totalorder %s62, %s63
      %p75 = scmp.eq.s32.totalorder %s32, 1
      %p76 = por %p74, %p75
      %p78 = scmp.ne.s32.totalorder %s63, %s77
      %p79 = scmp.eq.s32.totalorder %s32, 0
      %p80 = por %p78, %p79
      %s82 = sadd.s32 %s81, 1
      %p85 = scmp.eq.s32.totalorder %s26, 1
      %p86 = scmp.ne.s32.totalorder %s81, %s83
      %p87 = scmp.eq.s32.totalorder %s26, 0
      %p88 = por %p86, %p87
      %p89 = scmp.ne.s32.totalorder %s81, %s83
      %p90 = scmp.eq.s32.totalorder %s31, 1
      %p91 = por %p89, %p90
      %p92 = scmp.ne.s32.totalorder %s83, %s84
      %p93 = scmp.eq.s32.totalorder %s31, 0
      %p94 = por %p92, %p93
      %p95 = scmp.ne.s32.totalorder %s83, %s84
      %p96 = scmp.eq.s32.totalorder %s32, 1
      %p97 = por %p95, %p96
      %p99 = scmp.ne.s32.totalorder %s84, %s98
      %p100 = scmp.eq.s32.totalorder %s32, 0
      %p101 = por %p99, %p100
      %s103 = sadd.s32 %s102, 1
      %p106 = scmp.eq.s32.totalorder %s26, 1
      %p107 = scmp.ne.s32.totalorder %s102, %s104
      %p108 = scmp.eq.s32.totalorder %s26, 0
      %p109 = por %p107, %p108
      %p110 = scmp.ne.s32.totalorder %s102, %s104
      %p111 = scmp.eq.s32.totalorder %s31, 1
      %p112 = por %p110, %p111
      %p113 = scmp.ne.s32.totalorder %s104, %s105
      %p114 = scmp.eq.s32.totalorder %s31, 0
      %p115 = por %p113, %p114
      %p116 = scmp.ne.s32.totalorder %s104, %s105
      %p117 = scmp.eq.s32.totalorder %s32, 1
      %p118 = por %p116, %p117
      %p120 = scmp.ne.s32.totalorder %s105, %s119
      %p121 = scmp.eq.s32.totalorder %s32, 0
      %p122 = por %p120, %p121
      %s124 = sadd.s32 %s123, 1
      %p127 = scmp.eq.s32.totalorder %s26, 1
      %p128 = scmp.ne.s32.totalorder %s123, %s125
      %p129 = scmp.eq.s32.totalorder %s26, 0
      %p130 = por %p128, %p129
      %p131 = scmp.ne.s32.totalorder %s123, %s125
      %p132 = scmp.eq.s32.totalorder %s31, 1
      %p133 = por %p131, %p132
      %p134 = scmp.ne.s32.totalorder %s125, %s126
      %p135 = scmp.eq.s32.totalorder %s31, 0
      %p136 = por %p134, %p135
      %p137 = scmp.ne.s32.totalorder %s125, %s126
      %p138 = scmp.eq.s32.totalorder %s32, 1
      %p139 = por %p137, %p138
      %p141 = scmp.ne.s32.totalorder %s126, %s140
      %p142 = scmp.eq.s32.totalorder %s32, 0
      %p143 = por %p141, %p142
      %s145 = sadd.s32 %s144, 1
      %p148 = scmp.eq.s32.totalorder %s26, 1
      %p149 = scmp.ne.s32.totalorder %s144, %s146
      %p150 = scmp.eq.s32.totalorder %s26, 0
      %p151 = por %p149, %p150
      %p152 = scmp.ne.s32.totalorder %s144, %s146
      %p153 = scmp.eq.s32.totalorder %s31, 1
      %p154 = por %p152, %p153
      %p155 = scmp.ne.s32.totalorder %s146, %s147
      %p156 = scmp.eq.s32.totalorder %s31, 0
      %p157 = por %p155, %p156
      %p158 = scmp.ne.s32.totalorder %s146, %s147
      %p159 = scmp.eq.s32.totalorder %s32, 1
      %p160 = por %p158, %p159
      %p162 = scmp.ne.s32.totalorder %s147, %s161
      %p163 = scmp.eq.s32.totalorder %s32, 0
      %p164 = por %p162, %p163
      %s166 = sadd.s32 %s165, 1
      %p169 = scmp.eq.s32.totalorder %s26, 1
      %p170 = scmp.ne.s32.totalorder %s165, %s167
      %p171 = scmp.eq.s32.totalorder %s26, 0
      %p172 = por %p170, %p171
      %p173 = scmp.ne.s32.totalorder %s165, %s167
      %p174 = scmp.eq.s32.totalorder %s31, 1
      %p175 = por %p173, %p174
      %p176 = scmp.ne.s32.totalorder %s167, %s168
      %p177 = scmp.eq.s32.totalorder %s31, 0
      %p178 = por %p176, %p177
      %p179 = scmp.ne.s32.totalorder %s167, %s168
      %p180 = scmp.eq.s32.totalorder %s32, 1
      %p181 = por %p179, %p180
      %p183 = scmp.ne.s32.totalorder %s168, %s182
      %p184 = scmp.eq.s32.totalorder %s32, 0
      %p185 = por %p183, %p184
      %s187 = sadd.s32 %s186, 1
      %p190 = scmp.eq.s32.totalorder %s26, 1
      %p191 = scmp.ne.s32.totalorder %s186, %s188
      %p192 = scmp.eq.s32.totalorder %s26, 0
      %p193 = por %p191, %p192
      %p194 = scmp.ne.s32.totalorder %s186, %s188
      %p195 = scmp.eq.s32.totalorder %s31, 1
      %p196 = por %p194, %p195
      %p197 = scmp.ne.s32.totalorder %s188, %s189
      %p198 = scmp.eq.s32.totalorder %s31, 0
      %p199 = por %p197, %p198
      %p200 = scmp.ne.s32.totalorder %s188, %s189
      %p201 = scmp.eq.s32.totalorder %s32, 1
      %p202 = por %p200, %p201
      %p204 = scmp.ne.s32.totalorder %s189, %s203
      %p205 = scmp.eq.s32.totalorder %s32, 0
      %p206 = por %p204, %p205
      %s208 = sadd.s32 %s207, 1
      %p211 = scmp.eq.s32.totalorder %s26, 1
      %p212 = scmp.ne.s32.totalorder %s207, %s209
      %p213 = scmp.eq.s32.totalorder %s26, 0
      %p214 = por %p212, %p213
      %p215 = scmp.ne.s32.totalorder %s207, %s209
      %p216 = scmp.eq.s32.totalorder %s31, 1
      %p217 = por %p215, %p216
      %p218 = scmp.ne.s32.totalorder %s209, %s210
      %p219 = scmp.eq.s32.totalorder %s31, 0
      %p220 = por %p218, %p219
      %p221 = scmp.ne.s32.totalorder %s209, %s210
      %p222 = scmp.eq.s32.totalorder %s32, 1
      %p223 = por %p221, %p222
      %p225 = scmp.ne.s32.totalorder %s210, %s224
      %p226 = scmp.eq.s32.totalorder %s32, 0
      %p227 = por %p225, %p226
      %s229 = sadd.s32 %s228, 1
      %p232 = scmp.eq.s32.totalorder %s26, 1
      %p233 = scmp.ne.s32.totalorder %s228, %s230
      %p234 = scmp.eq.s32.totalorder %s26, 0
      %p235 = por %p233, %p234
      %p236 = scmp.ne.s32.totalorder %s228, %s230
      %p237 = scmp.eq.s32.totalorder %s31, 1
      %p238 = por %p236, %p237
      %p239 = scmp.ne.s32.totalorder %s230, %s231
      %p240 = scmp.eq.s32.totalorder %s31, 0
      %p241 = por %p239, %p240
      %p242 = scmp.ne.s32.totalorder %s230, %s231
      %p243 = scmp.eq.s32.totalorder %s32, 1
      %p244 = por %p242, %p243
      %p246 = scmp.ne.s32.totalorder %s231, %s245
      %p247 = scmp.eq.s32.totalorder %s32, 0
      %p248 = por %p246, %p247
      %s250 = sadd.s32 %s249, 1
      %p253 = scmp.eq.s32.totalorder %s26, 1
      %p254 = scmp.ne.s32.totalorder %s249, %s251
      %p255 = scmp.eq.s32.totalorder %s26, 0
      %p256 = por %p254, %p255
      %p257 = scmp.ne.s32.totalorder %s249, %s251
      %p258 = scmp.eq.s32.totalorder %s31, 1
      %p259 = por %p257, %p258
      %p260 = scmp.ne.s32.totalorder %s251, %s252
      %p261 = scmp.eq.s32.totalorder %s31, 0
      %p262 = por %p260, %p261
      %p263 = scmp.ne.s32.totalorder %s251, %s252
      %p264 = scmp.eq.s32.totalorder %s32, 1
      %p265 = por %p263, %p264
      %p267 = scmp.ne.s32.totalorder %s252, %s266
      %p268 = scmp.eq.s32.totalorder %s32, 0
      %p269 = por %p267, %p268
      %s271 = sadd.s32 %s270, 1
      %p274 = scmp.eq.s32.totalorder %s26, 1
      %p275 = scmp.ne.s32.totalorder %s270, %s272
      %p276 = scmp.eq.s32.totalorder %s26, 0
      %p277 = por %p275, %p276
      %p278 = scmp.ne.s32.totalorder %s270, %s272
      %p279 = scmp.eq.s32.totalorder %s31, 1
      %p280 = por %p278, %p279
      %p281 = scmp.ne.s32.totalorder %s272, %s273
      %p282 = scmp.eq.s32.totalorder %s31, 0
      %p283 = por %p281, %p282
      %p284 = scmp.ne.s32.totalorder %s272, %s273
      %p285 = scmp.eq.s32.totalorder %s32, 1
      %p286 = por %p284, %p285
      %p288 = scmp.ne.s32.totalorder %s273, %s287
      %p289 = scmp.eq.s32.totalorder %s32, 0
      %p290 = por %p288, %p289
      %s292 = sadd.s32 %s291, 1
      %p295 = scmp.eq.s32.totalorder %s26, 1
      %p296 = scmp.ne.s32.totalorder %s291, %s293
      %p297 = scmp.eq.s32.totalorder %s26, 0
      %p298 = por %p296, %p297
      %p299 = scmp.ne.s32.totalorder %s291, %s293
      %p300 = scmp.eq.s32.totalorder %s31, 1
      %p301 = por %p299, %p300
      %p302 = scmp.ne.s32.totalorder %s293, %s294
      %p303 = scmp.eq.s32.totalorder %s31, 0
      %p304 = por %p302, %p303
      %p305 = scmp.ne.s32.totalorder %s293, %s294
      %p306 = scmp.eq.s32.totalorder %s32, 1
      %p307 = por %p305, %p306
      %p309 = scmp.ne.s32.totalorder %s294, %s308
      %p310 = scmp.eq.s32.totalorder %s32, 0
      %p311 = por %p309, %p310
      %s313 = sadd.s32 %s312, 1
      %p316 = scmp.eq.s32.totalorder %s26, 1
      %p317 = scmp.ne.s32.totalorder %s312, %s314
      %p318 = scmp.eq.s32.totalorder %s26, 0
      %p319 = por %p317, %p318
      %p320 = scmp.ne.s32.totalorder %s312, %s314
      %p321 = scmp.eq.s32.totalorder %s31, 1
      %p322 = por %p320, %p321
      %p323 = scmp.ne.s32.totalorder %s314, %s315
      %p324 = scmp.eq.s32.totalorder %s31, 0
      %p325 = por %p323, %p324
      %p326 = scmp.ne.s32.totalorder %s314, %s315
      %p327 = scmp.eq.s32.totalorder %s32, 1
      %p328 = por %p326, %p327
      %p330 = scmp.ne.s32.totalorder %s315, %s329
      %p331 = scmp.eq.s32.totalorder %s32, 0
      %p332 = por %p330, %p331
      %s334 = sadd.s32 %s333, 1
      %p337 = scmp.eq.s32.totalorder %s26, 1
      %p338 = scmp.ne.s32.totalorder %s333, %s335
      %p339 = scmp.eq.s32.totalorder %s26, 0
      %p340 = por %p338, %p339
      %p341 = scmp.ne.s32.totalorder %s333, %s335
      %p342 = scmp.eq.s32.totalorder %s31, 1
      %p343 = por %p341, %p342
      %p344 = scmp.ne.s32.totalorder %s335, %s336
      %p345 = scmp.eq.s32.totalorder %s31, 0
      %p346 = por %p344, %p345
      %p347 = scmp.ne.s32.totalorder %s335, %s336
      %p348 = scmp.eq.s32.totalorder %s32, 1
      %p349 = por %p347, %p348
      %p351 = scmp.ne.s32.totalorder %s336, %s350
      %p352 = scmp.eq.s32.totalorder %s32, 0
      %p353 = por %p351, %p352
      %s355 = sadd.s32 %s354, 1
      %p358 = scmp.eq.s32.totalorder %s26, 1
      %p359 = scmp.ne.s32.totalorder %s354, %s356
      %p360 = scmp.eq.s32.totalorder %s26, 0
      %p361 = por %p359, %p360
      %p362 = scmp.ne.s32.totalorder %s354, %s356
      %p363 = scmp.eq.s32.totalorder %s31, 1
      %p364 = por %p362, %p363
      %p365 = scmp.ne.s32.totalorder %s356, %s357
      %p366 = scmp.eq.s32.totalorder %s31, 0
      %p367 = por %p365, %p366
      %p368 = scmp.ne.s32.totalorder %s356, %s357
      %p369 = scmp.eq.s32.totalorder %s32, 1
      %p370 = por %p368, %p369
      %p372 = scmp.ne.s32.totalorder %s357, %s371
      %p373 = scmp.eq.s32.totalorder %s32, 0
      %p374 = por %p372, %p373
      %s376 = sadd.s32 %s375, 1
      %p379 = scmp.eq.s32.totalorder %s26, 1
      %p380 = scmp.ne.s32.totalorder %s375, %s377
      %p381 = scmp.eq.s32.totalorder %s26, 0
      %p382 = por %p380, %p381
      %p383 = scmp.ne.s32.totalorder %s375, %s377
      %p384 = scmp.eq.s32.totalorder %s31, 1
      %p385 = por %p383, %p384
      %p386 = scmp.ne.s32.totalorder %s377, %s378
      %p387 = scmp.eq.s32.totalorder %s31, 0
      %p388 = por %p386, %p387
      %p389 = scmp.ne.s32.totalorder %s377, %s378
      %p390 = scmp.eq.s32.totalorder %s32, 1
      %p391 = por %p389, %p390
      %p393 = scmp.ne.s32.totalorder %s378, %s392
      %p394 = scmp.eq.s32.totalorder %s32, 0
      %p395 = por %p393, %p394
      %s396 = ssub.s32 %s26, %s33
      %p397 = scmp.eq.s32.totalorder %s396, 0
      %s399 = sadd.s32 %s398, 1
      %s400 = scalar_select %p397, %s398, %s399
      %p403 = pneg %p397
      %p404 = scmp.eq.s32.totalorder %s26, 1
      %p405 = por %p403, %p404
      %p406 = scmp.ne.s32.totalorder %s398, %s401
      %p407 = scmp.eq.s32.totalorder %s26, 0
      %p408 = por %p406, %p407
      %p409 = scmp.ne.s32.totalorder %s398, %s401
      %p410 = scmp.eq.s32.totalorder %s31, 1
      %p411 = por %p409, %p410
      %p412 = scmp.ne.s32.totalorder %s401, %s402
      %p413 = scmp.eq.s32.totalorder %s31, 0
      %p414 = por %p412, %p413
      %p415 = scmp.ne.s32.totalorder %s401, %s402
      %p416 = scmp.eq.s32.totalorder %s32, 1
      %p417 = por %p415, %p416
      %p419 = scmp.ne.s32.totalorder %s402, %s418
      %p420 = scmp.eq.s32.totalorder %s32, 0
      %p421 = por %p419, %p420
      %p422 = scmp.le.s32.totalorder 1, %s26
      %p423 = scmp.lt.s32.totalorder %s26, 3
      %p424 = pnand %p422, %p423
      %p425 = pneg %p424
      // Predicated region
      $region9: #{tpu_custom_call.1} parent=5 // pred_check
        _
      $region10: #{tpu_custom_call.1} parent=5 // pred_check_branch
        %427 = sbr.rel (%p424) target = $region12
      $region11: #{tpu_custom_call.1} parent=5 // pred_region
        %s428 = ssub.s32 %s26, 1
        // Predicated region
        $region13: #{tpu_custom_call.1} parent=11 // pred_check
          %p429 = pneg %p73
        $region14: #{tpu_custom_call.1} parent=11 // pred_check_branch
          %431 = sbr.rel (%p429) target = $region16
        $region15: #{tpu_custom_call.1} parent=11 // pred_region
          _
        $region16: #{tpu_custom_call.1} parent=11 // pred_fallthru
          _
        // Predicated region
        $region17: #{tpu_custom_call.1} parent=11 // pred_check
          %p432 = pneg %p94
        $region18: #{tpu_custom_call.1} parent=11 // pred_check_branch
          %434 = sbr.rel (%p432) target = $region20
        $region19: #{tpu_custom_call.1} parent=11 // pred_region
          _
        $region20: #{tpu_custom_call.1} parent=11 // pred_fallthru
          _
        // Predicated region
        $region21: #{tpu_custom_call.1} parent=11 // pred_check
          %p435 = pneg %p115
        $region22: #{tpu_custom_call.1} parent=11 // pred_check_branch
          %437 = sbr.rel (%p435) target = $region24
        $region23: #{tpu_custom_call.1} parent=11 // pred_region
          _
        $region24: #{tpu_custom_call.1} parent=11 // pred_fallthru
          _
        // Predicated region
        $region25: #{tpu_custom_call.1} parent=11 // pred_check
          %p438 = pneg %p136
        $region26: #{tpu_custom_call.1} parent=11 // pred_check_branch
          %440 = sbr.rel (%p438) target = $region28
        $region27: #{tpu_custom_call.1} parent=11 // pred_region
          _
        $region28: #{tpu_custom_call.1} parent=11 // pred_fallthru
          _
        // Predicated region
        $region29: #{tpu_custom_call.1} parent=11 // pred_check
          %p441 = pneg %p157
        $region30: #{tpu_custom_call.1} parent=11 // pred_check_branch
          %443 = sbr.rel (%p441) target = $region32
        $region31: #{tpu_custom_call.1} parent=11 // pred_region
          _
        $region32: #{tpu_custom_call.1} parent=11 // pred_fallthru
          _
        // Predicated region
        $region33: #{tpu_custom_call.1} parent=11 // pred_check
          %p444 = pneg %p178
        $region34: #{tpu_custom_call.1} parent=11 // pred_check_branch
          %446 = sbr.rel (%p444) target = $region36
        $region35: #{tpu_custom_call.1} parent=11 // pred_region
          _
        $region36: #{tpu_custom_call.1} parent=11 // pred_fallthru
          _
        // Predicated region
        $region37: #{tpu_custom_call.1} parent=11 // pred_check
          %p447 = pneg %p199
        $region38: #{tpu_custom_call.1} parent=11 // pred_check_branch
          %449 = sbr.rel (%p447) target = $region40
        $region39: #{tpu_custom_call.1} parent=11 // pred_region
          _
        $region40: #{tpu_custom_call.1} parent=11 // pred_fallthru
          _
        // Predicated region
        $region41: #{tpu_custom_call.1} parent=11 // pred_check
          %p450 = pneg %p220
        $region42: #{tpu_custom_call.1} parent=11 // pred_check_branch
          %452 = sbr.rel (%p450) target = $region44
        $region43: #{tpu_custom_call.1} parent=11 // pred_region
          _
        $region44: #{tpu_custom_call.1} parent=11 // pred_fallthru
          _
        // Predicated region
        $region45: #{tpu_custom_call.1} parent=11 // pred_check
          %p453 = pneg %p241
        $region46: #{tpu_custom_call.1} parent=11 // pred_check_branch
          %455 = sbr.rel (%p453) target = $region48
        $region47: #{tpu_custom_call.1} parent=11 // pred_region
          _
        $region48: #{tpu_custom_call.1} parent=11 // pred_fallthru
          _
        // Predicated region
        $region49: #{tpu_custom_call.1} parent=11 // pred_check
          %p456 = pneg %p262
        $region50: #{tpu_custom_call.1} parent=11 // pred_check_branch
          %458 = sbr.rel (%p456) target = $region52
        $region51: #{tpu_custom_call.1} parent=11 // pred_region
          _
        $region52: #{tpu_custom_call.1} parent=11 // pred_fallthru
          _
        // Predicated region
        $region53: #{tpu_custom_call.1} parent=11 // pred_check
          %p459 = pneg %p283
        $region54: #{tpu_custom_call.1} parent=11 // pred_check_branch
          %461 = sbr.rel (%p459) target = $region56
        $region55: #{tpu_custom_call.1} parent=11 // pred_region
          _
        $region56: #{tpu_custom_call.1} parent=11 // pred_fallthru
          _
        // Predicated region
        $region57: #{tpu_custom_call.1} parent=11 // pred_check
          %p462 = pneg %p304
        $region58: #{tpu_custom_call.1} parent=11 // pred_check_branch
          %464 = sbr.rel (%p462) target = $region60
        $region59: #{tpu_custom_call.1} parent=11 // pred_region
          _
        $region60: #{tpu_custom_call.1} parent=11 // pred_fallthru
          _
        // Predicated region
        $region61: #{tpu_custom_call.1} parent=11 // pred_check
          %p465 = pneg %p325
        $region62: #{tpu_custom_call.1} parent=11 // pred_check_branch
          %467 = sbr.rel (%p465) target = $region64
        $region63: #{tpu_custom_call.1} parent=11 // pred_region
          _
        $region64: #{tpu_custom_call.1} parent=11 // pred_fallthru
          _
        // Predicated region
        $region65: #{tpu_custom_call.1} parent=11 // pred_check
          %p468 = pneg %p346
        $region66: #{tpu_custom_call.1} parent=11 // pred_check_branch
          %470 = sbr.rel (%p468) target = $region68
        $region67: #{tpu_custom_call.1} parent=11 // pred_region
          _
        $region68: #{tpu_custom_call.1} parent=11 // pred_fallthru
          _
        // Predicated region
        $region69: #{tpu_custom_call.1} parent=11 // pred_check
          %p471 = pneg %p367
        $region70: #{tpu_custom_call.1} parent=11 // pred_check_branch
          %473 = sbr.rel (%p471) target = $region72
        $region71: #{tpu_custom_call.1} parent=11 // pred_region
          _
        $region72: #{tpu_custom_call.1} parent=11 // pred_fallthru
          _
        // Predicated region
        $region73: #{tpu_custom_call.1} parent=11 // pred_check
          %p474 = pneg %p388
        $region74: #{tpu_custom_call.1} parent=11 // pred_check_branch
          %476 = sbr.rel (%p474) target = $region76
        $region75: #{tpu_custom_call.1} parent=11 // pred_region
          _
        $region76: #{tpu_custom_call.1} parent=11 // pred_fallthru
          _
      $region12: #{tpu_custom_call.1} parent=5 // pred_fallthru
        _
      %p477 = scmp.lt.s32.totalorder %s26, 2
      // Predicated region
      $region77: #{tpu_custom_call.1} parent=5 // pred_check
        %p478 = pneg %p477
      $region78: #{tpu_custom_call.1} parent=5 // pred_check_branch
        %480 = sbr.rel (%p478) target = $region80
      $region79: #{tpu_custom_call.1} parent=5 // pred_region
        // Predicated region
        $region81: #{tpu_custom_call.1} parent=79 // pred_check
          %p481 = pneg %p46
        $region82: #{tpu_custom_call.1} parent=79 // pred_check_branch
          %483 = sbr.rel (%p481) target = $region84
        $region83: #{tpu_custom_call.1} parent=79 // pred_region
          %p484 = scmp.lt.s32.totalorder %s26, 1
          %s485 = scalar_select %p484, %s26, 1
          %s486 = smul.addr %s485, 2
          %s487 = smul.addr %s486, 8
          %s488 = scalar_lea.vmem %s0, %s487
        $region84: #{tpu_custom_call.1} parent=79 // pred_fallthru
          _
      $region80: #{tpu_custom_call.1} parent=5 // pred_fallthru
        _
      %p489 = scmp.le.s32.totalorder 1, %s26
      %p490 = scmp.lt.s32.totalorder %s26, 3
      %p491 = pnand %p489, %p490
      %p492 = pneg %p491
      // Predicated region
      $region85: #{tpu_custom_call.1} parent=5 // pred_check
        _
      $region86: #{tpu_custom_call.1} parent=5 // pred_check_branch
        %494 = sbr.rel (%p491) target = $region88
      $region87: #{tpu_custom_call.1} parent=5 // pred_region
        %s495 = ssub.s32 %s26, 1
        %p496 = scmp.lt.s32.totalorder %s31, 1
        %s497 = scalar_select %p496, %s31, 1
        %s498 = smul.addr %s497, 2
        %s499 = smul.addr %s498, 8
        %s500 = scalar_lea.vmem %s0, %s499
        %p501 = pneg %p52
        %p502 = pneg %p49
        %p503 = pneg %p73
        %p504 = pneg %p70
        %p505 = pneg %p94
        %p506 = pneg %p91
        %p507 = pneg %p115
        %p508 = pneg %p112
        %p509 = pneg %p136
        %p510 = pneg %p133
        %p511 = pneg %p157
        %p512 = pneg %p154
        %p513 = pneg %p178
        %p514 = pneg %p175
        %p515 = pneg %p199
        %p516 = pneg %p196
        %p517 = pneg %p220
        %p518 = pneg %p217
        %p519 = pneg %p241
        %p520 = pneg %p238
        %p521 = pneg %p262
        %p522 = pneg %p259
        %p523 = pneg %p283
        %p524 = pneg %p280
        %p525 = pneg %p304
        %p526 = pneg %p301
        %p527 = pneg %p325
        %p528 = pneg %p322
        %p529 = pneg %p346
        %p530 = pneg %p343
        %p531 = pneg %p367
        %p532 = pneg %p364
        %p533 = pneg %p388
        %p534 = pneg %p385
        %p535 = pneg %p414
        %p536 = pneg %p411
        %s537 = sand.u32 %s401, 1
        %s538 = scalar_lea.sflag [#allocation3], %s537
        %s539 = sand.u32 %s401, 1
        %s540 = smul.addr %s539, 16
        %s541 = scalar_lea.vmem [#allocation2], %s540
        %p542 = scmp.lt.s32.totalorder %s31, 1
        %s543 = scalar_select %p542, %s31, 1
        %s544 = smul.addr %s543, 2
        %s545 = smul.addr %s544, 8
        %s546 = scalar_lea.vmem %s0, %s545
        %v548 = vld [vmem:[%s546] sm:$0xff]
        %v549 = vld [vmem:[%s546 + $0x8] sm:$0xff]
        %v550 = vpack.c.bf16 %v549, %v548
        %v551 = vld [vmem:[%s1] sm:$0xf]
        %v552 = vld [vmem:[%s1 + $0x4] sm:$0xf]
        %v553 = vld [vmem:[%s1 + $0x8] sm:$0xf]
        %v554 = vld [vmem:[%s1 + $0xc] sm:$0xf]
        %v555 = vld [vmem:[%s1 + $0x10] sm:$0xf]
        %v556 = vld [vmem:[%s1 + $0x14] sm:$0xf]
        %v557 = vld [vmem:[%s2] sm:$0x1]
        %v559 = vlaneseq
        %v560 = vshrl.u32 %v559, 7
        %v561 = vsub.s32 0, %v560
        %v562 = vrot.slane %v557, %v561
        %v570 = vunpack.c.l.b16 %v551
        %v571 = vunpack.c.l.b16 %v552
        %v572 = vunpack.c.l.b16 %v553
        %v573 = vunpack.c.l.b16 %v554
        %v574 = vunpack.c.l.b16 %v555
        %v575 = vunpack.c.l.b16 %v556
        %v576 = vpack.c.b16 %v571, %v570
        %v577 = vpack.c.b16 %v573, %v572
        %v578 = vpack.c.b16 %v575, %v574
        %vm582 = vcmask 392192
        %v584 = vsel %vm582, %v550, 0
        %586 = vmatprep.subr.bf16.mxu0 0
        %587 = vmatpush1.bf16.msra.mxu0 %v576
        %588 = vmatprep.subr.bf16.mxu0 0
        %589 = vmatpush1.bf16.msra.mxu0 %v577
        %590 = vmatprep.subr.bf16.mxu0 0
        %591 = vmatpush1.bf16.msra.mxu0 %v578
        %592 = vmatprep.subr.bf16.mxu0 0
        %593 = vmatpush1.bf16.msra.mxu0 0
        %594 = vmatprep.subr.bf16.mxu0 0
        %595 = vmatpush1.bf16.msra.mxu0 0
        %596 = vmatprep.subr.bf16.mxu0 0
        %597 = vmatpush1.bf16.msra.mxu0 0
        %598 = vmatprep.subr.bf16.mxu0 0
        %599 = vmatpush1.bf16.msra.mxu0 0
        %600 = vmatprep.subr.bf16.mxu0 0
        %601 = vmatpush1.bf16.msra.mxu0 0
        %602 = vmatprep.subr.bf16.mxu0 0
        %603 = vmatpush1.bf16.msra.mxu0 0
        %604 = vmatprep.subr.bf16.mxu0 0
        %605 = vmatpush1.bf16.msra.mxu0 0
        %606 = vmatprep.subr.bf16.mxu0 0
        %607 = vmatpush1.bf16.msra.mxu0 0
        %608 = vmatprep.subr.bf16.mxu0 0
        %609 = vmatpush1.bf16.msra.mxu0 0
        %610 = vmatprep.subr.bf16.mxu0 0
        %611 = vmatpush1.bf16.msra.mxu0 0
        %612 = vmatprep.subr.bf16.mxu0 0
        %613 = vmatpush1.bf16.msra.mxu0 0
        %614 = vmatprep.subr.bf16.mxu0 0
        %615 = vmatpush1.bf16.msra.mxu0 0
        %616 = vmatprep.subr.bf16.mxu0 0
        %617 = vmatpush1.bf16.msra.mxu0 0
        %618 = vmatprep.mubr.bf16.mxu0 0
        %619 = vmatmul.mubr.bf16.gmra.mrb[0].mxu0 %v584
        %v620 = vpop.f32.mrb[0].mxu0
        %v621 = vadd.f32 %v562, %v620
        %v622 = vpop.f32.mrb[0].mxu0
        %v623 = vpop.f32.mrb[0].mxu0
        %v624 = vadd.f32 %v562, %v623
        %v625 = vpop.f32.mrb[0].mxu0
        %626 = vdwg.mxu0
        %v627 = vld [vmem:[%s3] sm:$0x1]
        %v628 = vld [vmem:[%s4] sm:$0x1]
        %vm629 = vcmask 261120
        %v630 = vsel %vm629, %v621, 0.0
        %631 = vadd.xlane.f32.xlu0 %v630
        %v632 = vpop.xlane.xlu0 %631
        %v633 = vsel %vm629, %v624, 0.0
        %634 = vadd.xlane.f32.xlu0 %v633
        %v635 = vpop.xlane.xlu0 %634
        %v636 = vrcp.pop 32.0
        %v637 = vmul.f32 %v632, %v636
        %v638 = vmul.f32 %v635, %v636
        %v639 = vsub.f32 %v621, %v637
        %v640 = vsub.f32 %v624, %v638
        %v641 = vmul.f32 %v639, %v639
        %v642 = vmul.f32 %v640, %v640
        %v643 = vsel %vm629, %v641, 0.0
        %644 = vadd.xlane.f32.xlu0 %v643
        %v645 = vpop.xlane.xlu0 %644
        %v646 = vsel %vm629, %v642, 0.0
        %647 = vadd.xlane.f32.xlu0 %v646
        %v648 = vpop.xlane.xlu0 %647
        %v649 = vmul.f32 %v645, %v636
        %v650 = vmul.f32 %v648, %v636
        %v651 = vadd.f32 %v649, 1e-06
        %v652 = vadd.f32 %v650, 1e-06
        %v653 = vrsqrt.pop %v651
        %v654 = vrsqrt.pop %v652
        %v655 = vmul.f32 %v639, %v653
        %v656 = vmul.f32 %v640, %v654
        %v658 = vlaneseq
        %v659 = vshrl.u32 %v658, 7
        %v660 = vsub.s32 0, %v659
        %v661 = vrot.slane %v627, %v660
        %v663 = vmul.f32 %v655, %v661
        %v664 = vmul.f32 %v656, %v661
        %v666 = vlaneseq
        %v667 = vshrl.u32 %v666, 7
        %v668 = vsub.s32 0, %v667
        %v669 = vrot.slane %v628, %v668
        %v671 = vadd.f32 %v663, %v669
        %v672 = vadd.f32 %v664, %v669
        %v673 = vpack.c.bf16 %v672, %v671
        %v674 = vld [vmem:[%s5] sm:$0xf]
        %v675 = vld [vmem:[%s5 + $0x4] sm:$0xf]
        %v676 = vld [vmem:[%s5 + $0x8] sm:$0xf]
        %v677 = vld [vmem:[%s5 + $0xc] sm:$0xf]
        %v678 = vld [vmem:[%s6] sm:$0x1]
        %v680 = vlaneseq
        %v681 = vshrl.u32 %v680, 7
        %v682 = vsub.s32 0, %v681
        %v683 = vrot.slane %v678, %v682
        %v689 = vunpack.c.l.b16 %v674
        %v690 = vunpack.c.l.b16 %v675
        %v691 = vunpack.c.l.b16 %v676
        %v692 = vunpack.c.l.b16 %v677
        %v693 = vpack.c.b16 %v690, %v689
        %v694 = vpack.c.b16 %v692, %v691
        %v698 = vsel %vm629, %v673, 0
        %700 = vmatprep.subr.bf16.mxu0 0
        %701 = vmatpush1.bf16.msra.mxu0 %v693
        %702 = vmatprep.subr.bf16.mxu0 0
        %703 = vmatpush1.bf16.msra.mxu0 %v694
        %704 = vmatprep.subr.bf16.mxu0 0
        %705 = vmatpush1.bf16.msra.mxu0 0
        %706 = vmatprep.subr.bf16.mxu0 0
        %707 = vmatpush1.bf16.msra.mxu0 0
        %708 = vmatprep.subr.bf16.mxu0 0
        %709 = vmatpush1.bf16.msra.mxu0 0
        %710 = vmatprep.subr.bf16.mxu0 0
        %711 = vmatpush1.bf16.msra.mxu0 0
        %712 = vmatprep.subr.bf16.mxu0 0
        %713 = vmatpush1.bf16.msra.mxu0 0
        %714 = vmatprep.subr.bf16.mxu0 0
        %715 = vmatpush1.bf16.msra.mxu0 0
        %716 = vmatprep.subr.bf16.mxu0 0
        %717 = vmatpush1.bf16.msra.mxu0 0
        %718 = vmatprep.subr.bf16.mxu0 0
        %719 = vmatpush1.bf16.msra.mxu0 0
        %720 = vmatprep.subr.bf16.mxu0 0
        %721 = vmatpush1.bf16.msra.mxu0 0
        %722 = vmatprep.subr.bf16.mxu0 0
        %723 = vmatpush1.bf16.msra.mxu0 0
        %724 = vmatprep.subr.bf16.mxu0 0
        %725 = vmatpush1.bf16.msra.mxu0 0
        %726 = vmatprep.subr.bf16.mxu0 0
        %727 = vmatpush1.bf16.msra.mxu0 0
        %728 = vmatprep.subr.bf16.mxu0 0
        %729 = vmatpush1.bf16.msra.mxu0 0
        %730 = vmatprep.subr.bf16.mxu0 0
        %731 = vmatpush1.bf16.msra.mxu0 0
        %732 = vmatprep.mubr.bf16.mxu0 0
        %733 = vmatmul.mubr.bf16.gmra.mrb[0].mxu0 %v698
        %v734 = vpop.f32.mrb[0].mxu0
        %v735 = vadd.f32 %v683, %v734
        %v736 = vpop.f32.mrb[0].mxu0
        %v737 = vpop.f32.mrb[0].mxu0
        %v738 = vadd.f32 %v683, %v737
        %v739 = vpop.f32.mrb[0].mxu0
        %740 = vdwg.mxu0
        %743 = vrot.lane.b32.xlu0 %v735, 96
        %v744 = vpop.permute.xlu0 %743
        %745 = vrot.lane.b32.xlu0 %v738, 96
        %v746 = vpop.permute.xlu0 %745
        %vm747 = vcmask 64512
        %v748 = vsel %vm747, %v735, 0
        %v750 = vsel %vm747, %v738, 0
        %v752 = vsel %vm747, %v744, 0
        %v754 = vsel %vm747, %v746, 0
        %756 = vmatprep.subr.mxu0 0.0
        %757 = vmatpush1.xpose.msra.mxu0 %v752
        %758 = vmatprep.subr.mxu0 0.0
        %759 = vmatpush1.xpose.msra.mxu0 %v754
        %760 = vmatprep.subr.mxu0 0.0
        %761 = vmatpush1.xpose.msra.mxu0 0.0
        %762 = vmatprep.subr.mxu0 0.0
        %763 = vmatpush1.xpose.msra.mxu0 0.0
        %764 = vmatprep.subr.mxu0 0.0
        %765 = vmatpush1.xpose.msra.mxu0 0.0
        %766 = vmatprep.subr.mxu0 0.0
        %767 = vmatpush1.xpose.msra.mxu0 0.0
        %768 = vmatprep.subr.mxu0 0.0
        %769 = vmatpush1.xpose.msra.mxu0 0.0
        %770 = vmatprep.subr.mxu0 0.0
        %771 = vmatpush1.xpose.msra.mxu0 0.0
        %772 = vmatprep.subr.mxu0 0.0
        %773 = vmatpush1.xpose.msra.mxu0 0.0
        %774 = vmatprep.subr.mxu0 0.0
        %775 = vmatpush1.xpose.msra.mxu0 0.0
        %776 = vmatprep.subr.mxu0 0.0
        %777 = vmatpush1.xpose.msra.mxu0 0.0
        %778 = vmatprep.subr.mxu0 0.0
        %779 = vmatpush1.xpose.msra.mxu0 0.0
        %780 = vmatprep.subr.mxu0 0.0
        %781 = vmatpush1.xpose.msra.mxu0 0.0
        %782 = vmatprep.subr.mxu0 0.0
        %783 = vmatpush1.xpose.msra.mxu0 0.0
        %784 = vmatprep.subr.mxu0 0.0
        %785 = vmatpush1.xpose.msra.mxu0 0.0
        %786 = vmatprep.subr.mxu0 0.0
        %787 = vmatpush1.xpose.msra.mxu0 0.0
        %788 = vmatprep.subr.mxu0 0.0
        %789 = vmatpush1.xpose.msra.mxu0 0.0
        %790 = vmatprep.subr.mxu0 0.0
        %791 = vmatpush1.xpose.msra.mxu0 0.0
        %792 = vmatprep.subr.mxu0 0.0
        %793 = vmatpush1.xpose.msra.mxu0 0.0
        %794 = vmatprep.subr.mxu0 0.0
        %795 = vmatpush1.xpose.msra.mxu0 0.0
        %796 = vmatprep.subr.mxu0 0.0
        %797 = vmatpush1.xpose.msra.mxu0 0.0
        %798 = vmatprep.subr.mxu0 0.0
        %799 = vmatpush1.xpose.msra.mxu0 0.0
        %800 = vmatprep.subr.mxu0 0.0
        %801 = vmatpush1.xpose.msra.mxu0 0.0
        %802 = vmatprep.subr.mxu0 0.0
        %803 = vmatpush1.xpose.msra.mxu0 0.0
        %804 = vmatprep.subr.mxu0 0.0
        %805 = vmatpush1.xpose.msra.mxu0 0.0
        %806 = vmatprep.subr.mxu0 0.0
        %807 = vmatpush1.xpose.msra.mxu0 0.0
        %808 = vmatprep.subr.mxu0 0.0
        %809 = vmatpush1.xpose.msra.mxu0 0.0
        %810 = vmatprep.subr.mxu0 0.0
        %811 = vmatpush1.xpose.msra.mxu0 0.0
        %812 = vmatprep.subr.mxu0 0.0
        %813 = vmatpush1.xpose.msra.mxu0 0.0
        %814 = vmatprep.subr.mxu0 0.0
        %815 = vmatpush1.xpose.msra.mxu0 0.0
        %816 = vmatprep.subr.mxu0 0.0
        %817 = vmatpush1.xpose.msra.mxu0 0.0
        %818 = vmatprep.subr.mxu0 0.0
        %819 = vmatpush1.xpose.msra.mxu0 0.0
        %820 = vmatprep.mubr.f32.mxu0 0.0
        %821 = vmatmul.mubr.f32.gmra.mrb[0].mxu0 %v748
        %v822 = vpop.f32.mrb[0].mxu0
        %v823 = vadd.f32 0.0, %v822
        %v824 = vpop.f32.mrb[0].mxu0
        %825 = vmatprep.mubr.f32.mxu0 0.0
        %826 = vmatmul.mubr.f32.gmra.mrb[0].mxu0 %v750
        %v827 = vpop.f32.mrb[0].mxu0
        %v828 = vadd.f32 0.0, %v827
        %v829 = vpop.f32.mrb[0].mxu0
        %830 = vdwg.mxu0
        %v831 = vmul.f32 %v823, 0.35355338
        %v832 = vmul.f32 %v828, 0.35355338
        %vm833 = vcmask 130048
        %v834 = vsel %vm833, %v831, -inf
        %835 = vmax.xlane.f32.xlu0 %v834
        %v836 = vpop.xlane.xlu0 %835
        %v837 = vsel %vm833, %v832, -inf
        %838 = vmax.xlane.f32.xlu0 %v837
        %v839 = vpop.xlane.xlu0 %838
        %v840 = vsub.f32 %v831, %v836
        %v841 = vsub.f32 %v832, %v839
        %v842 = vmul.f32 %v840, 1.442695
        %v843 = vpow.pop %v842
        %v844 = vmul.f32 %v841, 1.442695
        %v845 = vpow.pop %v844
        %v846 = vsel %vm833, %v843, 0.0
        %847 = vadd.xlane.f32.xlu0 %v846
        %v848 = vpop.xlane.xlu0 %847
        %v849 = vsel %vm833, %v845, 0.0
        %850 = vadd.xlane.f32.xlu0 %v849
        %v851 = vpop.xlane.xlu0 %850
        %v852 = vrcp.pop %v848
        %v853 = vrcp.pop %v851
        %v854 = vmul.f32 %v843, %v852
        %v855 = vmul.f32 %v845, %v853
        %856 = vrot.lane.b32.xlu0 %v735, 64
        %v857 = vpop.permute.xlu0 %856
        %858 = vrot.lane.b32.xlu0 %v738, 64
        %v859 = vpop.permute.xlu0 %858
        %v863 = vsel %vm833, %v854, 0
        %v866 = vsel %vm833, %v855, 0
        %868 = vmatprep.subr.mxu0 0.0
        %869 = vmatpush1.msra.mxu0 %v857
        %870 = vmatprep.subr.mxu0 0.0
        %871 = vmatpush1.msra.mxu0 %v859
        %872 = vmatprep.subr.mxu0 0.0
        %873 = vmatpush1.msra.mxu0 0.0
        %874 = vmatprep.subr.mxu0 0.0
        %875 = vmatpush1.msra.mxu0 0.0
        %876 = vmatprep.subr.mxu0 0.0
        %877 = vmatpush1.msra.mxu0 0.0
        %878 = vmatprep.subr.mxu0 0.0
        %879 = vmatpush1.msra.mxu0 0.0
        %880 = vmatprep.subr.mxu0 0.0
        %881 = vmatpush1.msra.mxu0 0.0
        %882 = vmatprep.subr.mxu0 0.0
        %883 = vmatpush1.msra.mxu0 0.0
        %884 = vmatprep.subr.mxu0 0.0
        %885 = vmatpush1.msra.mxu0 0.0
        %886 = vmatprep.subr.mxu0 0.0
        %887 = vmatpush1.msra.mxu0 0.0
        %888 = vmatprep.subr.mxu0 0.0
        %889 = vmatpush1.msra.mxu0 0.0
        %890 = vmatprep.subr.mxu0 0.0
        %891 = vmatpush1.msra.mxu0 0.0
        %892 = vmatprep.subr.mxu0 0.0
        %893 = vmatpush1.msra.mxu0 0.0
        %894 = vmatprep.subr.mxu0 0.0
        %895 = vmatpush1.msra.mxu0 0.0
        %896 = vmatprep.subr.mxu0 0.0
        %897 = vmatpush1.msra.mxu0 0.0
        %898 = vmatprep.subr.mxu0 0.0
        %899 = vmatpush1.msra.mxu0 0.0
        %900 = vmatprep.subr.mxu0 0.0
        %901 = vmatpush1.msra.mxu0 0.0
        %902 = vmatprep.subr.mxu0 0.0
        %903 = vmatpush1.msra.mxu0 0.0
        %904 = vmatprep.subr.mxu0 0.0
        %905 = vmatpush1.msra.mxu0 0.0
        %906 = vmatprep.subr.mxu0 0.0
        %907 = vmatpush1.msra.mxu0 0.0
        %908 = vmatprep.subr.mxu0 0.0
        %909 = vmatpush1.msra.mxu0 0.0
        %910 = vmatprep.subr.mxu0 0.0
        %911 = vmatpush1.msra.mxu0 0.0
        %912 = vmatprep.subr.mxu0 0.0
        %913 = vmatpush1.msra.mxu0 0.0
        %914 = vmatprep.subr.mxu0 0.0
        %915 = vmatpush1.msra.mxu0 0.0
        %916 = vmatprep.subr.mxu0 0.0
        %917 = vmatpush1.msra.mxu0 0.0
        %918 = vmatprep.subr.mxu0 0.0
        %919 = vmatpush1.msra.mxu0 0.0
        %920 = vmatprep.subr.mxu0 0.0
        %921 = vmatpush1.msra.mxu0 0.0
        %922 = vmatprep.subr.mxu0 0.0
        %923 = vmatpush1.msra.mxu0 0.0
        %924 = vmatprep.subr.mxu0 0.0
        %925 = vmatpush1.msra.mxu0 0.0
        %926 = vmatprep.subr.mxu0 0.0
        %927 = vmatpush1.msra.mxu0 0.0
        %928 = vmatprep.subr.mxu0 0.0
        %929 = vmatpush1.msra.mxu0 0.0
        %930 = vmatprep.subr.mxu0 0.0
        %931 = vmatpush1.msra.mxu0 0.0
        %932 = vmatprep.mubr.f32.mxu0 0.0
        %933 = vmatmul.mubr.f32.gmra.mrb[0].mxu0 %v863
        %v934 = vpop.f32.mrb[0].mxu0
        %v935 = vadd.f32 0.0, %v934
        %v936 = vpop.f32.mrb[0].mxu0
        %937 = vmatprep.mubr.f32.mxu0 0.0
        %938 = vmatmul.mubr.f32.gmra.mrb[0].mxu0 %v866
        %v939 = vpop.f32.mrb[0].mxu0
        %v940 = vadd.f32 0.0, %v939
        %v941 = vpop.f32.mrb[0].mxu0
        %942 = vdwg.mxu0
        %943 = vrot.lane.b32.xlu0 %v735, 120
        %v944 = vpop.permute.xlu0 %943
        %945 = vrot.lane.b32.xlu0 %v738, 120
        %v946 = vpop.permute.xlu0 %945
        %947 = vrot.lane.b32.xlu0 %v735, 88
        %v948 = vpop.permute.xlu0 %947
        %949 = vrot.lane.b32.xlu0 %v738, 88
        %v950 = vpop.permute.xlu0 %949
        %v951 = vsel %vm747, %v944, 0
        %v953 = vsel %vm747, %v946, 0
        %v955 = vsel %vm747, %v948, 0
        %v957 = vsel %vm747, %v950, 0
        %959 = vmatprep.subr.mxu0 0.0
        %960 = vmatpush1.xpose.msra.mxu0 %v955
        %961 = vmatprep.subr.mxu0 0.0
        %962 = vmatpush1.xpose.msra.mxu0 %v957
        %963 = vmatprep.subr.mxu0 0.0
        %964 = vmatpush1.xpose.msra.mxu0 0.0
        %965 = vmatprep.subr.mxu0 0.0
        %966 = vmatpush1.xpose.msra.mxu0 0.0
        %967 = vmatprep.subr.mxu0 0.0
        %968 = vmatpush1.xpose.msra.mxu0 0.0
        %969 = vmatprep.subr.mxu0 0.0
        %970 = vmatpush1.xpose.msra.mxu0 0.0
        %971 = vmatprep.subr.mxu0 0.0
        %972 = vmatpush1.xpose.msra.mxu0 0.0
        %973 = vmatprep.subr.mxu0 0.0
        %974 = vmatpush1.xpose.msra.mxu0 0.0
        %975 = vmatprep.subr.mxu0 0.0
        %976 = vmatpush1.xpose.msra.mxu0 0.0
        %977 = vmatprep.subr.mxu0 0.0
        %978 = vmatpush1.xpose.msra.mxu0 0.0
        %979 = vmatprep.subr.mxu0 0.0
        %980 = vmatpush1.xpose.msra.mxu0 0.0
        %981 = vmatprep.subr.mxu0 0.0
        %982 = vmatpush1.xpose.msra.mxu0 0.0
        %983 = vmatprep.subr.mxu0 0.0
        %984 = vmatpush1.xpose.msra.mxu0 0.0
        %985 = vmatprep.subr.mxu0 0.0
        %986 = vmatpush1.xpose.msra.mxu0 0.0
        %987 = vmatprep.subr.mxu0 0.0
        %988 = vmatpush1.xpose.msra.mxu0 0.0
        %989 = vmatprep.subr.mxu0 0.0
        %990 = vmatpush1.xpose.msra.mxu0 0.0
        %991 = vmatprep.subr.mxu0 0.0
        %992 = vmatpush1.xpose.msra.mxu0 0.0
        %993 = vmatprep.subr.mxu0 0.0
        %994 = vmatpush1.xpose.msra.mxu0 0.0
        %995 = vmatprep.subr.mxu0 0.0
        %996 = vmatpush1.xpose.msra.mxu0 0.0
        %997 = vmatprep.subr.mxu0 0.0
        %998 = vmatpush1.xpose.msra.mxu0 0.0
        %999 = vmatprep.subr.mxu0 0.0
        %1000 = vmatpush1.xpose.msra.mxu0 0.0
        %1001 = vmatprep.subr.mxu0 0.0
        %1002 = vmatpush1.xpose.msra.mxu0 0.0
        %1003 = vmatprep.subr.mxu0 0.0
        %1004 = vmatpush1.xpose.msra.mxu0 0.0
        %1005 = vmatprep.subr.mxu0 0.0
        %1006 = vmatpush1.xpose.msra.mxu0 0.0
        %1007 = vmatprep.subr.mxu0 0.0
        %1008 = vmatpush1.xpose.msra.mxu0 0.0
        %1009 = vmatprep.subr.mxu0 0.0
        %1010 = vmatpush1.xpose.msra.mxu0 0.0
        %1011 = vmatprep.subr.mxu0 0.0
        %1012 = vmatpush1.xpose.msra.mxu0 0.0
        %1013 = vmatprep.subr.mxu0 0.0
        %1014 = vmatpush1.xpose.msra.mxu0 0.0
        %1015 = vmatprep.subr.mxu0 0.0
        %1016 = vmatpush1.xpose.msra.mxu0 0.0
        %1017 = vmatprep.subr.mxu0 0.0
        %1018 = vmatpush1.xpose.msra.mxu0 0.0
        %1019 = vmatprep.subr.mxu0 0.0
        %1020 = vmatpush1.xpose.msra.mxu0 0.0
        %1021 = vmatprep.subr.mxu0 0.0
        %1022 = vmatpush1.xpose.msra.mxu0 0.0
        %1023 = vmatprep.mubr.f32.mxu0 0.0
        %1024 = vmatmul.mubr.f32.gmra.mrb[0].mxu0 %v951
        %v1025 = vpop.f32.mrb[0].mxu0
        %v1026 = vadd.f32 0.0, %v1025
        %v1027 = vpop.f32.mrb[0].mxu0
        %1028 = vmatprep.mubr.f32.mxu0 0.0
        %1029 = vmatmul.mubr.f32.gmra.mrb[0].mxu0 %v953
        %v1030 = vpop.f32.mrb[0].mxu0
        %v1031 = vadd.f32 0.0, %v1030
        %v1032 = vpop.f32.mrb[0].mxu0
        %1033 = vdwg.mxu0
        %v1034 = vmul.f32 %v1026, 0.35355338
        %v1035 = vmul.f32 %v1031, 0.35355338
        %v1036 = vsel %vm833, %v1034, -inf
        %1037 = vmax.xlane.f32.xlu0 %v1036
        %v1038 = vpop.xlane.xlu0 %1037
        %v1039 = vsel %vm833, %v1035, -inf
        %1040 = vmax.xlane.f32.xlu0 %v1039
        %v1041 = vpop.xlane.xlu0 %1040
        %v1042 = vsub.f32 %v1034, %v1038
        %v1043 = vsub.f32 %v1035, %v1041
        %v1044 = vmul.f32 %v1042, 1.442695
        %v1045 = vpow.pop %v1044
        %v1046 = vmul.f32 %v1043, 1.442695
        %v1047 = vpow.pop %v1046
        %v1048 = vsel %vm833, %v1045, 0.0
        %1049 = vadd.xlane.f32.xlu0 %v1048
        %v1050 = vpop.xlane.xlu0 %1049
        %v1051 = vsel %vm833, %v1047, 0.0
        %1052 = vadd.xlane.f32.xlu0 %v1051
        %v1053 = vpop.xlane.xlu0 %1052
        %v1054 = vrcp.pop %v1050
        %v1055 = vrcp.pop %v1053
        %v1056 = vmul.f32 %v1045, %v1054
        %v1057 = vmul.f32 %v1047, %v1055
        %1058 = vrot.lane.b32.xlu0 %v735, 56
        %v1059 = vpop.permute.xlu0 %1058
        %1060 = vrot.lane.b32.xlu0 %v738, 56
        %v1061 = vpop.permute.xlu0 %1060
        %v1065 = vsel %vm833, %v1056, 0
        %v1068 = vsel %vm833, %v1057, 0
        %1070 = vmatprep.subr.mxu0 0.0
        %1071 = vmatpush1.msra.mxu0 %v1059
        %1072 = vmatprep.subr.mxu0 0.0
        %1073 = vmatpush1.msra.mxu0 %v1061
        %1074 = vmatprep.subr.mxu0 0.0
        %1075 = vmatpush1.msra.mxu0 0.0
        %1076 = vmatprep.subr.mxu0 0.0
        %1077 = vmatpush1.msra.mxu0 0.0
        %1078 = vmatprep.subr.mxu0 0.0
        %1079 = vmatpush1.msra.mxu0 0.0
        %1080 = vmatprep.subr.mxu0 0.0
        %1081 = vmatpush1.msra.mxu0 0.0
        %1082 = vmatprep.subr.mxu0 0.0
        %1083 = vmatpush1.msra.mxu0 0.0
        %1084 = vmatprep.subr.mxu0 0.0
        %1085 = vmatpush1.msra.mxu0 0.0
        %1086 = vmatprep.subr.mxu0 0.0
        %1087 = vmatpush1.msra.mxu0 0.0
        %1088 = vmatprep.subr.mxu0 0.0
        %1089 = vmatpush1.msra.mxu0 0.0
        %1090 = vmatprep.subr.mxu0 0.0
        %1091 = vmatpush1.msra.mxu0 0.0
        %1092 = vmatprep.subr.mxu0 0.0
        %1093 = vmatpush1.msra.mxu0 0.0
        %1094 = vmatprep.subr.mxu0 0.0
        %1095 = vmatpush1.msra.mxu0 0.0
        %1096 = vmatprep.subr.mxu0 0.0
        %1097 = vmatpush1.msra.mxu0 0.0
        %1098 = vmatprep.subr.mxu0 0.0
        %1099 = vmatpush1.msra.mxu0 0.0
        %1100 = vmatprep.subr.mxu0 0.0
        %1101 = vmatpush1.msra.mxu0 0.0
        %1102 = vmatprep.subr.mxu0 0.0
        %1103 = vmatpush1.msra.mxu0 0.0
        %1104 = vmatprep.subr.mxu0 0.0
        %1105 = vmatpush1.msra.mxu0 0.0
        %1106 = vmatprep.subr.mxu0 0.0
        %1107 = vmatpush1.msra.mxu0 0.0
        %1108 = vmatprep.subr.mxu0 0.0
        %1109 = vmatpush1.msra.mxu0 0.0
        %1110 = vmatprep.subr.mxu0 0.0
        %1111 = vmatpush1.msra.mxu0 0.0
        %1112 = vmatprep.subr.mxu0 0.0
        %1113 = vmatpush1.msra.mxu0 0.0
        %1114 = vmatprep.subr.mxu0 0.0
        %1115 = vmatpush1.msra.mxu0 0.0
        %1116 = vmatprep.subr.mxu0 0.0
        %1117 = vmatpush1.msra.mxu0 0.0
        %1118 = vmatprep.subr.mxu0 0.0
        %1119 = vmatpush1.msra.mxu0 0.0
        %1120 = vmatprep.subr.mxu0 0.0
        %1121 = vmatpush1.msra.mxu0 0.0
        %1122 = vmatprep.subr.mxu0 0.0
        %1123 = vmatpush1.msra.mxu0 0.0
        %1124 = vmatprep.subr.mxu0 0.0
        %1125 = vmatpush1.msra.mxu0 0.0
        %1126 = vmatprep.subr.mxu0 0.0
        %1127 = vmatpush1.msra.mxu0 0.0
        %1128 = vmatprep.subr.mxu0 0.0
        %1129 = vmatpush1.msra.mxu0 0.0
        %1130 = vmatprep.subr.mxu0 0.0
        %1131 = vmatpush1.msra.mxu0 0.0
        %1132 = vmatprep.subr.mxu0 0.0
        %1133 = vmatpush1.msra.mxu0 0.0
        %1134 = vmatprep.mubr.f32.mxu0 0.0
        %1135 = vmatmul.mubr.f32.gmra.mrb[0].mxu0 %v1065
        %v1136 = vpop.f32.mrb[0].mxu0
        %v1137 = vadd.f32 0.0, %v1136
        %v1138 = vpop.f32.mrb[0].mxu0
        %1139 = vmatprep.mubr.f32.mxu0 0.0
        %1140 = vmatmul.mubr.f32.gmra.mrb[0].mxu0 %v1068
        %v1141 = vpop.f32.mrb[0].mxu0
        %v1142 = vadd.f32 0.0, %v1141
        %v1143 = vpop.f32.mrb[0].mxu0
        %1144 = vdwg.mxu0
        %1145 = vrot.lane.b32.xlu0 %v735, 112
        %v1146 = vpop.permute.xlu0 %1145
        %1147 = vrot.lane.b32.xlu0 %v738, 112
        %v1148 = vpop.permute.xlu0 %1147
        %1149 = vrot.lane.b32.xlu0 %v735, 80
        %v1150 = vpop.permute.xlu0 %1149
        %1151 = vrot.lane.b32.xlu0 %v738, 80
        %v1152 = vpop.permute.xlu0 %1151
        %v1153 = vsel %vm747, %v1146, 0
        %v1155 = vsel %vm747, %v1148, 0
        %v1157 = vsel %vm747, %v1150, 0
        %v1159 = vsel %vm747, %v1152, 0
        %1161 = vmatprep.subr.mxu0 0.0
        %1162 = vmatpush1.xpose.msra.mxu0 %v1157
        %1163 = vmatprep.subr.mxu0 0.0
        %1164 = vmatpush1.xpose.msra.mxu0 %v1159
        %1165 = vmatprep.subr.mxu0 0.0
        %1166 = vmatpush1.xpose.msra.mxu0 0.0
        %1167 = vmatprep.subr.mxu0 0.0
        %1168 = vmatpush1.xpose.msra.mxu0 0.0
        %1169 = vmatprep.subr.mxu0 0.0
        %1170 = vmatpush1.xpose.msra.mxu0 0.0
        %1171 = vmatprep.subr.mxu0 0.0
        %1172 = vmatpush1.xpose.msra.mxu0 0.0
        %1173 = vmatprep.subr.mxu0 0.0
        %1174 = vmatpush1.xpose.msra.mxu0 0.0
        %1175 = vmatprep.subr.mxu0 0.0
        %1176 = vmatpush1.xpose.msra.mxu0 0.0
        %1177 = vmatprep.subr.mxu0 0.0
        %1178 = vmatpush1.xpose.msra.mxu0 0.0
        %1179 = vmatprep.subr.mxu0 0.0
        %1180 = vmatpush1.xpose.msra.mxu0 0.0
        %1181 = vmatprep.subr.mxu0 0.0
        %1182 = vmatpush1.xpose.msra.mxu0 0.0
        %1183 = vmatprep.subr.mxu0 0.0
        %1184 = vmatpush1.xpose.msra.mxu0 0.0
        %1185 = vmatprep.subr.mxu0 0.0
        %1186 = vmatpush1.xpose.msra.mxu0 0.0
        %1187 = vmatprep.subr.mxu0 0.0
        %1188 = vmatpush1.xpose.msra.mxu0 0.0
        %1189 = vmatprep.subr.mxu0 0.0
        %1190 = vmatpush1.xpose.msra.mxu0 0.0
        %1191 = vmatprep.subr.mxu0 0.0
        %1192 = vmatpush1.xpose.msra.mxu0 0.0
        %1193 = vmatprep.subr.mxu0 0.0
        %1194 = vmatpush1.xpose.msra.mxu0 0.0
        %1195 = vmatprep.subr.mxu0 0.0
        %1196 = vmatpush1.xpose.msra.mxu0 0.0
        %1197 = vmatprep.subr.mxu0 0.0
        %1198 = vmatpush1.xpose.msra.mxu0 0.0
        %1199 = vmatprep.subr.mxu0 0.0
        %1200 = vmatpush1.xpose.msra.mxu0 0.0
        %1201 = vmatprep.subr.mxu0 0.0
        %1202 = vmatpush1.xpose.msra.mxu0 0.0
        %1203 = vmatprep.subr.mxu0 0.0
        %1204 = vmatpush1.xpose.msra.mxu0 0.0
        %1205 = vmatprep.subr.mxu0 0.0
        %1206 = vmatpush1.xpose.msra.mxu0 0.0
        %1207 = vmatprep.subr.mxu0 0.0
        %1208 = vmatpush1.xpose.msra.mxu0 0.0
        %1209 = vmatprep.subr.mxu0 0.0
        %1210 = vmatpush1.xpose.msra.mxu0 0.0
        %1211 = vmatprep.subr.mxu0 0.0
        %1212 = vmatpush1.xpose.msra.mxu0 0.0
        %1213 = vmatprep.subr.mxu0 0.0
        %1214 = vmatpush1.xpose.msra.mxu0 0.0
        %1215 = vmatprep.subr.mxu0 0.0
        %1216 = vmatpush1.xpose.msra.mxu0 0.0
        %1217 = vmatprep.subr.mxu0 0.0
        %1218 = vmatpush1.xpose.msra.mxu0 0.0
        %1219 = vmatprep.subr.mxu0 0.0
        %1220 = vmatpush1.xpose.msra.mxu0 0.0
        %1221 = vmatprep.subr.mxu0 0.0
        %1222 = vmatpush1.xpose.msra.mxu0 0.0
        %1223 = vmatprep.subr.mxu0 0.0
        %1224 = vmatpush1.xpose.msra.mxu0 0.0
        %1225 = vmatprep.mubr.f32.mxu0 0.0
        %1226 = vmatmul.mubr.f32.gmra.mrb[0].mxu0 %v1153
        %v1227 = vpop.f32.mrb[0].mxu0
        %v1228 = vadd.f32 0.0, %v1227
        %v1229 = vpop.f32.mrb[0].mxu0
        %1230 = vmatprep.mubr.f32.mxu0 0.0
        %1231 = vmatmul.mubr.f32.gmra.mrb[0].mxu0 %v1155
        %v1232 = vpop.f32.mrb[0].mxu0
        %v1233 = vadd.f32 0.0, %v1232
        %v1234 = vpop.f32.mrb[0].mxu0
        %1235 = vdwg.mxu0
        %v1236 = vmul.f32 %v1228, 0.35355338
        %v1237 = vmul.f32 %v1233, 0.35355338
        %v1238 = vsel %vm833, %v1236, -inf
        %1239 = vmax.xlane.f32.xlu0 %v1238
        %v1240 = vpop.xlane.xlu0 %1239
        %v1241 = vsel %vm833, %v1237, -inf
        %1242 = vmax.xlane.f32.xlu0 %v1241
        %v1243 = vpop.xlane.xlu0 %1242
        %v1244 = vsub.f32 %v1236, %v1240
        %v1245 = vsub.f32 %v1237, %v1243
        %v1246 = vmul.f32 %v1244, 1.442695
        %v1247 = vpow.pop %v1246
        %v1248 = vmul.f32 %v1245, 1.442695
        %v1249 = vpow.pop %v1248
        %v1250 = vsel %vm833, %v1247, 0.0
        %1251 = vadd.xlane.f32.xlu0 %v1250
        %v1252 = vpop.xlane.xlu0 %1251
        %v1253 = vsel %vm833, %v1249, 0.0
        %1254 = vadd.xlane.f32.xlu0 %v1253
        %v1255 = vpop.xlane.xlu0 %1254
        %v1256 = vrcp.pop %v1252
        %v1257 = vrcp.pop %v1255
        %v1258 = vmul.f32 %v1247, %v1256
        %v1259 = vmul.f32 %v1249, %v1257
        %1260 = vrot.lane.b32.xlu0 %v735, 48
        %v1261 = vpop.permute.xlu0 %1260
        %1262 = vrot.lane.b32.xlu0 %v738, 48
        %v1263 = vpop.permute.xlu0 %1262
        %v1267 = vsel %vm833, %v1258, 0
        %v1270 = vsel %vm833, %v1259, 0
        %1272 = vmatprep.subr.mxu0 0.0
        %1273 = vmatpush1.msra.mxu0 %v1261
        %1274 = vmatprep.subr.mxu0 0.0
        %1275 = vmatpush1.msra.mxu0 %v1263
        %1276 = vmatprep.subr.mxu0 0.0
        %1277 = vmatpush1.msra.mxu0 0.0
        %1278 = vmatprep.subr.mxu0 0.0
        %1279 = vmatpush1.msra.mxu0 0.0
        %1280 = vmatprep.subr.mxu0 0.0
        %1281 = vmatpush1.msra.mxu0 0.0
        %1282 = vmatprep.subr.mxu0 0.0
        %1283 = vmatpush1.msra.mxu0 0.0
        %1284 = vmatprep.subr.mxu0 0.0
        %1285 = vmatpush1.msra.mxu0 0.0
        %1286 = vmatprep.subr.mxu0 0.0
        %1287 = vmatpush1.msra.mxu0 0.0
        %1288 = vmatprep.subr.mxu0 0.0
        %1289 = vmatpush1.msra.mxu0 0.0
        %1290 = vmatprep.subr.mxu0 0.0
        %1291 = vmatpush1.msra.mxu0 0.0
        %1292 = vmatprep.subr.mxu0 0.0
        %1293 = vmatpush1.msra.mxu0 0.0
        %1294 = vmatprep.subr.mxu0 0.0
        %1295 = vmatpush1.msra.mxu0 0.0
        %1296 = vmatprep.subr.mxu0 0.0
        %1297 = vmatpush1.msra.mxu0 0.0
        %1298 = vmatprep.subr.mxu0 0.0
        %1299 = vmatpush1.msra.mxu0 0.0
        %1300 = vmatprep.subr.mxu0 0.0
        %1301 = vmatpush1.msra.mxu0 0.0
        %1302 = vmatprep.subr.mxu0 0.0
        %1303 = vmatpush1.msra.mxu0 0.0
        %1304 = vmatprep.subr.mxu0 0.0
        %1305 = vmatpush1.msra.mxu0 0.0
        %1306 = vmatprep.subr.mxu0 0.0
        %1307 = vmatpush1.msra.mxu0 0.0
        %1308 = vmatprep.subr.mxu0 0.0
        %1309 = vmatpush1.msra.mxu0 0.0
        %1310 = vmatprep.subr.mxu0 0.0
        %1311 = vmatpush1.msra.mxu0 0.0
        %1312 = vmatprep.subr.mxu0 0.0
        %1313 = vmatpush1.msra.mxu0 0.0
        %1314 = vmatprep.subr.mxu0 0.0
        %1315 = vmatpush1.msra.mxu0 0.0
        %1316 = vmatprep.subr.mxu0 0.0
        %1317 = vmatpush1.msra.mxu0 0.0
        %1318 = vmatprep.subr.mxu0 0.0
        %1319 = vmatpush1.msra.mxu0 0.0
        %1320 = vmatprep.subr.mxu0 0.0
        %1321 = vmatpush1.msra.mxu0 0.0
        %1322 = vmatprep.subr.mxu0 0.0
        %1323 = vmatpush1.msra.mxu0 0.0
        %1324 = vmatprep.subr.mxu0 0.0
        %1325 = vmatpush1.msra.mxu0 0.0
        %1326 = vmatprep.subr.mxu0 0.0
        %1327 = vmatpush1.msra.mxu0 0.0
        %1328 = vmatprep.subr.mxu0 0.0
        %1329 = vmatpush1.msra.mxu0 0.0
        %1330 = vmatprep.subr.mxu0 0.0
        %1331 = vmatpush1.msra.mxu0 0.0
        %1332 = vmatprep.subr.mxu0 0.0
        %1333 = vmatpush1.msra.mxu0 0.0
        %1334 = vmatprep.subr.mxu0 0.0
        %1335 = vmatpush1.msra.mxu0 0.0
        %1336 = vmatprep.mubr.f32.mxu0 0.0
        %1337 = vmatmul.mubr.f32.gmra.mrb[0].mxu0 %v1267
        %v1338 = vpop.f32.mrb[0].mxu0
        %v1339 = vadd.f32 0.0, %v1338
        %v1340 = vpop.f32.mrb[0].mxu0
        %1341 = vmatprep.mubr.f32.mxu0 0.0
        %1342 = vmatmul.mubr.f32.gmra.mrb[0].mxu0 %v1270
        %v1343 = vpop.f32.mrb[0].mxu0
        %v1344 = vadd.f32 0.0, %v1343
        %v1345 = vpop.f32.mrb[0].mxu0
        %1346 = vdwg.mxu0
        %1347 = vrot.lane.b32.xlu0 %v735, 104
        %v1348 = vpop.permute.xlu0 %1347
        %1349 = vrot.lane.b32.xlu0 %v738, 104
        %v1350 = vpop.permute.xlu0 %1349
        %1351 = vrot.lane.b32.xlu0 %v735, 72
        %v1352 = vpop.permute.xlu0 %1351
        %1353 = vrot.lane.b32.xlu0 %v738, 72
        %v1354 = vpop.permute.xlu0 %1353
        %v1355 = vsel %vm747, %v1348, 0
        %v1357 = vsel %vm747, %v1350, 0
        %v1359 = vsel %vm747, %v1352, 0
        %v1361 = vsel %vm747, %v1354, 0
        %1363 = vmatprep.subr.mxu0 0.0
        %1364 = vmatpush1.xpose.msra.mxu0 %v1359
        %1365 = vmatprep.subr.mxu0 0.0
        %1366 = vmatpush1.xpose.msra.mxu0 %v1361
        %1367 = vmatprep.subr.mxu0 0.0
        %1368 = vmatpush1.xpose.msra.mxu0 0.0
        %1369 = vmatprep.subr.mxu0 0.0
        %1370 = vmatpush1.xpose.msra.mxu0 0.0
        %1371 = vmatprep.subr.mxu0 0.0
        %1372 = vmatpush1.xpose.msra.mxu0 0.0
        %1373 = vmatprep.subr.mxu0 0.0
        %1374 = vmatpush1.xpose.msra.mxu0 0.0
        %1375 = vmatprep.subr.mxu0 0.0
        %1376 = vmatpush1.xpose.msra.mxu0 0.0
        %1377 = vmatprep.subr.mxu0 0.0
        %1378 = vmatpush1.xpose.msra.mxu0 0.0
        %1379 = vmatprep.subr.mxu0 0.0
        %1380 = vmatpush1.xpose.msra.mxu0 0.0
        %1381 = vmatprep.subr.mxu0 0.0
        %1382 = vmatpush1.xpose.msra.mxu0 0.0
        %1383 = vmatprep.subr.mxu0 0.0
        %1384 = vmatpush1.xpose.msra.mxu0 0.0
        %1385 = vmatprep.subr.mxu0 0.0
        %1386 = vmatpush1.xpose.msra.mxu0 0.0
        %1387 = vmatprep.subr.mxu0 0.0
        %1388 = vmatpush1.xpose.msra.mxu0 0.0
        %1389 = vmatprep.subr.mxu0 0.0
        %1390 = vmatpush1.xpose.msra.mxu0 0.0
        %1391 = vmatprep.subr.mxu0 0.0
        %1392 = vmatpush1.xpose.msra.mxu0 0.0
        %1393 = vmatprep.subr.mxu0 0.0
        %1394 = vmatpush1.xpose.msra.mxu0 0.0
        %1395 = vmatprep.subr.mxu0 0.0
        %1396 = vmatpush1.xpose.msra.mxu0 0.0
        %1397 = vmatprep.subr.mxu0 0.0
        %1398 = vmatpush1.xpose.msra.mxu0 0.0
        %1399 = vmatprep.subr.mxu0 0.0
        %1400 = vmatpush1.xpose.msra.mxu0 0.0
        %1401 = vmatprep.subr.mxu0 0.0
        %1402 = vmatpush1.xpose.msra.mxu0 0.0
        %1403 = vmatprep.subr.mxu0 0.0
        %1404 = vmatpush1.xpose.msra.mxu0 0.0
        %1405 = vmatprep.subr.mxu0 0.0
        %1406 = vmatpush1.xpose.msra.mxu0 0.0
        %1407 = vmatprep.subr.mxu0 0.0
        %1408 = vmatpush1.xpose.msra.mxu0 0.0
        %1409 = vmatprep.subr.mxu0 0.0
        %1410 = vmatpush1.xpose.msra.mxu0 0.0
        %1411 = vmatprep.subr.mxu0 0.0
        %1412 = vmatpush1.xpose.msra.mxu0 0.0
        %1413 = vmatprep.subr.mxu0 0.0
        %1414 = vmatpush1.xpose.msra.mxu0 0.0
        %1415 = vmatprep.subr.mxu0 0.0
        %1416 = vmatpush1.xpose.msra.mxu0 0.0
        %1417 = vmatprep.subr.mxu0 0.0
        %1418 = vmatpush1.xpose.msra.mxu0 0.0
        %1419 = vmatprep.subr.mxu0 0.0
        %1420 = vmatpush1.xpose.msra.mxu0 0.0
        %1421 = vmatprep.subr.mxu0 0.0
        %1422 = vmatpush1.xpose.msra.mxu0 0.0
        %1423 = vmatprep.subr.mxu0 0.0
        %1424 = vmatpush1.xpose.msra.mxu0 0.0
        %1425 = vmatprep.subr.mxu0 0.0
        %1426 = vmatpush1.xpose.msra.mxu0 0.0
        %1427 = vmatprep.mubr.f32.mxu0 0.0
        %1428 = vmatmul.mubr.f32.gmra.mrb[0].mxu0 %v1355
        %v1429 = vpop.f32.mrb[0].mxu0
        %v1430 = vadd.f32 0.0, %v1429
        %v1431 = vpop.f32.mrb[0].mxu0
        %1432 = vmatprep.mubr.f32.mxu0 0.0
        %1433 = vmatmul.mubr.f32.gmra.mrb[0].mxu0 %v1357
        %v1434 = vpop.f32.mrb[0].mxu0
        %v1435 = vadd.f32 0.0, %v1434
        %v1436 = vpop.f32.mrb[0].mxu0
        %1437 = vdwg.mxu0
        %v1438 = vmul.f32 %v1430, 0.35355338
        %v1439 = vmul.f32 %v1435, 0.35355338
        %v1440 = vsel %vm833, %v1438, -inf
        %1441 = vmax.xlane.f32.xlu0 %v1440
        %v1442 = vpop.xlane.xlu0 %1441
        %v1443 = vsel %vm833, %v1439, -inf
        %1444 = vmax.xlane.f32.xlu0 %v1443
        %v1445 = vpop.xlane.xlu0 %1444
        %v1446 = vsub.f32 %v1438, %v1442
        %v1447 = vsub.f32 %v1439, %v1445
        %v1448 = vmul.f32 %v1446, 1.442695
        %v1449 = vpow.pop %v1448
        %v1450 = vmul.f32 %v1447, 1.442695
        %v1451 = vpow.pop %v1450
        %v1452 = vsel %vm833, %v1449, 0.0
        %1453 = vadd.xlane.f32.xlu0 %v1452
        %v1454 = vpop.xlane.xlu0 %1453
        %v1455 = vsel %vm833, %v1451, 0.0
        %1456 = vadd.xlane.f32.xlu0 %v1455
        %v1457 = vpop.xlane.xlu0 %1456
        %v1458 = vrcp.pop %v1454
        %v1459 = vrcp.pop %v1457
        %v1460 = vmul.f32 %v1449, %v1458
        %v1461 = vmul.f32 %v1451, %v1459
        %1462 = vrot.lane.b32.xlu0 %v735, 40
        %v1463 = vpop.permute.xlu0 %1462
        %1464 = vrot.lane.b32.xlu0 %v738, 40
        %v1465 = vpop.permute.xlu0 %1464
        %v1469 = vsel %vm833, %v1460, 0
        %v1472 = vsel %vm833, %v1461, 0
        %1474 = vmatprep.subr.mxu0 0.0
        %1475 = vmatpush1.msra.mxu0 %v1463
        %1476 = vmatprep.subr.mxu0 0.0
        %1477 = vmatpush1.msra.mxu0 %v1465
        %1478 = vmatprep.subr.mxu0 0.0
        %1479 = vmatpush1.msra.mxu0 0.0
        %1480 = vmatprep.subr.mxu0 0.0
        %1481 = vmatpush1.msra.mxu0 0.0
        %1482 = vmatprep.subr.mxu0 0.0
        %1483 = vmatpush1.msra.mxu0 0.0
        %1484 = vmatprep.subr.mxu0 0.0
        %1485 = vmatpush1.msra.mxu0 0.0
        %1486 = vmatprep.subr.mxu0 0.0
        %1487 = vmatpush1.msra.mxu0 0.0
        %1488 = vmatprep.subr.mxu0 0.0
        %1489 = vmatpush1.msra.mxu0 0.0
        %1490 = vmatprep.subr.mxu0 0.0
        %1491 = vmatpush1.msra.mxu0 0.0
        %1492 = vmatprep.subr.mxu0 0.0
        %1493 = vmatpush1.msra.mxu0 0.0
        %1494 = vmatprep.subr.mxu0 0.0
        %1495 = vmatpush1.msra.mxu0 0.0
        %1496 = vmatprep.subr.mxu0 0.0
        %1497 = vmatpush1.msra.mxu0 0.0
        %1498 = vmatprep.subr.mxu0 0.0
        %1499 = vmatpush1.msra.mxu0 0.0
        %1500 = vmatprep.subr.mxu0 0.0
        %1501 = vmatpush1.msra.mxu0 0.0
        %1502 = vmatprep.subr.mxu0 0.0
        %1503 = vmatpush1.msra.mxu0 0.0
        %1504 = vmatprep.subr.mxu0 0.0
        %1505 = vmatpush1.msra.mxu0 0.0
        %1506 = vmatprep.subr.mxu0 0.0
        %1507 = vmatpush1.msra.mxu0 0.0
        %1508 = vmatprep.subr.mxu0 0.0
        %1509 = vmatpush1.msra.mxu0 0.0
        %1510 = vmatprep.subr.mxu0 0.0
        %1511 = vmatpush1.msra.mxu0 0.0
        %1512 = vmatprep.subr.mxu0 0.0
        %1513 = vmatpush1.msra.mxu0 0.0
        %1514 = vmatprep.subr.mxu0 0.0
        %1515 = vmatpush1.msra.mxu0 0.0
        %1516 = vmatprep.subr.mxu0 0.0
        %1517 = vmatpush1.msra.mxu0 0.0
        %1518 = vmatprep.subr.mxu0 0.0
        %1519 = vmatpush1.msra.mxu0 0.0
        %1520 = vmatprep.subr.mxu0 0.0
        %1521 = vmatpush1.msra.mxu0 0.0
        %1522 = vmatprep.subr.mxu0 0.0
        %1523 = vmatpush1.msra.mxu0 0.0
        %1524 = vmatprep.subr.mxu0 0.0
        %1525 = vmatpush1.msra.mxu0 0.0
        %1526 = vmatprep.subr.mxu0 0.0
        %1527 = vmatpush1.msra.mxu0 0.0
        %1528 = vmatprep.subr.mxu0 0.0
        %1529 = vmatpush1.msra.mxu0 0.0
        %1530 = vmatprep.subr.mxu0 0.0
        %1531 = vmatpush1.msra.mxu0 0.0
        %1532 = vmatprep.subr.mxu0 0.0
        %1533 = vmatpush1.msra.mxu0 0.0
        %1534 = vmatprep.subr.mxu0 0.0
        %1535 = vmatpush1.msra.mxu0 0.0
        %1536 = vmatprep.subr.mxu0 0.0
        %1537 = vmatpush1.msra.mxu0 0.0
        %1538 = vmatprep.mubr.f32.mxu0 0.0
        %1539 = vmatmul.mubr.f32.gmra.mrb[0].mxu0 %v1469
        %v1540 = vpop.f32.mrb[0].mxu0
        %v1541 = vadd.f32 0.0, %v1540
        %v1542 = vpop.f32.mrb[0].mxu0
        %1543 = vmatprep.mubr.f32.mxu0 0.0
        %1544 = vmatmul.mubr.f32.gmra.mrb[0].mxu0 %v1472
        %v1545 = vpop.f32.mrb[0].mxu0
        %v1546 = vadd.f32 0.0, %v1545
        %v1547 = vpop.f32.mrb[0].mxu0
        %1548 = vdwg.mxu0
        %1551 = vrot.lane.b32.xlu0 %v1137, 8
        %v1552 = vpop.permute.xlu0 %1551
        %1553 = vrot.lane.b32.xlu0 %v1142, 8
        %v1554 = vpop.permute.xlu0 %1553
        %1559 = vrot.lane.b32.xlu0 %v1339, 16
        %v1560 = vpop.permute.xlu0 %1559
        %1561 = vrot.lane.b32.xlu0 %v1344, 16
        %v1562 = vpop.permute.xlu0 %1561
        %1567 = vrot.lane.b32.xlu0 %v1541, 24
        %v1568 = vpop.permute.xlu0 %1567
        %1569 = vrot.lane.b32.xlu0 %v1546, 24
        %v1570 = vpop.permute.xlu0 %1569
        %v1573 = vsel %vm747, %v935, %v1552
        %v1574 = vsel %vm747, %v940, %v1554
        %v1575 = vsel %vm833, %v1573, %v1560
        %v1576 = vsel %vm833, %v1574, %v1562
        %vm1577 = vcmask 195584
        %v1578 = vsel %vm1577, %v1575, %v1568
        %v1579 = vsel %vm1577, %v1576, %v1570
        %v1580 = vpack.c.bf16 %v1579, %v1578
        %v1581 = vld [vmem:[%s7] sm:$0xf]
        %v1582 = vld [vmem:[%s7 + $0x4] sm:$0xf]
        %v1583 = vld [vmem:[%s7 + $0x8] sm:$0xf]
        %v1584 = vld [vmem:[%s7 + $0xc] sm:$0xf]
        %v1589 = vunpack.c.l.b16 %v1581
        %v1590 = vunpack.c.l.b16 %v1582
        %v1591 = vunpack.c.l.b16 %v1583
        %v1592 = vunpack.c.l.b16 %v1584
        %v1593 = vpack.c.b16 %v1590, %v1589
        %v1594 = vpack.c.b16 %v1592, %v1591
        %v1598 = vsel %vm629, %v1580, 0
        %1600 = vmatprep.subr.bf16.mxu0 0
        %1601 = vmatpush1.bf16.msra.mxu0 %v1593
        %1602 = vmatprep.subr.bf16.mxu0 0
        %1603 = vmatpush1.bf16.msra.mxu0 %v1594
        %1604 = vmatprep.subr.bf16.mxu0 0
        %1605 = vmatpush1.bf16.msra.mxu0 0
        %1606 = vmatprep.subr.bf16.mxu0 0
        %1607 = vmatpush1.bf16.msra.mxu0 0
        %1608 = vmatprep.subr.bf16.mxu0 0
        %1609 = vmatpush1.bf16.msra.mxu0 0
        %1610 = vmatprep.subr.bf16.mxu0 0
        %1611 = vmatpush1.bf16.msra.mxu0 0
        %1612 = vmatprep.subr.bf16.mxu0 0
        %1613 = vmatpush1.bf16.msra.mxu0 0
        %1614 = vmatprep.subr.bf16.mxu0 0
        %1615 = vmatpush1.bf16.msra.mxu0 0
        %1616 = vmatprep.subr.bf16.mxu0 0
        %1617 = vmatpush1.bf16.msra.mxu0 0
        %1618 = vmatprep.subr.bf16.mxu0 0
        %1619 = vmatpush1.bf16.msra.mxu0 0
        %1620 = vmatprep.subr.bf16.mxu0 0
        %1621 = vmatpush1.bf16.msra.mxu0 0
        %1622 = vmatprep.subr.bf16.mxu0 0
        %1623 = vmatpush1.bf16.msra.mxu0 0
        %1624 = vmatprep.subr.bf16.mxu0 0
        %1625 = vmatpush1.bf16.msra.mxu0 0
        %1626 = vmatprep.subr.bf16.mxu0 0
        %1627 = vmatpush1.bf16.msra.mxu0 0
        %1628 = vmatprep.subr.bf16.mxu0 0
        %1629 = vmatpush1.bf16.msra.mxu0 0
        %1630 = vmatprep.subr.bf16.mxu0 0
        %1631 = vmatpush1.bf16.msra.mxu0 0
        %1632 = vmatprep.mubr.bf16.mxu0 0
        %1633 = vmatmul.mubr.bf16.gmra.mrb[0].mxu0 %v1598
        %v1634 = vpop.f32.mrb[0].mxu0
        %v1635 = vadd.f32 0.0, %v1634
        %v1636 = vpop.f32.mrb[0].mxu0
        %v1637 = vpop.f32.mrb[0].mxu0
        %v1638 = vadd.f32 0.0, %v1637
        %v1639 = vpop.f32.mrb[0].mxu0
        %1640 = vdwg.mxu0
        %v1641 = vadd.f32 %v621, %v1635
        %v1642 = vadd.f32 %v624, %v1638
        %v1643 = vld [vmem:[%s8] sm:$0x1]
        %v1645 = vlaneseq
        %v1646 = vshrl.u32 %v1645, 7
        %v1647 = vsub.s32 0, %v1646
        %v1648 = vrot.slane %v1643, %v1647
        %v1650 = vadd.f32 %v1641, %v1648
        %v1651 = vadd.f32 %v1642, %v1648
        %v1652 = vld [vmem:[%s9] sm:$0x1]
        %v1653 = vld [vmem:[%s10] sm:$0x1]
        %v1654 = vsel %vm629, %v1650, 0.0
        %1655 = vadd.xlane.f32.xlu0 %v1654
        %v1656 = vpop.xlane.xlu0 %1655
        %v1657 = vsel %vm629, %v1651, 0.0
        %1658 = vadd.xlane.f32.xlu0 %v1657
        %v1659 = vpop.xlane.xlu0 %1658
        %v1660 = vmul.f32 %v1656, %v636
        %v1661 = vmul.f32 %v1659, %v636
        %v1662 = vsub.f32 %v1650, %v1660
        %v1663 = vsub.f32 %v1651, %v1661
        %v1664 = vmul.f32 %v1662, %v1662
        %v1665 = vmul.f32 %v1663, %v1663
        %v1666 = vsel %vm629, %v1664, 0.0
        %1667 = vadd.xlane.f32.xlu0 %v1666
        %v1668 = vpop.xlane.xlu0 %1667
        %v1669 = vsel %vm629, %v1665, 0.0
        %1670 = vadd.xlane.f32.xlu0 %v1669
        %v1671 = vpop.xlane.xlu0 %1670
        %v1672 = vmul.f32 %v1668, %v636
        %v1673 = vmul.f32 %v1671, %v636
        %v1674 = vadd.f32 %v1672, 1e-06
        %v1675 = vadd.f32 %v1673, 1e-06
        %v1676 = vrsqrt.pop %v1674
        %v1677 = vrsqrt.pop %v1675
        %v1678 = vmul.f32 %v1662, %v1676
        %v1679 = vmul.f32 %v1663, %v1677
        %v1681 = vlaneseq
        %v1682 = vshrl.u32 %v1681, 7
        %v1683 = vsub.s32 0, %v1682
        %v1684 = vrot.slane %v1652, %v1683
        %v1686 = vmul.f32 %v1678, %v1684
        %v1687 = vmul.f32 %v1679, %v1684
        %v1689 = vlaneseq
        %v1690 = vshrl.u32 %v1689, 7
        %v1691 = vsub.s32 0, %v1690
        %v1692 = vrot.slane %v1653, %v1691
        %v1694 = vadd.f32 %v1686, %v1692
        %v1695 = vadd.f32 %v1687, %v1692
        %v1696 = vpack.c.bf16 %v1695, %v1694
        %v1697 = vld [vmem:[%s11] sm:$0xf]
        %v1698 = vld [vmem:[%s11 + $0x4] sm:$0xf]
        %v1699 = vld [vmem:[%s11 + $0x8] sm:$0xf]
        %v1700 = vld [vmem:[%s11 + $0xc] sm:$0xf]
        %v1701 = vld [vmem:[%s12] sm:$0x1]
        %v1703 = vlaneseq
        %v1704 = vshrl.u32 %v1703, 7
        %v1705 = vsub.s32 0, %v1704
        %v1706 = vrot.slane %v1701, %v1705
        %v1712 = vunpack.c.l.b16 %v1697
        %v1713 = vunpack.c.l.b16 %v1698
        %v1714 = vunpack.c.l.b16 %v1699
        %v1715 = vunpack.c.l.b16 %v1700
        %v1716 = vpack.c.b16 %v1713, %v1712
        %v1717 = vpack.c.b16 %v1715, %v1714
        %v1721 = vsel %vm629, %v1696, 0
        %1723 = vmatprep.subr.bf16.mxu0 0
        %1724 = vmatpush1.bf16.msra.mxu0 %v1716
        %1725 = vmatprep.subr.bf16.mxu0 0
        %1726 = vmatpush1.bf16.msra.mxu0 %v1717
        %1727 = vmatprep.subr.bf16.mxu0 0
        %1728 = vmatpush1.bf16.msra.mxu0 0
        %1729 = vmatprep.subr.bf16.mxu0 0
        %1730 = vmatpush1.bf16.msra.mxu0 0
        %1731 = vmatprep.subr.bf16.mxu0 0
        %1732 = vmatpush1.bf16.msra.mxu0 0
        %1733 = vmatprep.subr.bf16.mxu0 0
        %1734 = vmatpush1.bf16.msra.mxu0 0
        %1735 = vmatprep.subr.bf16.mxu0 0
        %1736 = vmatpush1.bf16.msra.mxu0 0
        %1737 = vmatprep.subr.bf16.mxu0 0
        %1738 = vmatpush1.bf16.msra.mxu0 0
        %1739 = vmatprep.subr.bf16.mxu0 0
        %1740 = vmatpush1.bf16.msra.mxu0 0
        %1741 = vmatprep.subr.bf16.mxu0 0
        %1742 = vmatpush1.bf16.msra.mxu0 0
        %1743 = vmatprep.subr.bf16.mxu0 0
        %1744 = vmatpush1.bf16.msra.mxu0 0
        %1745 = vmatprep.subr.bf16.mxu0 0
        %1746 = vmatpush1.bf16.msra.mxu0 0
        %1747 = vmatprep.subr.bf16.mxu0 0
        %1748 = vmatpush1.bf16.msra.mxu0 0
        %1749 = vmatprep.subr.bf16.mxu0 0
        %1750 = vmatpush1.bf16.msra.mxu0 0
        %1751 = vmatprep.subr.bf16.mxu0 0
        %1752 = vmatpush1.bf16.msra.mxu0 0
        %1753 = vmatprep.subr.bf16.mxu0 0
        %1754 = vmatpush1.bf16.msra.mxu0 0
        %1755 = vmatprep.mubr.bf16.mxu0 0
        %1756 = vmatmul.mubr.bf16.gmra.mrb[0].mxu0 %v1721
        %v1757 = vpop.f32.mrb[0].mxu0
        %v1758 = vadd.f32 %v1706, %v1757
        %v1759 = vpop.f32.mrb[0].mxu0
        %v1760 = vpop.f32.mrb[0].mxu0
        %v1761 = vadd.f32 %v1706, %v1760
        %v1762 = vpop.f32.mrb[0].mxu0
        %1763 = vdwg.mxu0
        %v1764 = vmul.f32 %v1758, %v1758
        %v1765 = vmul.f32 %v1761, %v1761
        %v1766 = vmul.f32 %v1758, %v1764
        %v1767 = vmul.f32 %v1761, %v1765
        %v1768 = vmul.f32 %v1766, 0.044715
        %v1769 = vmul.f32 %v1767, 0.044715
        %v1770 = vadd.f32 %v1758, %v1768
        %v1771 = vadd.f32 %v1761, %v1769
        %v1772 = vmul.f32 %v1770, 0.7978846
        %v1773 = vmul.f32 %v1771, 0.7978846
        %v1774 = vtanh.pop %v1772
        %v1775 = vtanh.pop %v1773
        %v1776 = vadd.f32 %v1774, 1.0
        %v1777 = vadd.f32 %v1775, 1.0
        %v1778 = vmul.f32 %v1776, 0.5
        %v1779 = vmul.f32 %v1777, 0.5
        %v1780 = vmul.f32 %v1758, %v1778
        %v1781 = vmul.f32 %v1761, %v1779
        %v1782 = vpack.c.bf16 %v1781, %v1780
        %v1783 = vld [vmem:[%s13] sm:$0xf]
        %v1784 = vld [vmem:[%s13 + $0x4] sm:$0xf]
        %v1785 = vld [vmem:[%s13 + $0x8] sm:$0xf]
        %v1786 = vld [vmem:[%s13 + $0xc] sm:$0xf]
        %v1787 = vld [vmem:[%s13 + $0x10] sm:$0xf]
        %v1788 = vld [vmem:[%s13 + $0x14] sm:$0xf]
        %v1789 = vld [vmem:[%s13 + $0x18] sm:$0xf]
        %v1790 = vld [vmem:[%s13 + $0x1c] sm:$0xf]
        %v1791 = vld [vmem:[%s13 + $0x20] sm:$0xf]
        %v1792 = vld [vmem:[%s13 + $0x24] sm:$0xf]
        %v1793 = vld [vmem:[%s13 + $0x28] sm:$0xf]
        %v1794 = vld [vmem:[%s13 + $0x2c] sm:$0xf]
        %v1795 = vld [vmem:[%s13 + $0x30] sm:$0xf]
        %v1796 = vld [vmem:[%s13 + $0x34] sm:$0xf]
        %v1797 = vld [vmem:[%s13 + $0x38] sm:$0xf]
        %v1798 = vld [vmem:[%s13 + $0x3c] sm:$0xf]
        %v1799 = vld [vmem:[%s14] sm:$0x1]
        %v1801 = vlaneseq
        %v1802 = vshrl.u32 %v1801, 7
        %v1803 = vsub.s32 0, %v1802
        %v1804 = vrot.slane %v1799, %v1803
        %v1822 = vunpack.c.l.b16 %v1783
        %v1823 = vunpack.c.l.b16 %v1784
        %v1824 = vunpack.c.l.b16 %v1785
        %v1825 = vunpack.c.l.b16 %v1786
        %v1826 = vunpack.c.l.b16 %v1787
        %v1827 = vunpack.c.l.b16 %v1788
        %v1828 = vunpack.c.l.b16 %v1789
        %v1829 = vunpack.c.l.b16 %v1790
        %v1830 = vunpack.c.l.b16 %v1791
        %v1831 = vunpack.c.l.b16 %v1792
        %v1832 = vunpack.c.l.b16 %v1793
        %v1833 = vunpack.c.l.b16 %v1794
        %v1834 = vunpack.c.l.b16 %v1795
        %v1835 = vunpack.c.l.b16 %v1796
        %v1836 = vunpack.c.l.b16 %v1797
        %v1837 = vunpack.c.l.b16 %v1798
        %v1838 = vpack.c.b16 %v1823, %v1822
        %v1839 = vpack.c.b16 %v1825, %v1824
        %v1840 = vpack.c.b16 %v1827, %v1826
        %v1841 = vpack.c.b16 %v1829, %v1828
        %v1842 = vpack.c.b16 %v1831, %v1830
        %v1843 = vpack.c.b16 %v1833, %v1832
        %v1844 = vpack.c.b16 %v1835, %v1834
        %v1845 = vpack.c.b16 %v1837, %v1836
        %1854 = vmatprep.subr.bf16.mxu0 0
        %1855 = vmatpush1.bf16.msra.mxu0 %v1838
        %1856 = vmatprep.subr.bf16.mxu0 0
        %1857 = vmatpush1.bf16.msra.mxu0 %v1839
        %1858 = vmatprep.subr.bf16.mxu0 0
        %1859 = vmatpush1.bf16.msra.mxu0 %v1840
        %1860 = vmatprep.subr.bf16.mxu0 0
        %1861 = vmatpush1.bf16.msra.mxu0 %v1841
        %1862 = vmatprep.subr.bf16.mxu0 0
        %1863 = vmatpush1.bf16.msra.mxu0 %v1842
        %1864 = vmatprep.subr.bf16.mxu0 0
        %1865 = vmatpush1.bf16.msra.mxu0 %v1843
        %1866 = vmatprep.subr.bf16.mxu0 0
        %1867 = vmatpush1.bf16.msra.mxu0 %v1844
        %1868 = vmatprep.subr.bf16.mxu0 0
        %1869 = vmatpush1.bf16.msra.mxu0 %v1845
        %1870 = vmatprep.subr.bf16.mxu0 0
        %1871 = vmatpush1.bf16.msra.mxu0 0
        %1872 = vmatprep.subr.bf16.mxu0 0
        %1873 = vmatpush1.bf16.msra.mxu0 0
        %1874 = vmatprep.subr.bf16.mxu0 0
        %1875 = vmatpush1.bf16.msra.mxu0 0
        %1876 = vmatprep.subr.bf16.mxu0 0
        %1877 = vmatpush1.bf16.msra.mxu0 0
        %1878 = vmatprep.subr.bf16.mxu0 0
        %1879 = vmatpush1.bf16.msra.mxu0 0
        %1880 = vmatprep.subr.bf16.mxu0 0
        %1881 = vmatpush1.bf16.msra.mxu0 0
        %1882 = vmatprep.subr.bf16.mxu0 0
        %1883 = vmatpush1.bf16.msra.mxu0 0
        %1884 = vmatprep.subr.bf16.mxu0 0
        %1885 = vmatpush1.bf16.msra.mxu0 0
        %1886 = vmatprep.mubr.bf16.mxu0 0
        %1887 = vmatmul.mubr.bf16.gmra.mrb[0].mxu0 %v1782
        %v1888 = vpop.f32.mrb[0].mxu0
        %v1889 = vadd.f32 %v1804, %v1888
        %v1890 = vpop.f32.mrb[0].mxu0
        %v1891 = vpop.f32.mrb[0].mxu0
        %v1892 = vadd.f32 %v1804, %v1891
        %v1893 = vpop.f32.mrb[0].mxu0
        %1894 = vdwg.mxu0
        %v1895 = vadd.f32 %v1650, %v1889
        %v1896 = vadd.f32 %v1651, %v1892
        %s1897 = scalar_lea.vmem %s3, 1
        %v1898 = vld [vmem:[%s1897] sm:$0x1]
        %s1899 = scalar_lea.vmem %s4, 1
        %v1900 = vld [vmem:[%s1899] sm:$0x1]
        %v1901 = vsel %vm629, %v1895, 0.0
        %1902 = vadd.xlane.f32.xlu0 %v1901
        %v1903 = vpop.xlane.xlu0 %1902
        %v1904 = vsel %vm629, %v1896, 0.0
        %1905 = vadd.xlane.f32.xlu0 %v1904
        %v1906 = vpop.xlane.xlu0 %1905
        %v1907 = vmul.f32 %v1903, %v636
        %v1908 = vmul.f32 %v1906, %v636
        %v1909 = vsub.f32 %v1895, %v1907
        %v1910 = vsub.f32 %v1896, %v1908
        %v1911 = vmul.f32 %v1909, %v1909
        %v1912 = vmul.f32 %v1910, %v1910
        %v1913 = vsel %vm629, %v1911, 0.0
        %1914 = vadd.xlane.f32.xlu0 %v1913
        %v1915 = vpop.xlane.xlu0 %1914
        %v1916 = vsel %vm629, %v1912, 0.0
        %1917 = vadd.xlane.f32.xlu0 %v1916
        %v1918 = vpop.xlane.xlu0 %1917
        %v1919 = vmul.f32 %v1915, %v636
        %v1920 = vmul.f32 %v1918, %v636
        %v1921 = vadd.f32 %v1919, 1e-06
        %v1922 = vadd.f32 %v1920, 1e-06
        %v1923 = vrsqrt.pop %v1921
        %v1924 = vrsqrt.pop %v1922
        %v1925 = vmul.f32 %v1909, %v1923
        %v1926 = vmul.f32 %v1910, %v1924
        %v1928 = vlaneseq
        %v1929 = vshrl.u32 %v1928, 7
        %v1930 = vsub.s32 0, %v1929
        %v1931 = vrot.slane %v1898, %v1930
        %v1933 = vmul.f32 %v1925, %v1931
        %v1934 = vmul.f32 %v1926, %v1931
        %v1936 = vlaneseq
        %v1937 = vshrl.u32 %v1936, 7
        %v1938 = vsub.s32 0, %v1937
        %v1939 = vrot.slane %v1900, %v1938
        %v1941 = vadd.f32 %v1933, %v1939
        %v1942 = vadd.f32 %v1934, %v1939
        %v1943 = vpack.c.bf16 %v1942, %v1941
        %s1944 = scalar_lea.vmem %s5, 16
        %v1945 = vld [vmem:[%s1944] sm:$0xf]
        %v1946 = vld [vmem:[%s1944 + $0x4] sm:$0xf]
        %v1947 = vld [vmem:[%s1944 + $0x8] sm:$0xf]
        %v1948 = vld [vmem:[%s1944 + $0xc] sm:$0xf]
        %s1949 = scalar_lea.vmem %s6, 1
        %v1950 = vld [vmem:[%s1949] sm:$0x1]
        %v1952 = vlaneseq
        %v1953 = vshrl.u32 %v1952, 7
        %v1954 = vsub.s32 0, %v1953
        %v1955 = vrot.slane %v1950, %v1954
        %v1961 = vunpack.c.l.b16 %v1945
        %v1962 = vunpack.c.l.b16 %v1946
        %v1963 = vunpack.c.l.b16 %v1947
        %v1964 = vunpack.c.l.b16 %v1948
        %v1965 = vpack.c.b16 %v1962, %v1961
        %v1966 = vpack.c.b16 %v1964, %v1963
        %v1970 = vsel %vm629, %v1943, 0
        %1972 = vmatprep.subr.bf16.mxu0 0
        %1973 = vmatpush1.bf16.msra.mxu0 %v1965
        %1974 = vmatprep.subr.bf16.mxu0 0
        %1975 = vmatpush1.bf16.msra.mxu0 %v1966
        %1976 = vmatprep.subr.bf16.mxu0 0
        %1977 = vmatpush1.bf16.msra.mxu0 0
        %1978 = vmatprep.subr.bf16.mxu0 0
        %1979 = vmatpush1.bf16.msra.mxu0 0
        %1980 = vmatprep.subr.bf16.mxu0 0
        %1981 = vmatpush1.bf16.msra.mxu0 0
        %1982 = vmatprep.subr.bf16.mxu0 0
        %1983 = vmatpush1.bf16.msra.mxu0 0
        %1984 = vmatprep.subr.bf16.mxu0 0
        %1985 = vmatpush1.bf16.msra.mxu0 0
        %1986 = vmatprep.subr.bf16.mxu0 0
        %1987 = vmatpush1.bf16.msra.mxu0 0
        %1988 = vmatprep.subr.bf16.mxu0 0
        %1989 = vmatpush1.bf16.msra.mxu0 0
        %1990 = vmatprep.subr.bf16.mxu0 0
        %1991 = vmatpush1.bf16.msra.mxu0 0
        %1992 = vmatprep.subr.bf16.mxu0 0
        %1993 = vmatpush1.bf16.msra.mxu0 0
        %1994 = vmatprep.subr.bf16.mxu0 0
        %1995 = vmatpush1.bf16.msra.mxu0 0
        %1996 = vmatprep.subr.bf16.mxu0 0
        %1997 = vmatpush1.bf16.msra.mxu0 0
        %1998 = vmatprep.subr.bf16.mxu0 0
        %1999 = vmatpush1.bf16.msra.mxu0 0
        %2000 = vmatprep.subr.bf16.mxu0 0
        %2001 = vmatpush1.bf16.msra.mxu0 0
        %2002 = vmatprep.subr.bf16.mxu0 0
        %2003 = vmatpush1.bf16.msra.mxu0 0
        %2004 = vmatprep.mubr.bf16.mxu0 0
        %2005 = vmatmul.mubr.bf16.gmra.mrb[0].mxu0 %v1970
        %v2006 = vpop.f32.mrb[0].mxu0
        %v2007 = vadd.f32 %v1955, %v2006
        %v2008 = vpop.f32.mrb[0].mxu0
        %v2009 = vpop.f32.mrb[0].mxu0
        %v2010 = vadd.f32 %v1955, %v2009
        %v2011 = vpop.f32.mrb[0].mxu0
        %2012 = vdwg.mxu0
        %2015 = vrot.lane.b32.xlu0 %v2007, 96
        %v2016 = vpop.permute.xlu0 %2015
        %2017 = vrot.lane.b32.xlu0 %v2010, 96
        %v2018 = vpop.permute.xlu0 %2017
        %v2019 = vsel %vm747, %v2007, 0
        %v2021 = vsel %vm747, %v2010, 0
        %v2023 = vsel %vm747, %v2016, 0
        %v2025 = vsel %vm747, %v2018, 0
        %2027 = vmatprep.subr.mxu0 0.0
        %2028 = vmatpush1.xpose.msra.mxu0 %v2023
        %2029 = vmatprep.subr.mxu0 0.0
        %2030 = vmatpush1.xpose.msra.mxu0 %v2025
        %2031 = vmatprep.subr.mxu0 0.0
        %2032 = vmatpush1.xpose.msra.mxu0 0.0
        %2033 = vmatprep.subr.mxu0 0.0
        %2034 = vmatpush1.xpose.msra.mxu0 0.0
        %2035 = vmatprep.subr.mxu0 0.0
        %2036 = vmatpush1.xpose.msra.mxu0 0.0
        %2037 = vmatprep.subr.mxu0 0.0
        %2038 = vmatpush1.xpose.msra.mxu0 0.0
        %2039 = vmatprep.subr.mxu0 0.0
        %2040 = vmatpush1.xpose.msra.mxu0 0.0
        %2041 = vmatprep.subr.mxu0 0.0
        %2042 = vmatpush1.xpose.msra.mxu0 0.0
        %2043 = vmatprep.subr.mxu0 0.0
        %2044 = vmatpush1.xpose.msra.mxu0 0.0
        %2045 = vmatprep.subr.mxu0 0.0
        %2046 = vmatpush1.xpose.msra.mxu0 0.0
        %2047 = vmatprep.subr.mxu0 0.0
        %2048 = vmatpush1.xpose.msra.mxu0 0.0
        %2049 = vmatprep.subr.mxu0 0.0
        %2050 = vmatpush1.xpose.msra.mxu0 0.0
        %2051 = vmatprep.subr.mxu0 0.0
        %2052 = vmatpush1.xpose.msra.mxu0 0.0
        %2053 = vmatprep.subr.mxu0 0.0
        %2054 = vmatpush1.xpose.msra.mxu0 0.0
        %2055 = vmatprep.subr.mxu0 0.0
        %2056 = vmatpush1.xpose.msra.mxu0 0.0
        %2057 = vmatprep.subr.mxu0 0.0
        %2058 = vmatpush1.xpose.msra.mxu0 0.0
        %2059 = vmatprep.subr.mxu0 0.0
        %2060 = vmatpush1.xpose.msra.mxu0 0.0
        %2061 = vmatprep.subr.mxu0 0.0
        %2062 = vmatpush1.xpose.msra.mxu0 0.0
        %2063 = vmatprep.subr.mxu0 0.0
        %2064 = vmatpush1.xpose.msra.mxu0 0.0
        %2065 = vmatprep.subr.mxu0 0.0
        %2066 = vmatpush1.xpose.msra.mxu0 0.0
        %2067 = vmatprep.subr.mxu0 0.0
        %2068 = vmatpush1.xpose.msra.mxu0 0.0
        %2069 = vmatprep.subr.mxu0 0.0
        %2070 = vmatpush1.xpose.msra.mxu0 0.0
        %2071 = vmatprep.subr.mxu0 0.0
        %2072 = vmatpush1.xpose.msra.mxu0 0.0
        %2073 = vmatprep.subr.mxu0 0.0
        %2074 = vmatpush1.xpose.msra.mxu0 0.0
        %2075 = vmatprep.subr.mxu0 0.0
        %2076 = vmatpush1.xpose.msra.mxu0 0.0
        %2077 = vmatprep.subr.mxu0 0.0
        %2078 = vmatpush1.xpose.msra.mxu0 0.0
        %2079 = vmatprep.subr.mxu0 0.0
        %2080 = vmatpush1.xpose.msra.mxu0 0.0
        %2081 = vmatprep.subr.mxu0 0.0
        %2082 = vmatpush1.xpose.msra.mxu0 0.0
        %2083 = vmatprep.subr.mxu0 0.0
        %2084 = vmatpush1.xpose.msra.mxu0 0.0
        %2085 = vmatprep.subr.mxu0 0.0
        %2086 = vmatpush1.xpose.msra.mxu0 0.0
        %2087 = vmatprep.subr.mxu0 0.0
        %2088 = vmatpush1.xpose.msra.mxu0 0.0
        %2089 = vmatprep.subr.mxu0 0.0
        %2090 = vmatpush1.xpose.msra.mxu0 0.0
        %2091 = vmatprep.mubr.f32.mxu0 0.0
        %2092 = vmatmul.mubr.f32.gmra.mrb[0].mxu0 %v2019
        %v2093 = vpop.f32.mrb[0].mxu0
        %v2094 = vadd.f32 0.0, %v2093
        %v2095 = vpop.f32.mrb[0].mxu0
        %2096 = vmatprep.mubr.f32.mxu0 0.0
        %2097 = vmatmul.mubr.f32.gmra.mrb[0].mxu0 %v2021
        %v2098 = vpop.f32.mrb[0].mxu0
        %v2099 = vadd.f32 0.0, %v2098
        %v2100 = vpop.f32.mrb[0].mxu0
        %2101 = vdwg.mxu0
        %v2102 = vmul.f32 %v2094, 0.35355338
        %v2103 = vmul.f32 %v2099, 0.35355338
        %v2104 = vsel %vm833, %v2102, -inf
        %2105 = vmax.xlane.f32.xlu0 %v2104
        %v2106 = vpop.xlane.xlu0 %2105
        %v2107 = vsel %vm833, %v2103, -inf
        %2108 = vmax.xlane.f32.xlu0 %v2107
        %v2109 = vpop.xlane.xlu0 %2108
        %v2110 = vsub.f32 %v2102, %v2106
        %v2111 = vsub.f32 %v2103, %v2109
        %v2112 = vmul.f32 %v2110, 1.442695
        %v2113 = vpow.pop %v2112
        %v2114 = vmul.f32 %v2111, 1.442695
        %v2115 = vpow.pop %v2114
        %v2116 = vsel %vm833, %v2113, 0.0
        %2117 = vadd.xlane.f32.xlu0 %v2116
        %v2118 = vpop.xlane.xlu0 %2117
        %v2119 = vsel %vm833, %v2115, 0.0
        %2120 = vadd.xlane.f32.xlu0 %v2119
        %v2121 = vpop.xlane.xlu0 %2120
        %v2122 = vrcp.pop %v2118
        %v2123 = vrcp.pop %v2121
        %v2124 = vmul.f32 %v2113, %v2122
        %v2125 = vmul.f32 %v2115, %v2123
        %2126 = vrot.lane.b32.xlu0 %v2007, 64
        %v2127 = vpop.permute.xlu0 %2126
        %2128 = vrot.lane.b32.xlu0 %v2010, 64
        %v2129 = vpop.permute.xlu0 %2128
        %v2133 = vsel %vm833, %v2124, 0
        %v2136 = vsel %vm833, %v2125, 0
        %2138 = vmatprep.subr.mxu0 0.0
        %2139 = vmatpush1.msra.mxu0 %v2127
        %2140 = vmatprep.subr.mxu0 0.0
        %2141 = vmatpush1.msra.mxu0 %v2129
        %2142 = vmatprep.subr.mxu0 0.0
        %2143 = vmatpush1.msra.mxu0 0.0
        %2144 = vmatprep.subr.mxu0 0.0
        %2145 = vmatpush1.msra.mxu0 0.0
        %2146 = vmatprep.subr.mxu0 0.0
        %2147 = vmatpush1.msra.mxu0 0.0
        %2148 = vmatprep.subr.mxu0 0.0
        %2149 = vmatpush1.msra.mxu0 0.0
        %2150 = vmatprep.subr.mxu0 0.0
        %2151 = vmatpush1.msra.mxu0 0.0
        %2152 = vmatprep.subr.mxu0 0.0
        %2153 = vmatpush1.msra.mxu0 0.0
        %2154 = vmatprep.subr.mxu0 0.0
        %2155 = vmatpush1.msra.mxu0 0.0
        %2156 = vmatprep.subr.mxu0 0.0
        %2157 = vmatpush1.msra.mxu0 0.0
        %2158 = vmatprep.subr.mxu0 0.0
        %2159 = vmatpush1.msra.mxu0 0.0
        %2160 = vmatprep.subr.mxu0 0.0
        %2161 = vmatpush1.msra.mxu0 0.0
        %2162 = vmatprep.subr.mxu0 0.0
        %2163 = vmatpush1.msra.mxu0 0.0
        %2164 = vmatprep.subr.mxu0 0.0
        %2165 = vmatpush1.msra.mxu0 0.0
        %2166 = vmatprep.subr.mxu0 0.0
        %2167 = vmatpush1.msra.mxu0 0.0
        %2168 = vmatprep.subr.mxu0 0.0
        %2169 = vmatpush1.msra.mxu0 0.0
        %2170 = vmatprep.subr.mxu0 0.0
        %2171 = vmatpush1.msra.mxu0 0.0
        %2172 = vmatprep.subr.mxu0 0.0
        %2173 = vmatpush1.msra.mxu0 0.0
        %2174 = vmatprep.subr.mxu0 0.0
        %2175 = vmatpush1.msra.mxu0 0.0
        %2176 = vmatprep.subr.mxu0 0.0
        %2177 = vmatpush1.msra.mxu0 0.0
        %2178 = vmatprep.subr.mxu0 0.0
        %2179 = vmatpush1.msra.mxu0 0.0
        %2180 = vmatprep.subr.mxu0 0.0
        %2181 = vmatpush1.msra.mxu0 0.0
        %2182 = vmatprep.subr.mxu0 0.0
        %2183 = vmatpush1.msra.mxu0 0.0
        %2184 = vmatprep.subr.mxu0 0.0
        %2185 = vmatpush1.msra.mxu0 0.0
        %2186 = vmatprep.subr.mxu0 0.0
        %2187 = vmatpush1.msra.mxu0 0.0
        %2188 = vmatprep.subr.mxu0 0.0
        %2189 = vmatpush1.msra.mxu0 0.0
        %2190 = vmatprep.subr.mxu0 0.0
        %2191 = vmatpush1.msra.mxu0 0.0
        %2192 = vmatprep.subr.mxu0 0.0
        %2193 = vmatpush1.msra.mxu0 0.0
        %2194 = vmatprep.subr.mxu0 0.0
        %2195 = vmatpush1.msra.mxu0 0.0
        %2196 = vmatprep.subr.mxu0 0.0
        %2197 = vmatpush1.msra.mxu0 0.0
        %2198 = vmatprep.subr.mxu0 0.0
        %2199 = vmatpush1.msra.mxu0 0.0
        %2200 = vmatprep.subr.mxu0 0.0
        %2201 = vmatpush1.msra.mxu0 0.0
        %2202 = vmatprep.mubr.f32.mxu0 0.0
        %2203 = vmatmul.mubr.f32.gmra.mrb[0].mxu0 %v2133
        %v2204 = vpop.f32.mrb[0].mxu0
        %v2205 = vadd.f32 0.0, %v2204
        %v2206 = vpop.f32.mrb[0].mxu0
        %2207 = vmatprep.mubr.f32.mxu0 0.0
        %2208 = vmatmul.mubr.f32.gmra.mrb[0].mxu0 %v2136
        %v2209 = vpop.f32.mrb[0].mxu0
        %v2210 = vadd.f32 0.0, %v2209
        %v2211 = vpop.f32.mrb[0].mxu0
        %2212 = vdwg.mxu0
        %2213 = vrot.lane.b32.xlu0 %v2007, 120
        %v2214 = vpop.permute.xlu0 %2213
        %2215 = vrot.lane.b32.xlu0 %v2010, 120
        %v2216 = vpop.permute.xlu0 %2215
        %2217 = vrot.lane.b32.xlu0 %v2007, 88
        %v2218 = vpop.permute.xlu0 %2217
        %2219 = vrot.lane.b32.xlu0 %v2010, 88
        %v2220 = vpop.permute.xlu0 %2219
        %v2221 = vsel %vm747, %v2214, 0
        %v2223 = vsel %vm747, %v2216, 0
        %v2225 = vsel %vm747, %v2218, 0
        %v2227 = vsel %vm747, %v2220, 0
        %2229 = vmatprep.subr.mxu0 0.0
        %2230 = vmatpush1.xpose.msra.mxu0 %v2225
        %2231 = vmatprep.subr.mxu0 0.0
        %2232 = vmatpush1.xpose.msra.mxu0 %v2227
        %2233 = vmatprep.subr.mxu0 0.0
        %2234 = vmatpush1.xpose.msra.mxu0 0.0
        %2235 = vmatprep.subr.mxu0 0.0
        %2236 = vmatpush1.xpose.msra.mxu0 0.0
        %2237 = vmatprep.subr.mxu0 0.0
        %2238 = vmatpush1.xpose.msra.mxu0 0.0
        %2239 = vmatprep.subr.mxu0 0.0
        %2240 = vmatpush1.xpose.msra.mxu0 0.0
        %2241 = vmatprep.subr.mxu0 0.0
        %2242 = vmatpush1.xpose.msra.mxu0 0.0
        %2243 = vmatprep.subr.mxu0 0.0
        %2244 = vmatpush1.xpose.msra.mxu0 0.0
        %2245 = vmatprep.subr.mxu0 0.0
        %2246 = vmatpush1.xpose.msra.mxu0 0.0
        %2247 = vmatprep.subr.mxu0 0.0
        %2248 = vmatpush1.xpose.msra.mxu0 0.0
        %2249 = vmatprep.subr.mxu0 0.0
        %2250 = vmatpush1.xpose.msra.mxu0 0.0
        %2251 = vmatprep.subr.mxu0 0.0
        %2252 = vmatpush1.xpose.msra.mxu0 0.0
        %2253 = vmatprep.subr.mxu0 0.0
        %2254 = vmatpush1.xpose.msra.mxu0 0.0
        %2255 = vmatprep.subr.mxu0 0.0
        %2256 = vmatpush1.xpose.msra.mxu0 0.0
        %2257 = vmatprep.subr.mxu0 0.0
        %2258 = vmatpush1.xpose.msra.mxu0 0.0
        %2259 = vmatprep.subr.mxu0 0.0
        %2260 = vmatpush1.xpose.msra.mxu0 0.0
        %2261 = vmatprep.subr.mxu0 0.0
        %2262 = vmatpush1.xpose.msra.mxu0 0.0
        %2263 = vmatprep.subr.mxu0 0.0
        %2264 = vmatpush1.xpose.msra.mxu0 0.0
        %2265 = vmatprep.subr.mxu0 0.0
        %2266 = vmatpush1.xpose.msra.mxu0 0.0
        %2267 = vmatprep.subr.mxu0 0.0
        %2268 = vmatpush1.xpose.msra.mxu0 0.0
        %2269 = vmatprep.subr.mxu0 0.0
        %2270 = vmatpush1.xpose.msra.mxu0 0.0
        %2271 = vmatprep.subr.mxu0 0.0
        %2272 = vmatpush1.xpose.msra.mxu0 0.0
        %2273 = vmatprep.subr.mxu0 0.0
        %2274 = vmatpush1.xpose.msra.mxu0 0.0
        %2275 = vmatprep.subr.mxu0 0.0
        %2276 = vmatpush1.xpose.msra.mxu0 0.0
        %2277 = vmatprep.subr.mxu0 0.0
        %2278 = vmatpush1.xpose.msra.mxu0 0.0
        %2279 = vmatprep.subr.mxu0 0.0
        %2280 = vmatpush1.xpose.msra.mxu0 0.0
        %2281 = vmatprep.subr.mxu0 0.0
        %2282 = vmatpush1.xpose.msra.mxu0 0.0
        %2283 = vmatprep.subr.mxu0 0.0
        %2284 = vmatpush1.xpose.msra.mxu0 0.0
        %2285 = vmatprep.subr.mxu0 0.0
        %2286 = vmatpush1.xpose.msra.mxu0 0.0
        %2287 = vmatprep.subr.mxu0 0.0
        %2288 = vmatpush1.xpose.msra.mxu0 0.0
        %2289 = vmatprep.subr.mxu0 0.0
        %2290 = vmatpush1.xpose.msra.mxu0 0.0
        %2291 = vmatprep.subr.mxu0 0.0
        %2292 = vmatpush1.xpose.msra.mxu0 0.0
        %2293 = vmatprep.mubr.f32.mxu0 0.0
        %2294 = vmatmul.mubr.f32.gmra.mrb[0].mxu0 %v2221
        %v2295 = vpop.f32.mrb[0].mxu0
        %v2296 = vadd.f32 0.0, %v2295
        %v2297 = vpop.f32.mrb[0].mxu0
        %2298 = vmatprep.mubr.f32.mxu0 0.0
        %2299 = vmatmul.mubr.f32.gmra.mrb[0].mxu0 %v2223
        %v2300 = vpop.f32.mrb[0].mxu0
        %v2301 = vadd.f32 0.0, %v2300
        %v2302 = vpop.f32.mrb[0].mxu0
        %2303 = vdwg.mxu0
        %v2304 = vmul.f32 %v2296, 0.35355338
        %v2305 = vmul.f32 %v2301, 0.35355338
        %v2306 = vsel %vm833, %v2304, -inf
        %2307 = vmax.xlane.f32.xlu0 %v2306
        %v2308 = vpop.xlane.xlu0 %2307
        %v2309 = vsel %vm833, %v2305, -inf
        %2310 = vmax.xlane.f32.xlu0 %v2309
        %v2311 = vpop.xlane.xlu0 %2310
        %v2312 = vsub.f32 %v2304, %v2308
        %v2313 = vsub.f32 %v2305, %v2311
        %v2314 = vmul.f32 %v2312, 1.442695
        %v2315 = vpow.pop %v2314
        %v2316 = vmul.f32 %v2313, 1.442695
        %v2317 = vpow.pop %v2316
        %v2318 = vsel %vm833, %v2315, 0.0
        %2319 = vadd.xlane.f32.xlu0 %v2318
        %v2320 = vpop.xlane.xlu0 %2319
        %v2321 = vsel %vm833, %v2317, 0.0
        %2322 = vadd.xlane.f32.xlu0 %v2321
        %v2323 = vpop.xlane.xlu0 %2322
        %v2324 = vrcp.pop %v2320
        %v2325 = vrcp.pop %v2323
        %v2326 = vmul.f32 %v2315, %v2324
        %v2327 = vmul.f32 %v2317, %v2325
        %2328 = vrot.lane.b32.xlu0 %v2007, 56
        %v2329 = vpop.permute.xlu0 %2328
        %2330 = vrot.lane.b32.xlu0 %v2010, 56
        %v2331 = vpop.permute.xlu0 %2330
        %v2335 = vsel %vm833, %v2326, 0
        %v2338 = vsel %vm833, %v2327, 0
        %2340 = vmatprep.subr.mxu0 0.0
        %2341 = vmatpush1.msra.mxu0 %v2329
        %2342 = vmatprep.subr.mxu0 0.0
        %2343 = vmatpush1.msra.mxu0 %v2331
        %2344 = vmatprep.subr.mxu0 0.0
        %2345 = vmatpush1.msra.mxu0 0.0
        %2346 = vmatprep.subr.mxu0 0.0
        %2347 = vmatpush1.msra.mxu0 0.0
        %2348 = vmatprep.subr.mxu0 0.0
        %2349 = vmatpush1.msra.mxu0 0.0
        %2350 = vmatprep.subr.mxu0 0.0
        %2351 = vmatpush1.msra.mxu0 0.0
        %2352 = vmatprep.subr.mxu0 0.0
        %2353 = vmatpush1.msra.mxu0 0.0
        %2354 = vmatprep.subr.mxu0 0.0
        %2355 = vmatpush1.msra.mxu0 0.0
        %2356 = vmatprep.subr.mxu0 0.0
        %2357 = vmatpush1.msra.mxu0 0.0
        %2358 = vmatprep.subr.mxu0 0.0
        %2359 = vmatpush1.msra.mxu0 0.0
        %2360 = vmatprep.subr.mxu0 0.0
        %2361 = vmatpush1.msra.mxu0 0.0
        %2362 = vmatprep.subr.mxu0 0.0
        %2363 = vmatpush1.msra.mxu0 0.0
        %2364 = vmatprep.subr.mxu0 0.0
        %2365 = vmatpush1.msra.mxu0 0.0
        %2366 = vmatprep.subr.mxu0 0.0
        %2367 = vmatpush1.msra.mxu0 0.0
        %2368 = vmatprep.subr.mxu0 0.0
        %2369 = vmatpush1.msra.mxu0 0.0
        %2370 = vmatprep.subr.mxu0 0.0
        %2371 = vmatpush1.msra.mxu0 0.0
        %2372 = vmatprep.subr.mxu0 0.0
        %2373 = vmatpush1.msra.mxu0 0.0
        %2374 = vmatprep.subr.mxu0 0.0
        %2375 = vmatpush1.msra.mxu0 0.0
        %2376 = vmatprep.subr.mxu0 0.0
        %2377 = vmatpush1.msra.mxu0 0.0
        %2378 = vmatprep.subr.mxu0 0.0
        %2379 = vmatpush1.msra.mxu0 0.0
        %2380 = vmatprep.subr.mxu0 0.0
        %2381 = vmatpush1.msra.mxu0 0.0
        %2382 = vmatprep.subr.mxu0 0.0
        %2383 = vmatpush1.msra.mxu0 0.0
        %2384 = vmatprep.subr.mxu0 0.0
        %2385 = vmatpush1.msra.mxu0 0.0
        %2386 = vmatprep.subr.mxu0 0.0
        %2387 = vmatpush1.msra.mxu0 0.0
        %2388 = vmatprep.subr.mxu0 0.0
        %2389 = vmatpush1.msra.mxu0 0.0
        %2390 = vmatprep.subr.mxu0 0.0
        %2391 = vmatpush1.msra.mxu0 0.0
        %2392 = vmatprep.subr.mxu0 0.0
        %2393 = vmatpush1.msra.mxu0 0.0
        %2394 = vmatprep.subr.mxu0 0.0
        %2395 = vmatpush1.msra.mxu0 0.0
        %2396 = vmatprep.subr.mxu0 0.0
        %2397 = vmatpush1.msra.mxu0 0.0
        %2398 = vmatprep.subr.mxu0 0.0
        %2399 = vmatpush1.msra.mxu0 0.0
        %2400 = vmatprep.subr.mxu0 0.0
        %2401 = vmatpush1.msra.mxu0 0.0
        %2402 = vmatprep.subr.mxu0 0.0
        %2403 = vmatpush1.msra.mxu0 0.0
        %2404 = vmatprep.mubr.f32.mxu0 0.0
        %2405 = vmatmul.mubr.f32.gmra.mrb[0].mxu0 %v2335
        %v2406 = vpop.f32.mrb[0].mxu0
        %v2407 = vadd.f32 0.0, %v2406
        %v2408 = vpop.f32.mrb[0].mxu0
        %2409 = vmatprep.mubr.f32.mxu0 0.0
        %2410 = vmatmul.mubr.f32.gmra.mrb[0].mxu0 %v2338
        %v2411 = vpop.f32.mrb[0].mxu0
        %v2412 = vadd.f32 0.0, %v2411
        %v2413 = vpop.f32.mrb[0].mxu0
        %2414 = vdwg.mxu0
        %2415 = vrot.lane.b32.xlu0 %v2007, 112
        %v2416 = vpop.permute.xlu0 %2415
        %2417 = vrot.lane.b32.xlu0 %v2010, 112
        %v2418 = vpop.permute.xlu0 %2417
        %2419 = vrot.lane.b32.xlu0 %v2007, 80
        %v2420 = vpop.permute.xlu0 %2419
        %2421 = vrot.lane.b32.xlu0 %v2010, 80
        %v2422 = vpop.permute.xlu0 %2421
        %v2423 = vsel %vm747, %v2416, 0
        %v2425 = vsel %vm747, %v2418, 0
        %v2427 = vsel %vm747, %v2420, 0
        %v2429 = vsel %vm747, %v2422, 0
        %2431 = vmatprep.subr.mxu0 0.0
        %2432 = vmatpush1.xpose.msra.mxu0 %v2427
        %2433 = vmatprep.subr.mxu0 0.0
        %2434 = vmatpush1.xpose.msra.mxu0 %v2429
        %2435 = vmatprep.subr.mxu0 0.0
        %2436 = vmatpush1.xpose.msra.mxu0 0.0
        %2437 = vmatprep.subr.mxu0 0.0
        %2438 = vmatpush1.xpose.msra.mxu0 0.0
        %2439 = vmatprep.subr.mxu0 0.0
        %2440 = vmatpush1.xpose.msra.mxu0 0.0
        %2441 = vmatprep.subr.mxu0 0.0
        %2442 = vmatpush1.xpose.msra.mxu0 0.0
        %2443 = vmatprep.subr.mxu0 0.0
        %2444 = vmatpush1.xpose.msra.mxu0 0.0
        %2445 = vmatprep.subr.mxu0 0.0
        %2446 = vmatpush1.xpose.msra.mxu0 0.0
        %2447 = vmatprep.subr.mxu0 0.0
        %2448 = vmatpush1.xpose.msra.mxu0 0.0
        %2449 = vmatprep.subr.mxu0 0.0
        %2450 = vmatpush1.xpose.msra.mxu0 0.0
        %2451 = vmatprep.subr.mxu0 0.0
        %2452 = vmatpush1.xpose.msra.mxu0 0.0
        %2453 = vmatprep.subr.mxu0 0.0
        %2454 = vmatpush1.xpose.msra.mxu0 0.0
        %2455 = vmatprep.subr.mxu0 0.0
        %2456 = vmatpush1.xpose.msra.mxu0 0.0
        %2457 = vmatprep.subr.mxu0 0.0
        %2458 = vmatpush1.xpose.msra.mxu0 0.0
        %2459 = vmatprep.subr.mxu0 0.0
        %2460 = vmatpush1.xpose.msra.mxu0 0.0
        %2461 = vmatprep.subr.mxu0 0.0
        %2462 = vmatpush1.xpose.msra.mxu0 0.0
        %2463 = vmatprep.subr.mxu0 0.0
        %2464 = vmatpush1.xpose.msra.mxu0 0.0
        %2465 = vmatprep.subr.mxu0 0.0
        %2466 = vmatpush1.xpose.msra.mxu0 0.0
        %2467 = vmatprep.subr.mxu0 0.0
        %2468 = vmatpush1.xpose.msra.mxu0 0.0
        %2469 = vmatprep.subr.mxu0 0.0
        %2470 = vmatpush1.xpose.msra.mxu0 0.0
        %2471 = vmatprep.subr.mxu0 0.0
        %2472 = vmatpush1.xpose.msra.mxu0 0.0
        %2473 = vmatprep.subr.mxu0 0.0
        %2474 = vmatpush1.xpose.msra.mxu0 0.0
        %2475 = vmatprep.subr.mxu0 0.0
        %2476 = vmatpush1.xpose.msra.mxu0 0.0
        %2477 = vmatprep.subr.mxu0 0.0
        %2478 = vmatpush1.xpose.msra.mxu0 0.0
        %2479 = vmatprep.subr.mxu0 0.0
        %2480 = vmatpush1.xpose.msra.mxu0 0.0
        %2481 = vmatprep.subr.mxu0 0.0
        %2482 = vmatpush1.xpose.msra.mxu0 0.0
        %2483 = vmatprep.subr.mxu0 0.0
        %2484 = vmatpush1.xpose.msra.mxu0 0.0
        %2485 = vmatprep.subr.mxu0 0.0
        %2486 = vmatpush1.xpose.msra.mxu0 0.0
        %2487 = vmatprep.subr.mxu0 0.0
        %2488 = vmatpush1.xpose.msra.mxu0 0.0
        %2489 = vmatprep.subr.mxu0 0.0
        %2490 = vmatpush1.xpose.msra.mxu0 0.0
        %2491 = vmatprep.subr.mxu0 0.0
        %2492 = vmatpush1.xpose.msra.mxu0 0.0
        %2493 = vmatprep.subr.mxu0 0.0
        %2494 = vmatpush1.xpose.msra.mxu0 0.0
        %2495 = vmatprep.mubr.f32.mxu0 0.0
        %2496 = vmatmul.mubr.f32.gmra.mrb[0].mxu0 %v2423
        %v2497 = vpop.f32.mrb[0].mxu0
        %v2498 = vadd.f32 0.0, %v2497
        %v2499 = vpop.f32.mrb[0].mxu0
        %2500 = vmatprep.mubr.f32.mxu0 0.0
        %2501 = vmatmul.mubr.f32.gmra.mrb[0].mxu0 %v2425
        %v2502 = vpop.f32.mrb[0].mxu0
        %v2503 = vadd.f32 0.0, %v2502
        %v2504 = vpop.f32.mrb[0].mxu0
        %2505 = vdwg.mxu0
        %v2506 = vmul.f32 %v2498, 0.35355338
        %v2507 = vmul.f32 %v2503, 0.35355338
        %v2508 = vsel %vm833, %v2506, -inf
        %2509 = vmax.xlane.f32.xlu0 %v2508
        %v2510 = vpop.xlane.xlu0 %2509
        %v2511 = vsel %vm833, %v2507, -inf
        %2512 = vmax.xlane.f32.xlu0 %v2511
        %v2513 = vpop.xlane.xlu0 %2512
        %v2514 = vsub.f32 %v2506, %v2510
        %v2515 = vsub.f32 %v2507, %v2513
        %v2516 = vmul.f32 %v2514, 1.442695
        %v2517 = vpow.pop %v2516
        %v2518 = vmul.f32 %v2515, 1.442695
        %v2519 = vpow.pop %v2518
        %v2520 = vsel %vm833, %v2517, 0.0
        %2521 = vadd.xlane.f32.xlu0 %v2520
        %v2522 = vpop.xlane.xlu0 %2521
        %v2523 = vsel %vm833, %v2519, 0.0
        %2524 = vadd.xlane.f32.xlu0 %v2523
        %v2525 = vpop.xlane.xlu0 %2524
        %v2526 = vrcp.pop %v2522
        %v2527 = vrcp.pop %v2525
        %v2528 = vmul.f32 %v2517, %v2526
        %v2529 = vmul.f32 %v2519, %v2527
        %2530 = vrot.lane.b32.xlu0 %v2007, 48
        %v2531 = vpop.permute.xlu0 %2530
        %2532 = vrot.lane.b32.xlu0 %v2010, 48
        %v2533 = vpop.permute.xlu0 %2532
        %v2537 = vsel %vm833, %v2528, 0
        %v2540 = vsel %vm833, %v2529, 0
        %2542 = vmatprep.subr.mxu0 0.0
        %2543 = vmatpush1.msra.mxu0 %v2531
        %2544 = vmatprep.subr.mxu0 0.0
        %2545 = vmatpush1.msra.mxu0 %v2533
        %2546 = vmatprep.subr.mxu0 0.0
        %2547 = vmatpush1.msra.mxu0 0.0
        %2548 = vmatprep.subr.mxu0 0.0
        %2549 = vmatpush1.msra.mxu0 0.0
        %2550 = vmatprep.subr.mxu0 0.0
        %2551 = vmatpush1.msra.mxu0 0.0
        %2552 = vmatprep.subr.mxu0 0.0
        %2553 = vmatpush1.msra.mxu0 0.0
        %2554 = vmatprep.subr.mxu0 0.0
        %2555 = vmatpush1.msra.mxu0 0.0
        %2556 = vmatprep.subr.mxu0 0.0
        %2557 = vmatpush1.msra.mxu0 0.0
        %2558 = vmatprep.subr.mxu0 0.0
        %2559 = vmatpush1.msra.mxu0 0.0
        %2560 = vmatprep.subr.mxu0 0.0
        %2561 = vmatpush1.msra.mxu0 0.0
        %2562 = vmatprep.subr.mxu0 0.0
        %2563 = vmatpush1.msra.mxu0 0.0
        %2564 = vmatprep.subr.mxu0 0.0
        %2565 = vmatpush1.msra.mxu0 0.0
        %2566 = vmatprep.subr.mxu0 0.0
        %2567 = vmatpush1.msra.mxu0 0.0
        %2568 = vmatprep.subr.mxu0 0.0
        %2569 = vmatpush1.msra.mxu0 0.0
        %2570 = vmatprep.subr.mxu0 0.0
        %2571 = vmatpush1.msra.mxu0 0.0
        %2572 = vmatprep.subr.mxu0 0.0
        %2573 = vmatpush1.msra.mxu0 0.0
        %2574 = vmatprep.subr.mxu0 0.0
        %2575 = vmatpush1.msra.mxu0 0.0
        %2576 = vmatprep.subr.mxu0 0.0
        %2577 = vmatpush1.msra.mxu0 0.0
        %2578 = vmatprep.subr.mxu0 0.0
        %2579 = vmatpush1.msra.mxu0 0.0
        %2580 = vmatprep.subr.mxu0 0.0
        %2581 = vmatpush1.msra.mxu0 0.0
        %2582 = vmatprep.subr.mxu0 0.0
        %2583 = vmatpush1.msra.mxu0 0.0
        %2584 = vmatprep.subr.mxu0 0.0
        %2585 = vmatpush1.msra.mxu0 0.0
        %2586 = vmatprep.subr.mxu0 0.0
        %2587 = vmatpush1.msra.mxu0 0.0
        %2588 = vmatprep.subr.mxu0 0.0
        %2589 = vmatpush1.msra.mxu0 0.0
        %2590 = vmatprep.subr.mxu0 0.0
        %2591 = vmatpush1.msra.mxu0 0.0
        %2592 = vmatprep.subr.mxu0 0.0
        %2593 = vmatpush1.msra.mxu0 0.0
        %2594 = vmatprep.subr.mxu0 0.0
        %2595 = vmatpush1.msra.mxu0 0.0
        %2596 = vmatprep.subr.mxu0 0.0
        %2597 = vmatpush1.msra.mxu0 0.0
        %2598 = vmatprep.subr.mxu0 0.0
        %2599 = vmatpush1.msra.mxu0 0.0
        %2600 = vmatprep.subr.mxu0 0.0
        %2601 = vmatpush1.msra.mxu0 0.0
        %2602 = vmatprep.subr.mxu0 0.0
        %2603 = vmatpush1.msra.mxu0 0.0
        %2604 = vmatprep.subr.mxu0 0.0
        %2605 = vmatpush1.msra.mxu0 0.0
        %2606 = vmatprep.mubr.f32.mxu0 0.0
        %2607 = vmatmul.mubr.f32.gmra.mrb[0].mxu0 %v2537
        %v2608 = vpop.f32.mrb[0].mxu0
        %v2609 = vadd.f32 0.0, %v2608
        %v2610 = vpop.f32.mrb[0].mxu0
        %2611 = vmatprep.mubr.f32.mxu0 0.0
        %2612 = vmatmul.mubr.f32.gmra.mrb[0].mxu0 %v2540
        %v2613 = vpop.f32.mrb[0].mxu0
        %v2614 = vadd.f32 0.0, %v2613
        %v2615 = vpop.f32.mrb[0].mxu0
        %2616 = vdwg.mxu0
        %2617 = vrot.lane.b32.xlu0 %v2007, 104
        %v2618 = vpop.permute.xlu0 %2617
        %2619 = vrot.lane.b32.xlu0 %v2010, 104
        %v2620 = vpop.permute.xlu0 %2619
        %2621 = vrot.lane.b32.xlu0 %v2007, 72
        %v2622 = vpop.permute.xlu0 %2621
        %2623 = vrot.lane.b32.xlu0 %v2010, 72
        %v2624 = vpop.permute.xlu0 %2623
        %v2625 = vsel %vm747, %v2618, 0
        %v2627 = vsel %vm747, %v2620, 0
        %v2629 = vsel %vm747, %v2622, 0
        %v2631 = vsel %vm747, %v2624, 0
        %2633 = vmatprep.subr.mxu0 0.0
        %2634 = vmatpush1.xpose.msra.mxu0 %v2629
        %2635 = vmatprep.subr.mxu0 0.0
        %2636 = vmatpush1.xpose.msra.mxu0 %v2631
        %2637 = vmatprep.subr.mxu0 0.0
        %2638 = vmatpush1.xpose.msra.mxu0 0.0
        %2639 = vmatprep.subr.mxu0 0.0
        %2640 = vmatpush1.xpose.msra.mxu0 0.0
        %2641 = vmatprep.subr.mxu0 0.0
        %2642 = vmatpush1.xpose.msra.mxu0 0.0
        %2643 = vmatprep.subr.mxu0 0.0
        %2644 = vmatpush1.xpose.msra.mxu0 0.0
        %2645 = vmatprep.subr.mxu0 0.0
        %2646 = vmatpush1.xpose.msra.mxu0 0.0
        %2647 = vmatprep.subr.mxu0 0.0
        %2648 = vmatpush1.xpose.msra.mxu0 0.0
        %2649 = vmatprep.subr.mxu0 0.0
        %2650 = vmatpush1.xpose.msra.mxu0 0.0
        %2651 = vmatprep.subr.mxu0 0.0
        %2652 = vmatpush1.xpose.msra.mxu0 0.0
        %2653 = vmatprep.subr.mxu0 0.0
        %2654 = vmatpush1.xpose.msra.mxu0 0.0
        %2655 = vmatprep.subr.mxu0 0.0
        %2656 = vmatpush1.xpose.msra.mxu0 0.0
        %2657 = vmatprep.subr.mxu0 0.0
        %2658 = vmatpush1.xpose.msra.mxu0 0.0
        %2659 = vmatprep.subr.mxu0 0.0
        %2660 = vmatpush1.xpose.msra.mxu0 0.0
        %2661 = vmatprep.subr.mxu0 0.0
        %2662 = vmatpush1.xpose.msra.mxu0 0.0
        %2663 = vmatprep.subr.mxu0 0.0
        %2664 = vmatpush1.xpose.msra.mxu0 0.0
        %2665 = vmatprep.subr.mxu0 0.0
        %2666 = vmatpush1.xpose.msra.mxu0 0.0
        %2667 = vmatprep.subr.mxu0 0.0
        %2668 = vmatpush1.xpose.msra.mxu0 0.0
        %2669 = vmatprep.subr.mxu0 0.0
        %2670 = vmatpush1.xpose.msra.mxu0 0.0
        %2671 = vmatprep.subr.mxu0 0.0
        %2672 = vmatpush1.xpose.msra.mxu0 0.0
        %2673 = vmatprep.subr.mxu0 0.0
        %2674 = vmatpush1.xpose.msra.mxu0 0.0
        %2675 = vmatprep.subr.mxu0 0.0
        %2676 = vmatpush1.xpose.msra.mxu0 0.0
        %2677 = vmatprep.subr.mxu0 0.0
        %2678 = vmatpush1.xpose.msra.mxu0 0.0
        %2679 = vmatprep.subr.mxu0 0.0
        %2680 = vmatpush1.xpose.msra.mxu0 0.0
        %2681 = vmatprep.subr.mxu0 0.0
        %2682 = vmatpush1.xpose.msra.mxu0 0.0
        %2683 = vmatprep.subr.mxu0 0.0
        %2684 = vmatpush1.xpose.msra.mxu0 0.0
        %2685 = vmatprep.subr.mxu0 0.0
        %2686 = vmatpush1.xpose.msra.mxu0 0.0
        %2687 = vmatprep.subr.mxu0 0.0
        %2688 = vmatpush1.xpose.msra.mxu0 0.0
        %2689 = vmatprep.subr.mxu0 0.0
        %2690 = vmatpush1.xpose.msra.mxu0 0.0
        %2691 = vmatprep.subr.mxu0 0.0
        %2692 = vmatpush1.xpose.msra.mxu0 0.0
        %2693 = vmatprep.subr.mxu0 0.0
        %2694 = vmatpush1.xpose.msra.mxu0 0.0
        %2695 = vmatprep.subr.mxu0 0.0
        %2696 = vmatpush1.xpose.msra.mxu0 0.0
        %2697 = vmatprep.mubr.f32.mxu0 0.0
        %2698 = vmatmul.mubr.f32.gmra.mrb[0].mxu0 %v2625
        %v2699 = vpop.f32.mrb[0].mxu0
        %v2700 = vadd.f32 0.0, %v2699
        %v2701 = vpop.f32.mrb[0].mxu0
        %2702 = vmatprep.mubr.f32.mxu0 0.0
        %2703 = vmatmul.mubr.f32.gmra.mrb[0].mxu0 %v2627
        %v2704 = vpop.f32.mrb[0].mxu0
        %v2705 = vadd.f32 0.0, %v2704
        %v2706 = vpop.f32.mrb[0].mxu0
        %2707 = vdwg.mxu0
        %v2708 = vmul.f32 %v2700, 0.35355338
        %v2709 = vmul.f32 %v2705, 0.35355338
        %v2710 = vsel %vm833, %v2708, -inf
        %2711 = vmax.xlane.f32.xlu0 %v2710
        %v2712 = vpop.xlane.xlu0 %2711
        %v2713 = vsel %vm833, %v2709, -inf
        %2714 = vmax.xlane.f32.xlu0 %v2713
        %v2715 = vpop.xlane.xlu0 %2714
        %v2716 = vsub.f32 %v2708, %v2712
        %v2717 = vsub.f32 %v2709, %v2715
        %v2718 = vmul.f32 %v2716, 1.442695
        %v2719 = vpow.pop %v2718
        %v2720 = vmul.f32 %v2717, 1.442695
        %v2721 = vpow.pop %v2720
        %v2722 = vsel %vm833, %v2719, 0.0
        %2723 = vadd.xlane.f32.xlu0 %v2722
        %v2724 = vpop.xlane.xlu0 %2723
        %v2725 = vsel %vm833, %v2721, 0.0
        %2726 = vadd.xlane.f32.xlu0 %v2725
        %v2727 = vpop.xlane.xlu0 %2726
        %v2728 = vrcp.pop %v2724
        %v2729 = vrcp.pop %v2727
        %v2730 = vmul.f32 %v2719, %v2728
        %v2731 = vmul.f32 %v2721, %v2729
        %2732 = vrot.lane.b32.xlu0 %v2007, 40
        %v2733 = vpop.permute.xlu0 %2732
        %2734 = vrot.lane.b32.xlu0 %v2010, 40
        %v2735 = vpop.permute.xlu0 %2734
        %v2739 = vsel %vm833, %v2730, 0
        %v2742 = vsel %vm833, %v2731, 0
        %2744 = vmatprep.subr.mxu0 0.0
        %2745 = vmatpush1.msra.mxu0 %v2733
        %2746 = vmatprep.subr.mxu0 0.0
        %2747 = vmatpush1.msra.mxu0 %v2735
        %2748 = vmatprep.subr.mxu0 0.0
        %2749 = vmatpush1.msra.mxu0 0.0
        %2750 = vmatprep.subr.mxu0 0.0
        %2751 = vmatpush1.msra.mxu0 0.0
        %2752 = vmatprep.subr.mxu0 0.0
        %2753 = vmatpush1.msra.mxu0 0.0
        %2754 = vmatprep.subr.mxu0 0.0
        %2755 = vmatpush1.msra.mxu0 0.0
        %2756 = vmatprep.subr.mxu0 0.0
        %2757 = vmatpush1.msra.mxu0 0.0
        %2758 = vmatprep.subr.mxu0 0.0
        %2759 = vmatpush1.msra.mxu0 0.0
        %2760 = vmatprep.subr.mxu0 0.0
        %2761 = vmatpush1.msra.mxu0 0.0
        %2762 = vmatprep.subr.mxu0 0.0
        %2763 = vmatpush1.msra.mxu0 0.0
        %2764 = vmatprep.subr.mxu0 0.0
        %2765 = vmatpush1.msra.mxu0 0.0
        %2766 = vmatprep.subr.mxu0 0.0
        %2767 = vmatpush1.msra.mxu0 0.0
        %2768 = vmatprep.subr.mxu0 0.0
        %2769 = vmatpush1.msra.mxu0 0.0
        %2770 = vmatprep.subr.mxu0 0.0
        %2771 = vmatpush1.msra.mxu0 0.0
        %2772 = vmatprep.subr.mxu0 0.0
        %2773 = vmatpush1.msra.mxu0 0.0
        %2774 = vmatprep.subr.mxu0 0.0
        %2775 = vmatpush1.msra.mxu0 0.0
        %2776 = vmatprep.subr.mxu0 0.0
        %2777 = vmatpush1.msra.mxu0 0.0
        %2778 = vmatprep.subr.mxu0 0.0
        %2779 = vmatpush1.msra.mxu0 0.0
        %2780 = vmatprep.subr.mxu0 0.0
        %2781 = vmatpush1.msra.mxu0 0.0
        %2782 = vmatprep.subr.mxu0 0.0
        %2783 = vmatpush1.msra.mxu0 0.0
        %2784 = vmatprep.subr.mxu0 0.0
        %2785 = vmatpush1.msra.mxu0 0.0
        %2786 = vmatprep.subr.mxu0 0.0
        %2787 = vmatpush1.msra.mxu0 0.0
        %2788 = vmatprep.subr.mxu0 0.0
        %2789 = vmatpush1.msra.mxu0 0.0
        %2790 = vmatprep.subr.mxu0 0.0
        %2791 = vmatpush1.msra.mxu0 0.0
        %2792 = vmatprep.subr.mxu0 0.0
        %2793 = vmatpush1.msra.mxu0 0.0
        %2794 = vmatprep.subr.mxu0 0.0
        %2795 = vmatpush1.msra.mxu0 0.0
        %2796 = vmatprep.subr.mxu0 0.0
        %2797 = vmatpush1.msra.mxu0 0.0
        %2798 = vmatprep.subr.mxu0 0.0
        %2799 = vmatpush1.msra.mxu0 0.0
        %2800 = vmatprep.subr.mxu0 0.0
        %2801 = vmatpush1.msra.mxu0 0.0
        %2802 = vmatprep.subr.mxu0 0.0
        %2803 = vmatpush1.msra.mxu0 0.0
        %2804 = vmatprep.subr.mxu0 0.0
        %2805 = vmatpush1.msra.mxu0 0.0
        %2806 = vmatprep.subr.mxu0 0.0
        %2807 = vmatpush1.msra.mxu0 0.0
        %2808 = vmatprep.mubr.f32.mxu0 0.0
        %2809 = vmatmul.mubr.f32.gmra.mrb[0].mxu0 %v2739
        %v2810 = vpop.f32.mrb[0].mxu0
        %v2811 = vadd.f32 0.0, %v2810
        %v2812 = vpop.f32.mrb[0].mxu0
        %2813 = vmatprep.mubr.f32.mxu0 0.0
        %2814 = vmatmul.mubr.f32.gmra.mrb[0].mxu0 %v2742
        %v2815 = vpop.f32.mrb[0].mxu0
        %v2816 = vadd.f32 0.0, %v2815
        %v2817 = vpop.f32.mrb[0].mxu0
        %2818 = vdwg.mxu0
        %2821 = vrot.lane.b32.xlu0 %v2407, 8
        %v2822 = vpop.permute.xlu0 %2821
        %2823 = vrot.lane.b32.xlu0 %v2412, 8
        %v2824 = vpop.permute.xlu0 %2823
        %2829 = vrot.lane.b32.xlu0 %v2609, 16
        %v2830 = vpop.permute.xlu0 %2829
        %2831 = vrot.lane.b32.xlu0 %v2614, 16
        %v2832 = vpop.permute.xlu0 %2831
        %2837 = vrot.lane.b32.xlu0 %v2811, 24
        %v2838 = vpop.permute.xlu0 %2837
        %2839 = vrot.lane.b32.xlu0 %v2816, 24
        %v2840 = vpop.permute.xlu0 %2839
        %v2843 = vsel %vm747, %v2205, %v2822
        %v2844 = vsel %vm747, %v2210, %v2824
        %v2845 = vsel %vm833, %v2843, %v2830
        %v2846 = vsel %vm833, %v2844, %v2832
        %v2847 = vsel %vm1577, %v2845, %v2838
        %v2848 = vsel %vm1577, %v2846, %v2840
        %v2849 = vpack.c.bf16 %v2848, %v2847
        %s2850 = scalar_lea.vmem %s7, 16
        %v2851 = vld [vmem:[%s2850] sm:$0xf]
        %v2852 = vld [vmem:[%s2850 + $0x4] sm:$0xf]
        %v2853 = vld [vmem:[%s2850 + $0x8] sm:$0xf]
        %v2854 = vld [vmem:[%s2850 + $0xc] sm:$0xf]
        %v2859 = vunpack.c.l.b16 %v2851
        %v2860 = vunpack.c.l.b16 %v2852
        %v2861 = vunpack.c.l.b16 %v2853
        %v2862 = vunpack.c.l.b16 %v2854
        %v2863 = vpack.c.b16 %v2860, %v2859
        %v2864 = vpack.c.b16 %v2862, %v2861
        %v2868 = vsel %vm629, %v2849, 0
        %2870 = vmatprep.subr.bf16.mxu0 0
        %2871 = vmatpush1.bf16.msra.mxu0 %v2863
        %2872 = vmatprep.subr.bf16.mxu0 0
        %2873 = vmatpush1.bf16.msra.mxu0 %v2864
        %2874 = vmatprep.subr.bf16.mxu0 0
        %2875 = vmatpush1.bf16.msra.mxu0 0
        %2876 = vmatprep.subr.bf16.mxu0 0
        %2877 = vmatpush1.bf16.msra.mxu0 0
        %2878 = vmatprep.subr.bf16.mxu0 0
        %2879 = vmatpush1.bf16.msra.mxu0 0
        %2880 = vmatprep.subr.bf16.mxu0 0
        %2881 = vmatpush1.bf16.msra.mxu0 0
        %2882 = vmatprep.subr.bf16.mxu0 0
        %2883 = vmatpush1.bf16.msra.mxu0 0
        %2884 = vmatprep.subr.bf16.mxu0 0
        %2885 = vmatpush1.bf16.msra.mxu0 0
        %2886 = vmatprep.subr.bf16.mxu0 0
        %2887 = vmatpush1.bf16.msra.mxu0 0
        %2888 = vmatprep.subr.bf16.mxu0 0
        %2889 = vmatpush1.bf16.msra.mxu0 0
        %2890 = vmatprep.subr.bf16.mxu0 0
        %2891 = vmatpush1.bf16.msra.mxu0 0
        %2892 = vmatprep.subr.bf16.mxu0 0
        %2893 = vmatpush1.bf16.msra.mxu0 0
        %2894 = vmatprep.subr.bf16.mxu0 0
        %2895 = vmatpush1.bf16.msra.mxu0 0
        %2896 = vmatprep.subr.bf16.mxu0 0
        %2897 = vmatpush1.bf16.msra.mxu0 0
        %2898 = vmatprep.subr.bf16.mxu0 0
        %2899 = vmatpush1.bf16.msra.mxu0 0
        %2900 = vmatprep.subr.bf16.mxu0 0
        %2901 = vmatpush1.bf16.msra.mxu0 0
        %2902 = vmatprep.mubr.bf16.mxu0 0
        %2903 = vmatmul.mubr.bf16.gmra.mrb[0].mxu0 %v2868
        %v2904 = vpop.f32.mrb[0].mxu0
        %v2905 = vadd.f32 0.0, %v2904
        %v2906 = vpop.f32.mrb[0].mxu0
        %v2907 = vpop.f32.mrb[0].mxu0
        %v2908 = vadd.f32 0.0, %v2907
        %v2909 = vpop.f32.mrb[0].mxu0
        %2910 = vdwg.mxu0
        %v2911 = vadd.f32 %v1895, %v2905
        %v2912 = vadd.f32 %v1896, %v2908
        %s2913 = scalar_lea.vmem %s8, 1
        %v2914 = vld [vmem:[%s2913] sm:$0x1]
        %v2916 = vlaneseq
        %v2917 = vshrl.u32 %v2916, 7
        %v2918 = vsub.s32 0, %v2917
        %v2919 = vrot.slane %v2914, %v2918
        %v2921 = vadd.f32 %v2911, %v2919
        %v2922 = vadd.f32 %v2912, %v2919
        %s2923 = scalar_lea.vmem %s9, 1
        %v2924 = vld [vmem:[%s2923] sm:$0x1]
        %s2925 = scalar_lea.vmem %s10, 1
        %v2926 = vld [vmem:[%s2925] sm:$0x1]
        %v2927 = vsel %vm629, %v2921, 0.0
        %2928 = vadd.xlane.f32.xlu0 %v2927
        %v2929 = vpop.xlane.xlu0 %2928
        %v2930 = vsel %vm629, %v2922, 0.0
        %2931 = vadd.xlane.f32.xlu0 %v2930
        %v2932 = vpop.xlane.xlu0 %2931
        %v2933 = vmul.f32 %v2929, %v636
        %v2934 = vmul.f32 %v2932, %v636
        %v2935 = vsub.f32 %v2921, %v2933
        %v2936 = vsub.f32 %v2922, %v2934
        %v2937 = vmul.f32 %v2935, %v2935
        %v2938 = vmul.f32 %v2936, %v2936
        %v2939 = vsel %vm629, %v2937, 0.0
        %2940 = vadd.xlane.f32.xlu0 %v2939
        %v2941 = vpop.xlane.xlu0 %2940
        %v2942 = vsel %vm629, %v2938, 0.0
        %2943 = vadd.xlane.f32.xlu0 %v2942
        %v2944 = vpop.xlane.xlu0 %2943
        %v2945 = vmul.f32 %v2941, %v636
        %v2946 = vmul.f32 %v2944, %v636
        %v2947 = vadd.f32 %v2945, 1e-06
        %v2948 = vadd.f32 %v2946, 1e-06
        %v2949 = vrsqrt.pop %v2947
        %v2950 = vrsqrt.pop %v2948
        %v2951 = vmul.f32 %v2935, %v2949
        %v2952 = vmul.f32 %v2936, %v2950
        %v2954 = vlaneseq
        %v2955 = vshrl.u32 %v2954, 7
        %v2956 = vsub.s32 0, %v2955
        %v2957 = vrot.slane %v2924, %v2956
        %v2959 = vmul.f32 %v2951, %v2957
        %v2960 = vmul.f32 %v2952, %v2957
        %v2962 = vlaneseq
        %v2963 = vshrl.u32 %v2962, 7
        %v2964 = vsub.s32 0, %v2963
        %v2965 = vrot.slane %v2926, %v2964
        %v2967 = vadd.f32 %v2959, %v2965
        %v2968 = vadd.f32 %v2960, %v2965
        %v2969 = vpack.c.bf16 %v2968, %v2967
        %s2970 = scalar_lea.vmem %s11, 16
        %v2971 = vld [vmem:[%s2970] sm:$0xf]
        %v2972 = vld [vmem:[%s2970 + $0x4] sm:$0xf]
        %v2973 = vld [vmem:[%s2970 + $0x8] sm:$0xf]
        %v2974 = vld [vmem:[%s2970 + $0xc] sm:$0xf]
        %s2975 = scalar_lea.vmem %s12, 1
        %v2976 = vld [vmem:[%s2975] sm:$0x1]
        %v2978 = vlaneseq
        %v2979 = vshrl.u32 %v2978, 7
        %v2980 = vsub.s32 0, %v2979
        %v2981 = vrot.slane %v2976, %v2980
        %v2987 = vunpack.c.l.b16 %v2971
        %v2988 = vunpack.c.l.b16 %v2972
        %v2989 = vunpack.c.l.b16 %v2973
        %v2990 = vunpack.c.l.b16 %v2974
        %v2991 = vpack.c.b16 %v2988, %v2987
        %v2992 = vpack.c.b16 %v2990, %v2989
        %v2996 = vsel %vm629, %v2969, 0
        %2998 = vmatprep.subr.bf16.mxu0 0
        %2999 = vmatpush1.bf16.msra.mxu0 %v2991
        %3000 = vmatprep.subr.bf16.mxu0 0
        %3001 = vmatpush1.bf16.msra.mxu0 %v2992
        %3002 = vmatprep.subr.bf16.mxu0 0
        %3003 = vmatpush1.bf16.msra.mxu0 0
        %3004 = vmatprep.subr.bf16.mxu0 0
        %3005 = vmatpush1.bf16.msra.mxu0 0
        %3006 = vmatprep.subr.bf16.mxu0 0
        %3007 = vmatpush1.bf16.msra.mxu0 0
        %3008 = vmatprep.subr.bf16.mxu0 0
        %3009 = vmatpush1.bf16.msra.mxu0 0
        %3010 = vmatprep.subr.bf16.mxu0 0
        %3011 = vmatpush1.bf16.msra.mxu0 0
        %3012 = vmatprep.subr.bf16.mxu0 0
        %3013 = vmatpush1.bf16.msra.mxu0 0
        %3014 = vmatprep.subr.bf16.mxu0 0
        %3015 = vmatpush1.bf16.msra.mxu0 0
        %3016 = vmatprep.subr.bf16.mxu0 0
        %3017 = vmatpush1.bf16.msra.mxu0 0
        %3018 = vmatprep.subr.bf16.mxu0 0
        %3019 = vmatpush1.bf16.msra.mxu0 0
        %3020 = vmatprep.subr.bf16.mxu0 0
        %3021 = vmatpush1.bf16.msra.mxu0 0
        %3022 = vmatprep.subr.bf16.mxu0 0
        %3023 = vmatpush1.bf16.msra.mxu0 0
        %3024 = vmatprep.subr.bf16.mxu0 0
        %3025 = vmatpush1.bf16.msra.mxu0 0
        %3026 = vmatprep.subr.bf16.mxu0 0
        %3027 = vmatpush1.bf16.msra.mxu0 0
        %3028 = vmatprep.subr.bf16.mxu0 0
        %3029 = vmatpush1.bf16.msra.mxu0 0
        %3030 = vmatprep.mubr.bf16.mxu0 0
        %3031 = vmatmul.mubr.bf16.gmra.mrb[0].mxu0 %v2996
        %v3032 = vpop.f32.mrb[0].mxu0
        %v3033 = vadd.f32 %v2981, %v3032
        %v3034 = vpop.f32.mrb[0].mxu0
        %v3035 = vpop.f32.mrb[0].mxu0
        %v3036 = vadd.f32 %v2981, %v3035
        %v3037 = vpop.f32.mrb[0].mxu0
        %3038 = vdwg.mxu0
        %v3039 = vmul.f32 %v3033, %v3033
        %v3040 = vmul.f32 %v3036, %v3036
        %v3041 = vmul.f32 %v3033, %v3039
        %v3042 = vmul.f32 %v3036, %v3040
        %v3043 = vmul.f32 %v3041, 0.044715
        %v3044 = vmul.f32 %v3042, 0.044715
        %v3045 = vadd.f32 %v3033, %v3043
        %v3046 = vadd.f32 %v3036, %v3044
        %v3047 = vmul.f32 %v3045, 0.7978846
        %v3048 = vmul.f32 %v3046, 0.7978846
        %v3049 = vtanh.pop %v3047
        %v3050 = vtanh.pop %v3048
        %v3051 = vadd.f32 %v3049, 1.0
        %v3052 = vadd.f32 %v3050, 1.0
        %v3053 = vmul.f32 %v3051, 0.5
        %v3054 = vmul.f32 %v3052, 0.5
        %v3055 = vmul.f32 %v3033, %v3053
        %v3056 = vmul.f32 %v3036, %v3054
        %v3057 = vpack.c.bf16 %v3056, %v3055
        %s3058 = scalar_lea.vmem %s13, 64
        %v3059 = vld [vmem:[%s3058] sm:$0xf]
        %v3060 = vld [vmem:[%s3058 + $0x4] sm:$0xf]
        %v3061 = vld [vmem:[%s3058 + $0x8] sm:$0xf]
        %v3062 = vld [vmem:[%s3058 + $0xc] sm:$0xf]
        %v3063 = vld [vmem:[%s3058 + $0x10] sm:$0xf]
        %v3064 = vld [vmem:[%s3058 + $0x14] sm:$0xf]
        %v3065 = vld [vmem:[%s3058 + $0x18] sm:$0xf]
        %v3066 = vld [vmem:[%s3058 + $0x1c] sm:$0xf]
        %v3067 = vld [vmem:[%s3058 + $0x20] sm:$0xf]
        %v3068 = vld [vmem:[%s3058 + $0x24] sm:$0xf]
        %v3069 = vld [vmem:[%s3058 + $0x28] sm:$0xf]
        %v3070 = vld [vmem:[%s3058 + $0x2c] sm:$0xf]
        %v3071 = vld [vmem:[%s3058 + $0x30] sm:$0xf]
        %v3072 = vld [vmem:[%s3058 + $0x34] sm:$0xf]
        %v3073 = vld [vmem:[%s3058 + $0x38] sm:$0xf]
        %v3074 = vld [vmem:[%s3058 + $0x3c] sm:$0xf]
        %s3075 = scalar_lea.vmem %s14, 1
        %v3076 = vld [vmem:[%s3075] sm:$0x1]
        %v3078 = vlaneseq
        %v3079 = vshrl.u32 %v3078, 7
        %v3080 = vsub.s32 0, %v3079
        %v3081 = vrot.slane %v3076, %v3080
        %v3099 = vunpack.c.l.b16 %v3059
        %v3100 = vunpack.c.l.b16 %v3060
        %v3101 = vunpack.c.l.b16 %v3061
        %v3102 = vunpack.c.l.b16 %v3062
        %v3103 = vunpack.c.l.b16 %v3063
        %v3104 = vunpack.c.l.b16 %v3064
        %v3105 = vunpack.c.l.b16 %v3065
        %v3106 = vunpack.c.l.b16 %v3066
        %v3107 = vunpack.c.l.b16 %v3067
        %v3108 = vunpack.c.l.b16 %v3068
        %v3109 = vunpack.c.l.b16 %v3069
        %v3110 = vunpack.c.l.b16 %v3070
        %v3111 = vunpack.c.l.b16 %v3071
        %v3112 = vunpack.c.l.b16 %v3072
        %v3113 = vunpack.c.l.b16 %v3073
        %v3114 = vunpack.c.l.b16 %v3074
        %v3115 = vpack.c.b16 %v3100, %v3099
        %v3116 = vpack.c.b16 %v3102, %v3101
        %v3117 = vpack.c.b16 %v3104, %v3103
        %v3118 = vpack.c.b16 %v3106, %v3105
        %v3119 = vpack.c.b16 %v3108, %v3107
        %v3120 = vpack.c.b16 %v3110, %v3109
        %v3121 = vpack.c.b16 %v3112, %v3111
        %v3122 = vpack.c.b16 %v3114, %v3113
        %3131 = vmatprep.subr.bf16.mxu0 0
        %3132 = vmatpush1.bf16.msra.mxu0 %v3115
        %3133 = vmatprep.subr.bf16.mxu0 0
        %3134 = vmatpush1.bf16.msra.mxu0 %v3116
        %3135 = vmatprep.subr.bf16.mxu0 0
        %3136 = vmatpush1.bf16.msra.mxu0 %v3117
        %3137 = vmatprep.subr.bf16.mxu0 0
        %3138 = vmatpush1.bf16.msra.mxu0 %v3118
        %3139 = vmatprep.subr.bf16.mxu0 0
        %3140 = vmatpush1.bf16.msra.mxu0 %v3119
        %3141 = vmatprep.subr.bf16.mxu0 0
        %3142 = vmatpush1.bf16.msra.mxu0 %v3120
        %3143 = vmatprep.subr.bf16.mxu0 0
        %3144 = vmatpush1.bf16.msra.mxu0 %v3121
        %3145 = vmatprep.subr.bf16.mxu0 0
        %3146 = vmatpush1.bf16.msra.mxu0 %v3122
        %3147 = vmatprep.subr.bf16.mxu0 0
        %3148 = vmatpush1.bf16.msra.mxu0 0
        %3149 = vmatprep.subr.bf16.mxu0 0
        %3150 = vmatpush1.bf16.msra.mxu0 0
        %3151 = vmatprep.subr.bf16.mxu0 0
        %3152 = vmatpush1.bf16.msra.mxu0 0
        %3153 = vmatprep.subr.bf16.mxu0 0
        %3154 = vmatpush1.bf16.msra.mxu0 0
        %3155 = vmatprep.subr.bf16.mxu0 0
        %3156 = vmatpush1.bf16.msra.mxu0 0
        %3157 = vmatprep.subr.bf16.mxu0 0
        %3158 = vmatpush1.bf16.msra.mxu0 0
        %3159 = vmatprep.subr.bf16.mxu0 0
        %3160 = vmatpush1.bf16.msra.mxu0 0
        %3161 = vmatprep.subr.bf16.mxu0 0
        %3162 = vmatpush1.bf16.msra.mxu0 0
        %3163 = vmatprep.mubr.bf16.mxu0 0
        %3164 = vmatmul.mubr.bf16.gmra.mrb[0].mxu0 %v3057
        %v3165 = vpop.f32.mrb[0].mxu0
        %v3166 = vadd.f32 %v3081, %v3165
        %v3167 = vpop.f32.mrb[0].mxu0
        %v3168 = vpop.f32.mrb[0].mxu0
        %v3169 = vadd.f32 %v3081, %v3168
        %v3170 = vpop.f32.mrb[0].mxu0
        %3171 = vdwg.mxu0
        %v3172 = vadd.f32 %v2921, %v3166
        %v3173 = vadd.f32 %v2922, %v3169
        %v3174 = vld [vmem:[%s15] sm:$0x1]
        %v3175 = vld [vmem:[%s16] sm:$0x1]
        %v3176 = vsel %vm629, %v3172, 0.0
        %3177 = vadd.xlane.f32.xlu0 %v3176
        %v3178 = vpop.xlane.xlu0 %3177
        %v3179 = vsel %vm629, %v3173, 0.0
        %3180 = vadd.xlane.f32.xlu0 %v3179
        %v3181 = vpop.xlane.xlu0 %3180
        %v3182 = vmul.f32 %v3178, %v636
        %v3183 = vmul.f32 %v3181, %v636
        %v3184 = vsub.f32 %v3172, %v3182
        %v3185 = vsub.f32 %v3173, %v3183
        %v3186 = vmul.f32 %v3184, %v3184
        %v3187 = vmul.f32 %v3185, %v3185
        %v3188 = vsel %vm629, %v3186, 0.0
        %3189 = vadd.xlane.f32.xlu0 %v3188
        %v3190 = vpop.xlane.xlu0 %3189
        %v3191 = vsel %vm629, %v3187, 0.0
        %3192 = vadd.xlane.f32.xlu0 %v3191
        %v3193 = vpop.xlane.xlu0 %3192
        %v3194 = vmul.f32 %v3190, %v636
        %v3195 = vmul.f32 %v3193, %v636
        %v3196 = vadd.f32 %v3194, 1e-06
        %v3197 = vadd.f32 %v3195, 1e-06
        %v3198 = vrsqrt.pop %v3196
        %v3199 = vrsqrt.pop %v3197
        %v3200 = vmul.f32 %v3184, %v3198
        %v3201 = vmul.f32 %v3185, %v3199
        %v3203 = vlaneseq
        %v3204 = vshrl.u32 %v3203, 7
        %v3205 = vsub.s32 0, %v3204
        %v3206 = vrot.slane %v3174, %v3205
        %v3208 = vmul.f32 %v3200, %v3206
        %v3209 = vmul.f32 %v3201, %v3206
        %v3211 = vlaneseq
        %v3212 = vshrl.u32 %v3211, 7
        %v3213 = vsub.s32 0, %v3212
        %v3214 = vrot.slane %v3175, %v3213
        %v3216 = vadd.f32 %v3208, %v3214
        %v3217 = vadd.f32 %v3209, %v3214
        %3218 = vst.msk [vmem:[%s541] sm:$0xff] %vm629, %v3216
        %3219 = vst.msk [vmem:[%s541 + $0x8] sm:$0xff] %vm629, %v3217
        %s3220 = sand.u32 %s401, 1
        %s3221 = scalar_lea.sflag [#allocation3], %s3220
        %s3222 = sand.u32 %s401, 1
        %s3223 = smul.addr %s3222, 16
        %s3224 = scalar_lea.vmem [#allocation2], %s3223
        // Predicated region
        $region89: #{tpu_custom_call.1} parent=87 // pred_check
          %p3225 = pneg %p411
        $region90: #{tpu_custom_call.1} parent=87 // pred_check_branch
          %3227 = sbr.rel (%p3225) target = $region92
        $region91: #{tpu_custom_call.1} parent=87 // pred_region
          %s3229 = ssub.s32 256, 256
          %3230 = vsyncadd %s3221, %s3229
          %s3231 = smul.addr %s31, 2
          %s3232 = smul.addr %s3231, 128
          %s3233 = scalar_lea.hbm %s17, %s3232
          %s3234 = sshll.u32 %s3224, 4
          %s3235 = int_to_ptr.vmem [resolvable:$true] %s3234
          %3240 = dma.vmem_to_hbm [thread:$0]  %s3235, 256, %s3233, %s3221, 128, 128, 8
        $region92: #{tpu_custom_call.1} parent=87 // pred_fallthru
          _
      $region88: #{tpu_custom_call.1} parent=5 // pred_fallthru
        _
      %p3241 = scmp.le.s32.totalorder 2, %s26
      // Predicated region
      $region93: #{tpu_custom_call.1} parent=5 // pred_check
        %p3242 = pneg %p3241
      $region94: #{tpu_custom_call.1} parent=5 // pred_check_branch
        %3244 = sbr.rel (%p3242) target = $region96
      $region95: #{tpu_custom_call.1} parent=5 // pred_region
        %s3245 = ssub.s32 %s26, 2
        // Predicated region
        $region97: #{tpu_custom_call.1} parent=95 // pred_check
          %p3246 = pneg %p417
        $region98: #{tpu_custom_call.1} parent=95 // pred_check_branch
          %3248 = sbr.rel (%p3246) target = $region100
        $region99: #{tpu_custom_call.1} parent=95 // pred_region
          %s3249 = sand.u32 %s402, 1
          %s3250 = scalar_lea.sflag [#allocation3], %s3249
          %s3251 = sand.u32 %s402, 1
          %s3252 = smul.addr %s3251, 16
          %s3253 = scalar_lea.vmem [#allocation2], %s3252
          %3254 = dma.done %s3250, 256
        $region100: #{tpu_custom_call.1} parent=95 // pred_fallthru
          _
      $region96: #{tpu_custom_call.1} parent=5 // pred_fallthru
        _
    $region6: #{tpu_custom_call.1} parent=1 // loop_footer
      %s30 = sadd.s32 1, %s26
    $region7: #{tpu_custom_call.1} parent=1 // loop_footer_branch
      %25 = sbr.rel target = $region3
    $region8: #{tpu_custom_call.1} parent=1 // loop_exit
      _
    %3255 = vsyncpa [#allocation3], 1
    %s3256 = scalar_lea.sflag [#allocation3], 1
    %3257 = vsyncpa %s3256, 1

</llo_original>
